<compile_context>
chip_gen: v7x
topology: tpu7x:2x2x1
jax: 0.10.0
libtpu: 0.0.40
codegen_flags: <defaults>
</compile_context>

<pallas_src>
import functools

import jax
import jax.numpy as jnp
from jax import lax
from jax.experimental import pallas as pl
from jax.experimental.pallas import tpu as pltpu


# ----- config (mirrors the BetaCSNN `conf` dict) -----
CONF = dict(
    in_size=16, in_channel=4, out_channel=8, kernel=3, stride=1, padding=1,
    pool_type="max", is_bn=True, mem_reset_type="subtract", mem_threshold=1.0,
)
T, B = 8, 2

N_WEIGHT_SLABS = 3  # f32 weight = sum of N bf16 slabs; 2 meets tol, 3 is spike-decision safe.


def _betacsnn_kernel(patches_ref, w_ref, b_ref, beta_ref, spk_ref, pot_ref,
                     *, threshold, reset, n_steps, t_blk, m):
    """Whole forward in a single invocation (grid=(1,)).

    patches_ref : [KP, T*4*M]    bf16  im2col'd 0/1 spikes (pool pos p at col t*4M + p*M)
    w_ref       : [NS, Cout, KP] bf16  BN-folded conv weight as hi/lo bf16 slabs (sum == f32 w)
    b_ref       : [Cout, M]      f32   BN-folded conv bias, pre-broadcast over lanes
    beta_ref    : [T, Cout, M]   f32
    spk_ref     : [T, Cout, M]   bf16  output spikes (0/1, exact)
    pot_ref     : [T, Cout, M]   f32   output post-reset potentials
    """
    n_slabs, cout, _ = w_ref.shape
    bias = b_ref[...]                                  # [Cout, M], loaded once
    w = [w_ref[i] for i in range(n_slabs)]             # tiny bf16 weight slabs, loaded once
    mem = jnp.zeros((cout, m), jnp.float32)            # BetaLIF.init_potential()
    cols_per_t = 4 * m

    # Small static trip counts -> fully unrolled; every slice is static and lane-aligned
    # (multiples of M = 128 lanes).  The conv matmul for each 2-timestep block is consumed
    # as a value (no VMEM scratch round-trip) and interleaves with the LIF VPU work.
    for tb in range(0, n_steps, t_blk):
        cols = patches_ref[:, tb * cols_per_t:(tb + t_blk) * cols_per_t]   # [KP, t_blk*4*M] bf16
        # f32-accurate conv via accumulated bf16 matmuls (patches are exact 0/1 in bf16).
        y = jnp.dot(w[0], cols, preferred_element_type=jnp.float32)
        for i in range(1, n_slabs):
            y = y + jnp.dot(w[i], cols, preferred_element_type=jnp.float32)

        for dt in range(t_blk):
            t = tb + dt
            yt = y[:, dt * cols_per_t:(dt + 1) * cols_per_t]               # [Cout, 4*M]
            # MaxPool2d(2) == elementwise max over the 4 window-position slabs.
            pooled = jnp.maximum(jnp.maximum(yt[:, 0 * m:1 * m], yt[:, 1 * m:2 * m]),
                                 jnp.maximum(yt[:, 2 * m:3 * m], yt[:, 3 * m:4 * m]))
            # bias hoisted out of the max (per-channel constant: max(y+b) == max(y)+b)
            # BetaLIF: mem = beta * mem + input_current
            mem = beta_ref[t] * mem + (pooled + bias)
            # fire: fast_sigmoid forward == Heaviside(mem - threshold)
            spike = mem - threshold > 0.0
            spike_f = spike.astype(jnp.float32)
            # reset_potential
            if reset == "subtract":
                mem = mem - threshold * spike_f
            else:  # 'zero'
                mem = jnp.where(spike, 0.0, mem)
            spk_ref[t] = spike_f.astype(spk_ref.dtype)   # 0/1, exact in bf16
            pot_ref[t] = mem                             # post-reset potential


def beta_csnn_forward(spikes, betas, conv_w, conv_b, bn):
    """spikes: [T,B,Cin,H,W], betas: [T,B,Cout,Hp,Wp] -> (spikes, potentials) [T,B,Cout,Hp,Wp]."""
    conf = CONF
    k, s, p = conf["kernel"], conf["stride"], conf["padding"]
    Tn, Bn, Cin, H, W = spikes.shape
    Cout = conf["out_channel"]
    Ho = (H + 2 * p - k) // s + 1
    Wo = (W + 2 * p - k) // s + 1
    assert Ho % 2 == 0 and Wo % 2 == 0, "MaxPool2d(2) pool-split layout assumes even conv output"
    Hp, Wp = Ho // 2, Wo // 2
    M = Bn * Hp * Wp
    K = Cin * k * k
    KP = 16 * pl.cdiv(K, 16)        # pad contraction dim to bf16 sublane tile (36 -> 48), NOT 128

    # --- fold eval-mode BatchNorm2d into the conv (exact affine fold) ---
    if conf["is_bn"]:
        gamma, beta_bn, mean, var, eps = bn
        scale = gamma / jnp.sqrt(var + eps)
        w_f = conv_w * scale[:, None, None, None]
        b_f = (conv_b - mean) * scale + beta_bn
    else:
        w_f, b_f = conv_w, conv_b

    # --- im2col glue (plain JAX), done in bf16 (exact for 0/1 spikes, halves the copy bytes) ---
    # K flatten order = (Cin, kh, kw), matching OIHW weight.
    # TODO(synk): at larger H/W move im2col into the kernel (9 shifted accumulating matmuls /
    # lane-rolled taps) to drop the ~9x HBM expansion and this 8-D host transpose; negligible
    # at 16x16 where everything is a few hundred KiB.
    xp = jnp.pad(spikes.astype(jnp.bfloat16), ((0, 0), (0, 0), (0, 0), (p, p), (p, p)))
    cols = []
    for kh in range(k):
        for kw in range(k):
            cols.append(xp[:, :, :, kh:kh + s * Ho:s, kw:kw + s * Wo:s])  # [T,B,Cin,Ho,Wo]
    cols = jnp.stack(cols, axis=3)                          # [T,B,Cin,k2,Ho,Wo]
    cols = cols.reshape(Tn, Bn, Cin, k * k, Hp, 2, Wp, 2)   # split 2x2 pool windows
    cols = cols.transpose(2, 3, 0, 5, 7, 1, 4, 6)           # [Cin,k2,T,dh,dw,B,Hp,Wp]
    patches = cols.reshape(K, Tn * 4 * M)
    patches = jnp.pad(patches, ((0, KP - K), (0, 0)))       # explicit zero rows in the K pad

    # --- f32 weight -> sum of bf16 slabs (zero-padded K rows stay exactly zero) ---
    w_mat = jnp.pad(w_f.reshape(Cout, K).astype(jnp.float32), ((0, 0), (0, KP - K)))
    slabs, resid = [], w_mat
    for _ in range(N_WEIGHT_SLABS):
        hi = resid.astype(jnp.bfloat16)
        slabs.append(hi)
        resid = resid - hi.astype(jnp.float32)
    w_slabs = jnp.stack(slabs)                              # [NS, Cout, KP] bf16

    b_mat = jnp.broadcast_to(b_f.astype(jnp.float32)[:, None], (Cout, M))      # [Cout, M]
    beta_k = betas.transpose(0, 2, 1, 3, 4).reshape(Tn, Cout, M).astype(jnp.float32)

    t_blk = 2 if Tn % 2 == 0 else 1                         # ~1024 matmul columns per block
    kern = functools.partial(_betacsnn_kernel,
                             threshold=conf["mem_threshold"],
                             reset=conf["mem_reset_type"],
                             n_steps=Tn, t_blk=t_blk, m=M)

    # Everything (<1 MiB) fits in VMEM on v5e/v6e/v7x -> single grid step; exposed DMA (~0.5 us)
    # is cheaper than extra grid steps (~0.35 us each) at this size.
    # TODO(synk): when T/B/H/W grow, switch to grid=(T/T_blk,) with patches blocked along
    # columns, betas/outputs blocked along T and `mem` carried in persistent VMEM scratch
    # ('arbitrary' axis), and add a leading 'parallel' axis over 128-lane M blocks once
    # M >= 256 so v7x's two TensorCores both work and its 32 MiB scoped VMEM stays bounded.
    spk, pot = pl.pallas_call(
        kern,
        out_shape=(jax.ShapeDtypeStruct((Tn, Cout, M), jnp.bfloat16),
                   jax.ShapeDtypeStruct((Tn, Cout, M), jnp.float32)),
        grid_spec=pltpu.PrefetchScalarGridSpec(
            num_scalar_prefetch=0,
            grid=(1,),
            in_specs=[
                pl.BlockSpec((KP, Tn * 4 * M), lambda i: (0, 0)),             # patches (bf16)
                pl.BlockSpec((N_WEIGHT_SLABS, Cout, KP), lambda i: (0, 0, 0)),  # weight slabs
                pl.BlockSpec((Cout, M), lambda i: (0, 0)),                    # bias
                pl.BlockSpec((Tn, Cout, M), lambda i: (0, 0, 0)),             # betas
            ],
            out_specs=[
                pl.BlockSpec((Tn, Cout, M), lambda i: (0, 0, 0)),             # out spikes (bf16)
                pl.BlockSpec((Tn, Cout, M), lambda i: (0, 0, 0)),             # out potentials
            ],
        ),
        compiler_params=pltpu.CompilerParams(
            dimension_semantics=("arbitrary",)),
    )(patches, w_slabs, b_mat, beta_k)

    # back to PyTorch NCHW convention (spikes transposed in bf16, then widened: exact 0/1)
    spk = spk.reshape(Tn, Cout, Bn, Hp, Wp).transpose(0, 2, 1, 3, 4).astype(jnp.float32)
    pot = pot.reshape(Tn, Cout, Bn, Hp, Wp).transpose(0, 2, 1, 3, 4)
    return spk, pot


def reference(spikes, betas, conv_w, conv_b, bn):
    """Pure-JAX reference of the PyTorch forward (conv -> BN(eval) -> maxpool -> BetaLIF)."""
    conf = CONF
    k, s, p = conf["kernel"], conf["stride"], conf["padding"]
    thr = conf["mem_threshold"]
    gamma, bbn, mean, var, eps = bn

    def step(mem, xs):
        x, beta = xs
        y = lax.conv_general_dilated(x, conv_w, (s, s), [(p, p), (p, p)],
                                     dimension_numbers=("NCHW", "OIHW", "NCHW"))
        y = y + conv_b[None, :, None, None]
        if conf["is_bn"]:
            y = (gamma[None, :, None, None] * (y - mean[None, :, None, None])
                 / jnp.sqrt(var[None, :, None, None] + eps) + bbn[None, :, None, None])
        y = lax.reduce_window(y, -jnp.inf, lax.max, (1, 1, 2, 2), (1, 1, 2, 2), "VALID")
        mem = beta * mem + y
        spk = (mem - thr > 0).astype(jnp.float32)
        mem = mem - thr * spk
        return mem, (spk, mem)

    Hp = ((spikes.shape[3] + 2 * p - k) // s + 1) // 2
    Wp = ((spikes.shape[4] + 2 * p - k) // s + 1) // 2
    mem0 = jnp.zeros((spikes.shape[1], conf["out_channel"], Hp, Wp), jnp.float32)
    _, (spks, pots) = lax.scan(step, mem0, (spikes, betas))
    return spks, pots


if __name__ == "__main__":
    key = jax.random.PRNGKey(0)
    ks = jax.random.split(key, 8)
    Cin, Cout, k = CONF["in_channel"], CONF["out_channel"], CONF["kernel"]
    H = W = CONF["in_size"]
    Hp = Wp = ((H + 2 * CONF["padding"] - k) // CONF["stride"] + 1) // 2

    spikes = jax.random.bernoulli(ks[0], 0.3, (T, B, Cin, H, W)).astype(jnp.float32)
    betas = jax.random.uniform(ks[1], (T, B, Cout, Hp, Wp), jnp.float32, 0.5, 0.95)
    conv_w = 0.3 * jax.random.normal(ks[2], (Cout, Cin, k, k), jnp.float32)
    conv_b = 0.1 * jax.random.normal(ks[3], (Cout,), jnp.float32)
    gamma = 1.0 + 0.1 * jax.random.normal(ks[4], (Cout,), jnp.float32)
    bbn = 0.1 * jax.random.normal(ks[5], (Cout,), jnp.float32)
    r_mean = 0.1 * jax.random.normal(ks[6], (Cout,), jnp.float32)
    r_var = jax.random.uniform(ks[7], (Cout,), jnp.float32, 0.5, 1.5)
    bn = (gamma, bbn, r_mean, r_var, 1e-5)

    out = beta_csnn_forward(spikes, betas, conv_w, conv_b, bn)
    out = jax.block_until_ready(out)
    spk, pot = out

    rspk, rpot = jax.block_until_ready(reference(spikes, betas, conv_w, conv_b, bn))
    assert spk.shape == (T, B, Cout, Hp, Wp) and pot.shape == (T, B, Cout, Hp, Wp)
    assert jnp.allclose(pot, rpot, atol=2e-4), float(jnp.abs(pot - rpot).max())
    assert jnp.allclose(spk, rspk), "spike mismatch"
    print("KERNEL_OK")
</pallas_src>

<mosaic_0001>
module attributes {stable_mosaic.version = 11 : i64} {
  func.func @_betacsnn_kernel(%arg0: i32, %arg1: memref<48x4096xbf16, #tpu.memory_space<vmem>>, %arg2: memref<3x8x48xbf16, #tpu.memory_space<vmem>>, %arg3: memref<8x128xf32, #tpu.memory_space<vmem>>, %arg4: memref<8x8x128xf32, #tpu.memory_space<vmem>>, %arg5: memref<8x8x128xbf16, #tpu.memory_space<vmem>>, %arg6: memref<8x8x128xf32, #tpu.memory_space<vmem>>) attributes {dimension_semantics = [#tpu.dimension_semantics<arbitrary>], iteration_bounds = array<i64: 1>, scalar_prefetch = 0 : i64, scratch_operands = 0 : i64, tpu.core_type = #tpu.core_type<tc>, window_params = [{pipeline_mode = #tpu.pipeline_mode<synchronous>, transform_indices = @transform_0, window_bounds = array<i64: 48, 4096>}, {pipeline_mode = #tpu.pipeline_mode<synchronous>, transform_indices = @transform_1, window_bounds = array<i64: 3, 8, 48>}, {pipeline_mode = #tpu.pipeline_mode<synchronous>, transform_indices = @transform_2, window_bounds = array<i64: 8, 128>}, {pipeline_mode = #tpu.pipeline_mode<synchronous>, transform_indices = @transform_3, window_bounds = array<i64: 8, 8, 128>}, {pipeline_mode = #tpu.pipeline_mode<synchronous>, transform_indices = @transform_4, window_bounds = array<i64: 8, 8, 128>}, {pipeline_mode = #tpu.pipeline_mode<synchronous>, transform_indices = @transform_5, window_bounds = array<i64: 8, 8, 128>}]} {
    %c0 = arith.constant 0 : index
    %c0_0 = arith.constant 0 : index
    %0 = vector.load %arg3[%c0, %c0_0] : memref<8x128xf32, #tpu.memory_space<vmem>>, vector<8x128xf32>
    %c0_1 = arith.constant 0 : index
    %c0_2 = arith.constant 0 : index
    %c0_3 = arith.constant 0 : index
    %1 = vector.load %arg2[%c0_1, %c0_2, %c0_3] : memref<3x8x48xbf16, #tpu.memory_space<vmem>>, vector<1x8x48xbf16>
    %2 = vector.shape_cast %1 : vector<1x8x48xbf16> to vector<8x48xbf16>
    %c1 = arith.constant 1 : index
    %c0_4 = arith.constant 0 : index
    %c0_5 = arith.constant 0 : index
    %3 = vector.load %arg2[%c1, %c0_4, %c0_5] : memref<3x8x48xbf16, #tpu.memory_space<vmem>>, vector<1x8x48xbf16>
    %4 = vector.shape_cast %3 : vector<1x8x48xbf16> to vector<8x48xbf16>
    %c2 = arith.constant 2 : index
    %c0_6 = arith.constant 0 : index
    %c0_7 = arith.constant 0 : index
    %5 = vector.load %arg2[%c2, %c0_6, %c0_7] : memref<3x8x48xbf16, #tpu.memory_space<vmem>>, vector<1x8x48xbf16>
    %6 = vector.shape_cast %5 : vector<1x8x48xbf16> to vector<8x48xbf16>
    %cst = arith.constant 0.000000e+00 : f32
    %7 = vector.broadcast %cst : f32 to vector<8x128xf32>
    %c0_8 = arith.constant 0 : index
    %c0_9 = arith.constant 0 : index
    %8 = vector.load %arg1[%c0_8, %c0_9] : memref<48x4096xbf16, #tpu.memory_space<vmem>>, vector<48x1024xbf16>
    %cst_10 = arith.constant dense<0.000000e+00> : vector<8x1024xf32>
    %9 = tpu.matmul %2, %8, %cst_10 {dimension_numbers = #tpu.dot_dimension_numbers<[1], [0], [0], [1], [0, 0, 1, 1], [], []>} : vector<8x48xbf16>, vector<48x1024xbf16>, vector<8x1024xf32> -> vector<8x1024xf32>
    %cst_11 = arith.constant dense<0.000000e+00> : vector<8x1024xf32>
    %10 = tpu.matmul %4, %8, %cst_11 {dimension_numbers = #tpu.dot_dimension_numbers<[1], [0], [0], [1], [0, 0, 1, 1], [], []>} : vector<8x48xbf16>, vector<48x1024xbf16>, vector<8x1024xf32> -> vector<8x1024xf32>
    %11 = arith.addf %9, %10 : vector<8x1024xf32>
    %cst_12 = arith.constant dense<0.000000e+00> : vector<8x1024xf32>
    %12 = tpu.matmul %6, %8, %cst_12 {dimension_numbers = #tpu.dot_dimension_numbers<[1], [0], [0], [1], [0, 0, 1, 1], [], []>} : vector<8x48xbf16>, vector<48x1024xbf16>, vector<8x1024xf32> -> vector<8x1024xf32>
    %13 = arith.addf %11, %12 : vector<8x1024xf32>
    %14 = vector.extract_strided_slice %13 {offsets = [0, 0], sizes = [8, 512], strides = [1, 1]} : vector<8x1024xf32> to vector<8x512xf32>
    %15 = vector.extract_strided_slice %14 {offsets = [0, 0], sizes = [8, 128], strides = [1, 1]} : vector<8x512xf32> to vector<8x128xf32>
    %16 = vector.extract_strided_slice %14 {offsets = [0, 128], sizes = [8, 128], strides = [1, 1]} : vector<8x512xf32> to vector<8x128xf32>
    %17 = arith.maximumf %15, %16 : vector<8x128xf32>
    %18 = vector.extract_strided_slice %14 {offsets = [0, 256], sizes = [8, 128], strides = [1, 1]} : vector<8x512xf32> to vector<8x128xf32>
    %19 = vector.extract_strided_slice %14 {offsets = [0, 384], sizes = [8, 128], strides = [1, 1]} : vector<8x512xf32> to vector<8x128xf32>
    %20 = arith.maximumf %18, %19 : vector<8x128xf32>
    %21 = arith.maximumf %17, %20 : vector<8x128xf32>
    %c0_13 = arith.constant 0 : index
    %c0_14 = arith.constant 0 : index
    %c0_15 = arith.constant 0 : index
    %22 = vector.load %arg4[%c0_13, %c0_14, %c0_15] : memref<8x8x128xf32, #tpu.memory_space<vmem>>, vector<1x8x128xf32>
    %23 = vector.shape_cast %22 : vector<1x8x128xf32> to vector<8x128xf32>
    %24 = arith.mulf %23, %7 : vector<8x128xf32>
    %25 = arith.addf %21, %0 : vector<8x128xf32>
    %26 = arith.addf %24, %25 : vector<8x128xf32>
    %cst_16 = arith.constant 1.000000e+00 : f32
    %27 = vector.broadcast %cst_16 : f32 to vector<8x128xf32>
    %28 = arith.subf %26, %27 : vector<8x128xf32>
    %cst_17 = arith.constant 0.000000e+00 : f32
    %29 = vector.broadcast %cst_17 : f32 to vector<8x128xf32>
    %30 = arith.cmpf ogt, %28, %29 : vector<8x128xf32>
    %31 = arith.extui %30 : vector<8x128xi1> to vector<8x128xi32>
    %32 = arith.sitofp %31 : vector<8x128xi32> to vector<8x128xf32>
    %cst_18 = arith.constant 1.000000e+00 : f32
    %33 = vector.broadcast %cst_18 : f32 to vector<8x128xf32>
    %34 = arith.mulf %33, %32 : vector<8x128xf32>
    %35 = arith.subf %26, %34 : vector<8x128xf32>
    %36 = arith.truncf %32 : vector<8x128xf32> to vector<8x128xbf16>
    %c0_19 = arith.constant 0 : index
    %c0_20 = arith.constant 0 : index
    %c0_21 = arith.constant 0 : index
    %37 = vector.load %arg5[%c0_19, %c0_20, %c0_21] : memref<8x8x128xbf16, #tpu.memory_space<vmem>>, vector<1x8x128xbf16>
    %38 = vector.shape_cast %37 : vector<1x8x128xbf16> to vector<8x128xbf16>
    %39 = vector.shape_cast %36 : vector<8x128xbf16> to vector<1x8x128xbf16>
    tpu.vector_store %arg5[%c0_19, %c0_20, %c0_21], %39 {strides = array<i32>} : memref<8x8x128xbf16, #tpu.memory_space<vmem>>, vector<1x8x128xbf16>,
    %c0_22 = arith.constant 0 : index
    %c0_23 = arith.constant 0 : index
    %c0_24 = arith.constant 0 : index
    %40 = vector.load %arg6[%c0_22, %c0_23, %c0_24] : memref<8x8x128xf32, #tpu.memory_space<vmem>>, vector<1x8x128xf32>
    %41 = vector.shape_cast %40 : vector<1x8x128xf32> to vector<8x128xf32>
    %42 = vector.shape_cast %35 : vector<8x128xf32> to vector<1x8x128xf32>
    tpu.vector_store %arg6[%c0_22, %c0_23, %c0_24], %42 {strides = array<i32>} : memref<8x8x128xf32, #tpu.memory_space<vmem>>, vector<1x8x128xf32>,
    %43 = vector.extract_strided_slice %13 {offsets = [0, 512], sizes = [8, 512], strides = [1, 1]} : vector<8x1024xf32> to vector<8x512xf32>
    %44 = vector.extract_strided_slice %43 {offsets = [0, 0], sizes = [8, 128], strides = [1, 1]} : vector<8x512xf32> to vector<8x128xf32>
    %45 = vector.extract_strided_slice %43 {offsets = [0, 128], sizes = [8, 128], strides = [1, 1]} : vector<8x512xf32> to vector<8x128xf32>
    %46 = arith.maximumf %44, %45 : vector<8x128xf32>
    %47 = vector.extract_strided_slice %43 {offsets = [0, 256], sizes = [8, 128], strides = [1, 1]} : vector<8x512xf32> to vector<8x128xf32>
    %48 = vector.extract_strided_slice %43 {offsets = [0, 384], sizes = [8, 128], strides = [1, 1]} : vector<8x512xf32> to vector<8x128xf32>
    %49 = arith.maximumf %47, %48 : vector<8x128xf32>
    %50 = arith.maximumf %46, %49 : vector<8x128xf32>
    %c1_25 = arith.constant 1 : index
    %c0_26 = arith.constant 0 : index
    %c0_27 = arith.constant 0 : index
    %51 = vector.load %arg4[%c1_25, %c0_26, %c0_27] : memref<8x8x128xf32, #tpu.memory_space<vmem>>, vector<1x8x128xf32>
    %52 = vector.shape_cast %51 : vector<1x8x128xf32> to vector<8x128xf32>
    %53 = arith.mulf %52, %35 : vector<8x128xf32>
    %54 = arith.addf %50, %0 : vector<8x128xf32>
    %55 = arith.addf %53, %54 : vector<8x128xf32>
    %cst_28 = arith.constant 1.000000e+00 : f32
    %56 = vector.broadcast %cst_28 : f32 to vector<8x128xf32>
    %57 = arith.subf %55, %56 : vector<8x128xf32>
    %cst_29 = arith.constant 0.000000e+00 : f32
    %58 = vector.broadcast %cst_29 : f32 to vector<8x128xf32>
    %59 = arith.cmpf ogt, %57, %58 : vector<8x128xf32>
    %60 = arith.extui %59 : vector<8x128xi1> to vector<8x128xi32>
    %61 = arith.sitofp %60 : vector<8x128xi32> to vector<8x128xf32>
    %cst_30 = arith.constant 1.000000e+00 : f32
    %62 = vector.broadcast %cst_30 : f32 to vector<8x128xf32>
    %63 = arith.mulf %62, %61 : vector<8x128xf32>
    %64 = arith.subf %55, %63 : vector<8x128xf32>
    %65 = arith.truncf %61 : vector<8x128xf32> to vector<8x128xbf16>
    %c1_31 = arith.constant 1 : index
    %c0_32 = arith.constant 0 : index
    %c0_33 = arith.constant 0 : index
    %66 = vector.load %arg5[%c1_31, %c0_32, %c0_33] : memref<8x8x128xbf16, #tpu.memory_space<vmem>>, vector<1x8x128xbf16>
    %67 = vector.shape_cast %66 : vector<1x8x128xbf16> to vector<8x128xbf16>
    %68 = vector.shape_cast %65 : vector<8x128xbf16> to vector<1x8x128xbf16>
    tpu.vector_store %arg5[%c1_31, %c0_32, %c0_33], %68 {strides = array<i32>} : memref<8x8x128xbf16, #tpu.memory_space<vmem>>, vector<1x8x128xbf16>,
    %c1_34 = arith.constant 1 : index
    %c0_35 = arith.constant 0 : index
    %c0_36 = arith.constant 0 : index
    %69 = vector.load %arg6[%c1_34, %c0_35, %c0_36] : memref<8x8x128xf32, #tpu.memory_space<vmem>>, vector<1x8x128xf32>
    %70 = vector.shape_cast %69 : vector<1x8x128xf32> to vector<8x128xf32>
    %71 = vector.shape_cast %64 : vector<8x128xf32> to vector<1x8x128xf32>
    tpu.vector_store %arg6[%c1_34, %c0_35, %c0_36], %71 {strides = array<i32>} : memref<8x8x128xf32, #tpu.memory_space<vmem>>, vector<1x8x128xf32>,
    %c0_37 = arith.constant 0 : index
    %c1024 = arith.constant 1024 : index
    %72 = vector.load %arg1[%c0_37, %c1024] : memref<48x4096xbf16, #tpu.memory_space<vmem>>, vector<48x1024xbf16>
    %cst_38 = arith.constant dense<0.000000e+00> : vector<8x1024xf32>
    %73 = tpu.matmul %2, %72, %cst_38 {dimension_numbers = #tpu.dot_dimension_numbers<[1], [0], [0], [1], [0, 0, 1, 1], [], []>} : vector<8x48xbf16>, vector<48x1024xbf16>, vector<8x1024xf32> -> vector<8x1024xf32>
    %cst_39 = arith.constant dense<0.000000e+00> : vector<8x1024xf32>
    %74 = tpu.matmul %4, %72, %cst_39 {dimension_numbers = #tpu.dot_dimension_numbers<[1], [0], [0], [1], [0, 0, 1, 1], [], []>} : vector<8x48xbf16>, vector<48x1024xbf16>, vector<8x1024xf32> -> vector<8x1024xf32>
    %75 = arith.addf %73, %74 : vector<8x1024xf32>
    %cst_40 = arith.constant dense<0.000000e+00> : vector<8x1024xf32>
    %76 = tpu.matmul %6, %72, %cst_40 {dimension_numbers = #tpu.dot_dimension_numbers<[1], [0], [0], [1], [0, 0, 1, 1], [], []>} : vector<8x48xbf16>, vector<48x1024xbf16>, vector<8x1024xf32> -> vector<8x1024xf32>
    %77 = arith.addf %75, %76 : vector<8x1024xf32>
    %78 = vector.extract_strided_slice %77 {offsets = [0, 0], sizes = [8, 512], strides = [1, 1]} : vector<8x1024xf32> to vector<8x512xf32>
    %79 = vector.extract_strided_slice %78 {offsets = [0, 0], sizes = [8, 128], strides = [1, 1]} : vector<8x512xf32> to vector<8x128xf32>
    %80 = vector.extract_strided_slice %78 {offsets = [0, 128], sizes = [8, 128], strides = [1, 1]} : vector<8x512xf32> to vector<8x128xf32>
    %81 = arith.maximumf %79, %80 : vector<8x128xf32>
    %82 = vector.extract_strided_slice %78 {offsets = [0, 256], sizes = [8, 128], strides = [1, 1]} : vector<8x512xf32> to vector<8x128xf32>
    %83 = vector.extract_strided_slice %78 {offsets = [0, 384], sizes = [8, 128], strides = [1, 1]} : vector<8x512xf32> to vector<8x128xf32>
    %84 = arith.maximumf %82, %83 : vector<8x128xf32>
    %85 = arith.maximumf %81, %84 : vector<8x128xf32>
    %c2_41 = arith.constant 2 : index
    %c0_42 = arith.constant 0 : index
    %c0_43 = arith.constant 0 : index
    %86 = vector.load %arg4[%c2_41, %c0_42, %c0_43] : memref<8x8x128xf32, #tpu.memory_space<vmem>>, vector<1x8x128xf32>
    %87 = vector.shape_cast %86 : vector<1x8x128xf32> to vector<8x128xf32>
    %88 = arith.mulf %87, %64 : vector<8x128xf32>
    %89 = arith.addf %85, %0 : vector<8x128xf32>
    %90 = arith.addf %88, %89 : vector<8x128xf32>
    %cst_44 = arith.constant 1.000000e+00 : f32
    %91 = vector.broadcast %cst_44 : f32 to vector<8x128xf32>
    %92 = arith.subf %90, %91 : vector<8x128xf32>
    %cst_45 = arith.constant 0.000000e+00 : f32
    %93 = vector.broadcast %cst_45 : f32 to vector<8x128xf32>
    %94 = arith.cmpf ogt, %92, %93 : vector<8x128xf32>
    %95 = arith.extui %94 : vector<8x128xi1> to vector<8x128xi32>
    %96 = arith.sitofp %95 : vector<8x128xi32> to vector<8x128xf32>
    %cst_46 = arith.constant 1.000000e+00 : f32
    %97 = vector.broadcast %cst_46 : f32 to vector<8x128xf32>
    %98 = arith.mulf %97, %96 : vector<8x128xf32>
    %99 = arith.subf %90, %98 : vector<8x128xf32>
    %100 = arith.truncf %96 : vector<8x128xf32> to vector<8x128xbf16>
    %c2_47 = arith.constant 2 : index
    %c0_48 = arith.constant 0 : index
    %c0_49 = arith.constant 0 : index
    %101 = vector.load %arg5[%c2_47, %c0_48, %c0_49] : memref<8x8x128xbf16, #tpu.memory_space<vmem>>, vector<1x8x128xbf16>
    %102 = vector.shape_cast %101 : vector<1x8x128xbf16> to vector<8x128xbf16>
    %103 = vector.shape_cast %100 : vector<8x128xbf16> to vector<1x8x128xbf16>
    tpu.vector_store %arg5[%c2_47, %c0_48, %c0_49], %103 {strides = array<i32>} : memref<8x8x128xbf16, #tpu.memory_space<vmem>>, vector<1x8x128xbf16>,
    %c2_50 = arith.constant 2 : index
    %c0_51 = arith.constant 0 : index
    %c0_52 = arith.constant 0 : index
    %104 = vector.load %arg6[%c2_50, %c0_51, %c0_52] : memref<8x8x128xf32, #tpu.memory_space<vmem>>, vector<1x8x128xf32>
    %105 = vector.shape_cast %104 : vector<1x8x128xf32> to vector<8x128xf32>
    %106 = vector.shape_cast %99 : vector<8x128xf32> to vector<1x8x128xf32>
    tpu.vector_store %arg6[%c2_50, %c0_51, %c0_52], %106 {strides = array<i32>} : memref<8x8x128xf32, #tpu.memory_space<vmem>>, vector<1x8x128xf32>,
    %107 = vector.extract_strided_slice %77 {offsets = [0, 512], sizes = [8, 512], strides = [1, 1]} : vector<8x1024xf32> to vector<8x512xf32>
    %108 = vector.extract_strided_slice %107 {offsets = [0, 0], sizes = [8, 128], strides = [1, 1]} : vector<8x512xf32> to vector<8x128xf32>
    %109 = vector.extract_strided_slice %107 {offsets = [0, 128], sizes = [8, 128], strides = [1, 1]} : vector<8x512xf32> to vector<8x128xf32>
    %110 = arith.maximumf %108, %109 : vector<8x128xf32>
    %111 = vector.extract_strided_slice %107 {offsets = [0, 256], sizes = [8, 128], strides = [1, 1]} : vector<8x512xf32> to vector<8x128xf32>
    %112 = vector.extract_strided_slice %107 {offsets = [0, 384], sizes = [8, 128], strides = [1, 1]} : vector<8x512xf32> to vector<8x128xf32>
    %113 = arith.maximumf %111, %112 : vector<8x128xf32>
    %114 = arith.maximumf %110, %113 : vector<8x128xf32>
    %c3 = arith.constant 3 : index
    %c0_53 = arith.constant 0 : index
    %c0_54 = arith.constant 0 : index
    %115 = vector.load %arg4[%c3, %c0_53, %c0_54] : memref<8x8x128xf32, #tpu.memory_space<vmem>>, vector<1x8x128xf32>
    %116 = vector.shape_cast %115 : vector<1x8x128xf32> to vector<8x128xf32>
    %117 = arith.mulf %116, %99 : vector<8x128xf32>
    %118 = arith.addf %114, %0 : vector<8x128xf32>
    %119 = arith.addf %117, %118 : vector<8x128xf32>
    %cst_55 = arith.constant 1.000000e+00 : f32
    %120 = vector.broadcast %cst_55 : f32 to vector<8x128xf32>
    %121 = arith.subf %119, %120 : vector<8x128xf32>
    %cst_56 = arith.constant 0.000000e+00 : f32
    %122 = vector.broadcast %cst_56 : f32 to vector<8x128xf32>
    %123 = arith.cmpf ogt, %121, %122 : vector<8x128xf32>
    %124 = arith.extui %123 : vector<8x128xi1> to vector<8x128xi32>
    %125 = arith.sitofp %124 : vector<8x128xi32> to vector<8x128xf32>
    %cst_57 = arith.constant 1.000000e+00 : f32
    %126 = vector.broadcast %cst_57 : f32 to vector<8x128xf32>
    %127 = arith.mulf %126, %125 : vector<8x128xf32>
    %128 = arith.subf %119, %127 : vector<8x128xf32>
    %129 = arith.truncf %125 : vector<8x128xf32> to vector<8x128xbf16>
    %c3_58 = arith.constant 3 : index
    %c0_59 = arith.constant 0 : index
    %c0_60 = arith.constant 0 : index
    %130 = vector.load %arg5[%c3_58, %c0_59, %c0_60] : memref<8x8x128xbf16, #tpu.memory_space<vmem>>, vector<1x8x128xbf16>
    %131 = vector.shape_cast %130 : vector<1x8x128xbf16> to vector<8x128xbf16>
    %132 = vector.shape_cast %129 : vector<8x128xbf16> to vector<1x8x128xbf16>
    tpu.vector_store %arg5[%c3_58, %c0_59, %c0_60], %132 {strides = array<i32>} : memref<8x8x128xbf16, #tpu.memory_space<vmem>>, vector<1x8x128xbf16>,
    %c3_61 = arith.constant 3 : index
    %c0_62 = arith.constant 0 : index
    %c0_63 = arith.constant 0 : index
    %133 = vector.load %arg6[%c3_61, %c0_62, %c0_63] : memref<8x8x128xf32, #tpu.memory_space<vmem>>, vector<1x8x128xf32>
    %134 = vector.shape_cast %133 : vector<1x8x128xf32> to vector<8x128xf32>
    %135 = vector.shape_cast %128 : vector<8x128xf32> to vector<1x8x128xf32>
    tpu.vector_store %arg6[%c3_61, %c0_62, %c0_63], %135 {strides = array<i32>} : memref<8x8x128xf32, #tpu.memory_space<vmem>>, vector<1x8x128xf32>,
    %c0_64 = arith.constant 0 : index
    %c2048 = arith.constant 2048 : index
    %136 = vector.load %arg1[%c0_64, %c2048] : memref<48x4096xbf16, #tpu.memory_space<vmem>>, vector<48x1024xbf16>
    %cst_65 = arith.constant dense<0.000000e+00> : vector<8x1024xf32>
    %137 = tpu.matmul %2, %136, %cst_65 {dimension_numbers = #tpu.dot_dimension_numbers<[1], [0], [0], [1], [0, 0, 1, 1], [], []>} : vector<8x48xbf16>, vector<48x1024xbf16>, vector<8x1024xf32> -> vector<8x1024xf32>
    %cst_66 = arith.constant dense<0.000000e+00> : vector<8x1024xf32>
    %138 = tpu.matmul %4, %136, %cst_66 {dimension_numbers = #tpu.dot_dimension_numbers<[1], [0], [0], [1], [0, 0, 1, 1], [], []>} : vector<8x48xbf16>, vector<48x1024xbf16>, vector<8x1024xf32> -> vector<8x1024xf32>
    %139 = arith.addf %137, %138 : vector<8x1024xf32>
    %cst_67 = arith.constant dense<0.000000e+00> : vector<8x1024xf32>
    %140 = tpu.matmul %6, %136, %cst_67 {dimension_numbers = #tpu.dot_dimension_numbers<[1], [0], [0], [1], [0, 0, 1, 1], [], []>} : vector<8x48xbf16>, vector<48x1024xbf16>, vector<8x1024xf32> -> vector<8x1024xf32>
    %141 = arith.addf %139, %140 : vector<8x1024xf32>
    %142 = vector.extract_strided_slice %141 {offsets = [0, 0], sizes = [8, 512], strides = [1, 1]} : vector<8x1024xf32> to vector<8x512xf32>
    %143 = vector.extract_strided_slice %142 {offsets = [0, 0], sizes = [8, 128], strides = [1, 1]} : vector<8x512xf32> to vector<8x128xf32>
    %144 = vector.extract_strided_slice %142 {offsets = [0, 128], sizes = [8, 128], strides = [1, 1]} : vector<8x512xf32> to vector<8x128xf32>
    %145 = arith.maximumf %143, %144 : vector<8x128xf32>
    %146 = vector.extract_strided_slice %142 {offsets = [0, 256], sizes = [8, 128], strides = [1, 1]} : vector<8x512xf32> to vector<8x128xf32>
    %147 = vector.extract_strided_slice %142 {offsets = [0, 384], sizes = [8, 128], strides = [1, 1]} : vector<8x512xf32> to vector<8x128xf32>
    %148 = arith.maximumf %146, %147 : vector<8x128xf32>
    %149 = arith.maximumf %145, %148 : vector<8x128xf32>
    %c4 = arith.constant 4 : index
    %c0_68 = arith.constant 0 : index
    %c0_69 = arith.constant 0 : index
    %150 = vector.load %arg4[%c4, %c0_68, %c0_69] : memref<8x8x128xf32, #tpu.memory_space<vmem>>, vector<1x8x128xf32>
    %151 = vector.shape_cast %150 : vector<1x8x128xf32> to vector<8x128xf32>
    %152 = arith.mulf %151, %128 : vector<8x128xf32>
    %153 = arith.addf %149, %0 : vector<8x128xf32>
    %154 = arith.addf %152, %153 : vector<8x128xf32>
    %cst_70 = arith.constant 1.000000e+00 : f32
    %155 = vector.broadcast %cst_70 : f32 to vector<8x128xf32>
    %156 = arith.subf %154, %155 : vector<8x128xf32>
    %cst_71 = arith.constant 0.000000e+00 : f32
    %157 = vector.broadcast %cst_71 : f32 to vector<8x128xf32>
    %158 = arith.cmpf ogt, %156, %157 : vector<8x128xf32>
    %159 = arith.extui %158 : vector<8x128xi1> to vector<8x128xi32>
    %160 = arith.sitofp %159 : vector<8x128xi32> to vector<8x128xf32>
    %cst_72 = arith.constant 1.000000e+00 : f32
    %161 = vector.broadcast %cst_72 : f32 to vector<8x128xf32>
    %162 = arith.mulf %161, %160 : vector<8x128xf32>
    %163 = arith.subf %154, %162 : vector<8x128xf32>
    %164 = arith.truncf %160 : vector<8x128xf32> to vector<8x128xbf16>
    %c4_73 = arith.constant 4 : index
    %c0_74 = arith.constant 0 : index
    %c0_75 = arith.constant 0 : index
    %165 = vector.load %arg5[%c4_73, %c0_74, %c0_75] : memref<8x8x128xbf16, #tpu.memory_space<vmem>>, vector<1x8x128xbf16>
    %166 = vector.shape_cast %165 : vector<1x8x128xbf16> to vector<8x128xbf16>
    %167 = vector.shape_cast %164 : vector<8x128xbf16> to vector<1x8x128xbf16>
    tpu.vector_store %arg5[%c4_73, %c0_74, %c0_75], %167 {strides = array<i32>} : memref<8x8x128xbf16, #tpu.memory_space<vmem>>, vector<1x8x128xbf16>,
    %c4_76 = arith.constant 4 : index
    %c0_77 = arith.constant 0 : index
    %c0_78 = arith.constant 0 : index
    %168 = vector.load %arg6[%c4_76, %c0_77, %c0_78] : memref<8x8x128xf32, #tpu.memory_space<vmem>>, vector<1x8x128xf32>
    %169 = vector.shape_cast %168 : vector<1x8x128xf32> to vector<8x128xf32>
    %170 = vector.shape_cast %163 : vector<8x128xf32> to vector<1x8x128xf32>
    tpu.vector_store %arg6[%c4_76, %c0_77, %c0_78], %170 {strides = array<i32>} : memref<8x8x128xf32, #tpu.memory_space<vmem>>, vector<1x8x128xf32>,
    %171 = vector.extract_strided_slice %141 {offsets = [0, 512], sizes = [8, 512], strides = [1, 1]} : vector<8x1024xf32> to vector<8x512xf32>
    %172 = vector.extract_strided_slice %171 {offsets = [0, 0], sizes = [8, 128], strides = [1, 1]} : vector<8x512xf32> to vector<8x128xf32>
    %173 = vector.extract_strided_slice %171 {offsets = [0, 128], sizes = [8, 128], strides = [1, 1]} : vector<8x512xf32> to vector<8x128xf32>
    %174 = arith.maximumf %172, %173 : vector<8x128xf32>
    %175 = vector.extract_strided_slice %171 {offsets = [0, 256], sizes = [8, 128], strides = [1, 1]} : vector<8x512xf32> to vector<8x128xf32>
    %176 = vector.extract_strided_slice %171 {offsets = [0, 384], sizes = [8, 128], strides = [1, 1]} : vector<8x512xf32> to vector<8x128xf32>
    %177 = arith.maximumf %175, %176 : vector<8x128xf32>
    %178 = arith.maximumf %174, %177 : vector<8x128xf32>
    %c5 = arith.constant 5 : index
    %c0_79 = arith.constant 0 : index
    %c0_80 = arith.constant 0 : index
    %179 = vector.load %arg4[%c5, %c0_79, %c0_80] : memref<8x8x128xf32, #tpu.memory_space<vmem>>, vector<1x8x128xf32>
    %180 = vector.shape_cast %179 : vector<1x8x128xf32> to vector<8x128xf32>
    %181 = arith.mulf %180, %163 : vector<8x128xf32>
    %182 = arith.addf %178, %0 : vector<8x128xf32>
    %183 = arith.addf %181, %182 : vector<8x128xf32>
    %cst_81 = arith.constant 1.000000e+00 : f32
    %184 = vector.broadcast %cst_81 : f32 to vector<8x128xf32>
    %185 = arith.subf %183, %184 : vector<8x128xf32>
    %cst_82 = arith.constant 0.000000e+00 : f32
    %186 = vector.broadcast %cst_82 : f32 to vector<8x128xf32>
    %187 = arith.cmpf ogt, %185, %186 : vector<8x128xf32>
    %188 = arith.extui %187 : vector<8x128xi1> to vector<8x128xi32>
    %189 = arith.sitofp %188 : vector<8x128xi32> to vector<8x128xf32>
    %cst_83 = arith.constant 1.000000e+00 : f32
    %190 = vector.broadcast %cst_83 : f32 to vector<8x128xf32>
    %191 = arith.mulf %190, %189 : vector<8x128xf32>
    %192 = arith.subf %183, %191 : vector<8x128xf32>
    %193 = arith.truncf %189 : vector<8x128xf32> to vector<8x128xbf16>
    %c5_84 = arith.constant 5 : index
    %c0_85 = arith.constant 0 : index
    %c0_86 = arith.constant 0 : index
    %194 = vector.load %arg5[%c5_84, %c0_85, %c0_86] : memref<8x8x128xbf16, #tpu.memory_space<vmem>>, vector<1x8x128xbf16>
    %195 = vector.shape_cast %194 : vector<1x8x128xbf16> to vector<8x128xbf16>
    %196 = vector.shape_cast %193 : vector<8x128xbf16> to vector<1x8x128xbf16>
    tpu.vector_store %arg5[%c5_84, %c0_85, %c0_86], %196 {strides = array<i32>} : memref<8x8x128xbf16, #tpu.memory_space<vmem>>, vector<1x8x128xbf16>,
    %c5_87 = arith.constant 5 : index
    %c0_88 = arith.constant 0 : index
    %c0_89 = arith.constant 0 : index
    %197 = vector.load %arg6[%c5_87, %c0_88, %c0_89] : memref<8x8x128xf32, #tpu.memory_space<vmem>>, vector<1x8x128xf32>
    %198 = vector.shape_cast %197 : vector<1x8x128xf32> to vector<8x128xf32>
    %199 = vector.shape_cast %192 : vector<8x128xf32> to vector<1x8x128xf32>
    tpu.vector_store %arg6[%c5_87, %c0_88, %c0_89], %199 {strides = array<i32>} : memref<8x8x128xf32, #tpu.memory_space<vmem>>, vector<1x8x128xf32>,
    %c0_90 = arith.constant 0 : index
    %c3072 = arith.constant 3072 : index
    %200 = vector.load %arg1[%c0_90, %c3072] : memref<48x4096xbf16, #tpu.memory_space<vmem>>, vector<48x1024xbf16>
    %cst_91 = arith.constant dense<0.000000e+00> : vector<8x1024xf32>
    %201 = tpu.matmul %2, %200, %cst_91 {dimension_numbers = #tpu.dot_dimension_numbers<[1], [0], [0], [1], [0, 0, 1, 1], [], []>} : vector<8x48xbf16>, vector<48x1024xbf16>, vector<8x1024xf32> -> vector<8x1024xf32>
    %cst_92 = arith.constant dense<0.000000e+00> : vector<8x1024xf32>
    %202 = tpu.matmul %4, %200, %cst_92 {dimension_numbers = #tpu.dot_dimension_numbers<[1], [0], [0], [1], [0, 0, 1, 1], [], []>} : vector<8x48xbf16>, vector<48x1024xbf16>, vector<8x1024xf32> -> vector<8x1024xf32>
    %203 = arith.addf %201, %202 : vector<8x1024xf32>
    %cst_93 = arith.constant dense<0.000000e+00> : vector<8x1024xf32>
    %204 = tpu.matmul %6, %200, %cst_93 {dimension_numbers = #tpu.dot_dimension_numbers<[1], [0], [0], [1], [0, 0, 1, 1], [], []>} : vector<8x48xbf16>, vector<48x1024xbf16>, vector<8x1024xf32> -> vector<8x1024xf32>
    %205 = arith.addf %203, %204 : vector<8x1024xf32>
    %206 = vector.extract_strided_slice %205 {offsets = [0, 0], sizes = [8, 512], strides = [1, 1]} : vector<8x1024xf32> to vector<8x512xf32>
    %207 = vector.extract_strided_slice %206 {offsets = [0, 0], sizes = [8, 128], strides = [1, 1]} : vector<8x512xf32> to vector<8x128xf32>
    %208 = vector.extract_strided_slice %206 {offsets = [0, 128], sizes = [8, 128], strides = [1, 1]} : vector<8x512xf32> to vector<8x128xf32>
    %209 = arith.maximumf %207, %208 : vector<8x128xf32>
    %210 = vector.extract_strided_slice %206 {offsets = [0, 256], sizes = [8, 128], strides = [1, 1]} : vector<8x512xf32> to vector<8x128xf32>
    %211 = vector.extract_strided_slice %206 {offsets = [0, 384], sizes = [8, 128], strides = [1, 1]} : vector<8x512xf32> to vector<8x128xf32>
    %212 = arith.maximumf %210, %211 : vector<8x128xf32>
    %213 = arith.maximumf %209, %212 : vector<8x128xf32>
    %c6 = arith.constant 6 : index
    %c0_94 = arith.constant 0 : index
    %c0_95 = arith.constant 0 : index
    %214 = vector.load %arg4[%c6, %c0_94, %c0_95] : memref<8x8x128xf32, #tpu.memory_space<vmem>>, vector<1x8x128xf32>
    %215 = vector.shape_cast %214 : vector<1x8x128xf32> to vector<8x128xf32>
    %216 = arith.mulf %215, %192 : vector<8x128xf32>
    %217 = arith.addf %213, %0 : vector<8x128xf32>
    %218 = arith.addf %216, %217 : vector<8x128xf32>
    %cst_96 = arith.constant 1.000000e+00 : f32
    %219 = vector.broadcast %cst_96 : f32 to vector<8x128xf32>
    %220 = arith.subf %218, %219 : vector<8x128xf32>
    %cst_97 = arith.constant 0.000000e+00 : f32
    %221 = vector.broadcast %cst_97 : f32 to vector<8x128xf32>
    %222 = arith.cmpf ogt, %220, %221 : vector<8x128xf32>
    %223 = arith.extui %222 : vector<8x128xi1> to vector<8x128xi32>
    %224 = arith.sitofp %223 : vector<8x128xi32> to vector<8x128xf32>
    %cst_98 = arith.constant 1.000000e+00 : f32
    %225 = vector.broadcast %cst_98 : f32 to vector<8x128xf32>
    %226 = arith.mulf %225, %224 : vector<8x128xf32>
    %227 = arith.subf %218, %226 : vector<8x128xf32>
    %228 = arith.truncf %224 : vector<8x128xf32> to vector<8x128xbf16>
    %c6_99 = arith.constant 6 : index
    %c0_100 = arith.constant 0 : index
    %c0_101 = arith.constant 0 : index
    %229 = vector.load %arg5[%c6_99, %c0_100, %c0_101] : memref<8x8x128xbf16, #tpu.memory_space<vmem>>, vector<1x8x128xbf16>
    %230 = vector.shape_cast %229 : vector<1x8x128xbf16> to vector<8x128xbf16>
    %231 = vector.shape_cast %228 : vector<8x128xbf16> to vector<1x8x128xbf16>
    tpu.vector_store %arg5[%c6_99, %c0_100, %c0_101], %231 {strides = array<i32>} : memref<8x8x128xbf16, #tpu.memory_space<vmem>>, vector<1x8x128xbf16>,
    %c6_102 = arith.constant 6 : index
    %c0_103 = arith.constant 0 : index
    %c0_104 = arith.constant 0 : index
    %232 = vector.load %arg6[%c6_102, %c0_103, %c0_104] : memref<8x8x128xf32, #tpu.memory_space<vmem>>, vector<1x8x128xf32>
    %233 = vector.shape_cast %232 : vector<1x8x128xf32> to vector<8x128xf32>
    %234 = vector.shape_cast %227 : vector<8x128xf32> to vector<1x8x128xf32>
    tpu.vector_store %arg6[%c6_102, %c0_103, %c0_104], %234 {strides = array<i32>} : memref<8x8x128xf32, #tpu.memory_space<vmem>>, vector<1x8x128xf32>,
    %235 = vector.extract_strided_slice %205 {offsets = [0, 512], sizes = [8, 512], strides = [1, 1]} : vector<8x1024xf32> to vector<8x512xf32>
    %236 = vector.extract_strided_slice %235 {offsets = [0, 0], sizes = [8, 128], strides = [1, 1]} : vector<8x512xf32> to vector<8x128xf32>
    %237 = vector.extract_strided_slice %235 {offsets = [0, 128], sizes = [8, 128], strides = [1, 1]} : vector<8x512xf32> to vector<8x128xf32>
    %238 = arith.maximumf %236, %237 : vector<8x128xf32>
    %239 = vector.extract_strided_slice %235 {offsets = [0, 256], sizes = [8, 128], strides = [1, 1]} : vector<8x512xf32> to vector<8x128xf32>
    %240 = vector.extract_strided_slice %235 {offsets = [0, 384], sizes = [8, 128], strides = [1, 1]} : vector<8x512xf32> to vector<8x128xf32>
    %241 = arith.maximumf %239, %240 : vector<8x128xf32>
    %242 = arith.maximumf %238, %241 : vector<8x128xf32>
    %c7 = arith.constant 7 : index
    %c0_105 = arith.constant 0 : index
    %c0_106 = arith.constant 0 : index
    %243 = vector.load %arg4[%c7, %c0_105, %c0_106] : memref<8x8x128xf32, #tpu.memory_space<vmem>>, vector<1x8x128xf32>
    %244 = vector.shape_cast %243 : vector<1x8x128xf32> to vector<8x128xf32>
    %245 = arith.mulf %244, %227 : vector<8x128xf32>
    %246 = arith.addf %242, %0 : vector<8x128xf32>
    %247 = arith.addf %245, %246 : vector<8x128xf32>
    %cst_107 = arith.constant 1.000000e+00 : f32
    %248 = vector.broadcast %cst_107 : f32 to vector<8x128xf32>
    %249 = arith.subf %247, %248 : vector<8x128xf32>
    %cst_108 = arith.constant 0.000000e+00 : f32
    %250 = vector.broadcast %cst_108 : f32 to vector<8x128xf32>
    %251 = arith.cmpf ogt, %249, %250 : vector<8x128xf32>
    %252 = arith.extui %251 : vector<8x128xi1> to vector<8x128xi32>
    %253 = arith.sitofp %252 : vector<8x128xi32> to vector<8x128xf32>
    %cst_109 = arith.constant 1.000000e+00 : f32
    %254 = vector.broadcast %cst_109 : f32 to vector<8x128xf32>
    %255 = arith.mulf %254, %253 : vector<8x128xf32>
    %256 = arith.subf %247, %255 : vector<8x128xf32>
    %257 = arith.truncf %253 : vector<8x128xf32> to vector<8x128xbf16>
    %c7_110 = arith.constant 7 : index
    %c0_111 = arith.constant 0 : index
    %c0_112 = arith.constant 0 : index
    %258 = vector.load %arg5[%c7_110, %c0_111, %c0_112] : memref<8x8x128xbf16, #tpu.memory_space<vmem>>, vector<1x8x128xbf16>
    %259 = vector.shape_cast %258 : vector<1x8x128xbf16> to vector<8x128xbf16>
    %260 = vector.shape_cast %257 : vector<8x128xbf16> to vector<1x8x128xbf16>
    tpu.vector_store %arg5[%c7_110, %c0_111, %c0_112], %260 {strides = array<i32>} : memref<8x8x128xbf16, #tpu.memory_space<vmem>>, vector<1x8x128xbf16>,
    %c7_113 = arith.constant 7 : index
    %c0_114 = arith.constant 0 : index
    %c0_115 = arith.constant 0 : index
    %261 = vector.load %arg6[%c7_113, %c0_114, %c0_115] : memref<8x8x128xf32, #tpu.memory_space<vmem>>, vector<1x8x128xf32>
    %262 = vector.shape_cast %261 : vector<1x8x128xf32> to vector<8x128xf32>
    %263 = vector.shape_cast %256 : vector<8x128xf32> to vector<1x8x128xf32>
    tpu.vector_store %arg6[%c7_113, %c0_114, %c0_115], %263 {strides = array<i32>} : memref<8x8x128xf32, #tpu.memory_space<vmem>>, vector<1x8x128xf32>,
    return
  }
  func.func @transform_0(%arg0: i32) -> (i32, i32) {
    %c0_i32 = arith.constant 0 : i32
    %c0_i32_0 = arith.constant 0 : i32
    %c0_i32_1 = arith.constant 0 : i32
    return %c0_i32, %c0_i32_0 : i32, i32
  }
  func.func @transform_1(%arg0: i32) -> (i32, i32, i32) {
    %c0_i32 = arith.constant 0 : i32
    %c0_i32_0 = arith.constant 0 : i32
    %c0_i32_1 = arith.constant 0 : i32
    %c0_i32_2 = arith.constant 0 : i32
    return %c0_i32, %c0_i32_0, %c0_i32_1 : i32, i32, i32
  }
  func.func @transform_2(%arg0: i32) -> (i32, i32) {
    %c0_i32 = arith.constant 0 : i32
    %c0_i32_0 = arith.constant 0 : i32
    %c0_i32_1 = arith.constant 0 : i32
    return %c0_i32, %c0_i32_0 : i32, i32
  }
  func.func @transform_3(%arg0: i32) -> (i32, i32, i32) {
    %c0_i32 = arith.constant 0 : i32
    %c0_i32_0 = arith.constant 0 : i32
    %c0_i32_1 = arith.constant 0 : i32
    %c0_i32_2 = arith.constant 0 : i32
    return %c0_i32, %c0_i32_0, %c0_i32_1 : i32, i32, i32
  }
  func.func @transform_4(%arg0: i32) -> (i32, i32, i32) {
    %c0_i32 = arith.constant 0 : i32
    %c0_i32_0 = arith.constant 0 : i32
    %c0_i32_1 = arith.constant 0 : i32
    %c0_i32_2 = arith.constant 0 : i32
    return %c0_i32, %c0_i32_0, %c0_i32_1 : i32, i32, i32
  }
  func.func @transform_5(%arg0: i32) -> (i32, i32, i32) {
    %c0_i32 = arith.constant 0 : i32
    %c0_i32_0 = arith.constant 0 : i32
    %c0_i32_1 = arith.constant 0 : i32
    %c0_i32_2 = arith.constant 0 : i32
    return %c0_i32, %c0_i32_0, %c0_i32_1 : i32, i32, i32
  }
}

</mosaic_0001>

<llo_original>
// kernel: tpu_custom_call.1
$region0: #{tpu_custom_call.1}
  #allocation0 [shape = 'u32[]', space=smem, size = 0x4, offset = 0x4, fixed_abs, tag = 'smem constant byte address 0x4 - core index']
  #allocation1 [shape = 'u32[144,128]{1,0:T(1,128)}', space=vmem, size = 0x12000, scoped, tag = 'internal scratch']
  %s0 = inlined_call_operand.hbm [shape: bf16[48,4096], index: 0, kind: input, shape index: {}]
  %s1 = inlined_call_operand.hbm [shape: bf16[3,8,48], index: 1, kind: input, shape index: {}]
  %s2 = inlined_call_operand.hbm [shape: f32[8,128], index: 2, kind: input, shape index: {}]
  %s3 = inlined_call_operand.hbm [shape: f32[8,8,128], index: 3, kind: input, shape index: {}]
  %s4 = inlined_call_operand.hbm [shape: bf16[8,8,128], index: 4, kind: output, shape index: {0}]
  %s5 = inlined_call_operand.hbm [shape: f32[8,8,128], index: 5, kind: output, shape index: {1}]
  %6 = xla_tuple %s4, %s5
  %s7 = sld [smem:[#allocation0]]
  $region50: #{tpu_custom_call.1} parent=0
    _
  %s9 = ssub.s32 1, %s7
  %s10 = scalar_select 0, %s9, %s7
  $region1: #{tpu_custom_call.1} parent=0
    #allocation2 [shape = 'u8[393216]{0}', space=vmem, size = 0x60000, scoped, tag = 'input window, operand 0, single buffered']
    #allocation3 [shape = 's32[1]{0}', space=sflag, size = 0x4, scoped, tag = 'scoped memory for tpu_custom_call.1']
    #allocation4 [shape = 's32[1]{0}', space=sflag, size = 0x4, scoped, tag = 'scoped memory for tpu_custom_call.1']
    #allocation5 [shape = 'u8[6144]{0}', space=vmem, size = 0x1800, scoped, tag = 'input window, operand 1, single buffered']
    #allocation6 [shape = 's32[1]{0}', space=sflag, size = 0x4, scoped, tag = 'scoped memory for tpu_custom_call.1']
    #allocation7 [shape = 'u8[4096]{0}', space=vmem, size = 0x1000, scoped, tag = 'input window, operand 2, single buffered']
    #allocation8 [shape = 'u8[32768]{0}', space=vmem, size = 0x8000, scoped, tag = 'input window, operand 3, single buffered']
    #allocation9 [shape = 's32[1]{0}', space=sflag, size = 0x4, scoped, tag = 'scoped memory for tpu_custom_call.1']
    #allocation10 [shape = 'u8[16384]{0}', space=vmem, size = 0x4000, scoped, tag = 'output window, operand 0, single buffered']
    #allocation11 [shape = 'u8[32768]{0}', space=vmem, size = 0x8000, scoped, tag = 'output window, operand 1, single buffered']
    #allocation12 [shape = 's32[1]{0}', space=sflag, size = 0x4, scoped, tag = 'scoped memory for tpu_custom_call.1']
    %11 = vsyncpa [#allocation3], 0
    %12 = vsyncpa [#allocation6], 0
    %13 = vsyncpa [#allocation9], 0
    %14 = vsyncpa [#allocation4], 0
    %15 = vsyncpa [#allocation12], 0
    // Predicated region
    $region2: #{tpu_custom_call.1} parent=1 // pred_check
      _
    $region3: #{tpu_custom_call.1} parent=1 // pred_check_branch
      %17 = sbr.rel (0) target = $region5
    $region4: #{tpu_custom_call.1} parent=1 // pred_region
      %s19 = ssub.s32 12288, 12288
      %20 = vsyncadd [#allocation3], %s19
      %s21 = sshll.u32 [#allocation2], 4
      %s22 = int_to_ptr.vmem [resolvable:$true] %s21
      %27 = dma.hbm_to_vmem [thread:$0]  %s0, 12288, %s22, [#allocation3], 2048, 2048, 128
    $region5: #{tpu_custom_call.1} parent=1 // pred_fallthru
      _
    // Predicated region
    $region6: #{tpu_custom_call.1} parent=1 // pred_check
      _
    $region7: #{tpu_custom_call.1} parent=1 // pred_check_branch
      %29 = sbr.rel (0) target = $region9
    $region8: #{tpu_custom_call.1} parent=1 // pred_region
      %s31 = ssub.s32 192, 192
      %32 = vsyncadd [#allocation6], %s31
      %s33 = sshll.u32 [#allocation5], 4
      %s34 = int_to_ptr.vmem [resolvable:$true] %s33
      %39 = dma.hbm_to_vmem [thread:$0]  %s1, 192, %s34, [#allocation6], 64, 64, 4
    $region9: #{tpu_custom_call.1} parent=1 // pred_fallthru
      _
    // Predicated region
    $region10: #{tpu_custom_call.1} parent=1 // pred_check
      _
    $region11: #{tpu_custom_call.1} parent=1 // pred_check_branch
      %41 = sbr.rel (0) target = $region13
    $region12: #{tpu_custom_call.1} parent=1 // pred_region
      %s43 = ssub.s32 128, 128
      %44 = vsyncadd [#allocation6], %s43
      %s46 = sshll.u32 [#allocation7], 4
      %s47 = int_to_ptr.vmem [resolvable:$true] %s46
      %49 = dma.hbm_to_vmem [thread:$0]  %s2, 128, %s47, [#allocation6]
    $region13: #{tpu_custom_call.1} parent=1 // pred_fallthru
      _
    // Predicated region
    $region14: #{tpu_custom_call.1} parent=1 // pred_check
      _
    $region15: #{tpu_custom_call.1} parent=1 // pred_check_branch
      %51 = sbr.rel (0) target = $region17
    $region16: #{tpu_custom_call.1} parent=1 // pred_region
      %s53 = ssub.s32 1024, 1024
      %54 = vsyncadd [#allocation9], %s53
      %s55 = sshll.u32 [#allocation8], 4
      %s56 = int_to_ptr.vmem [resolvable:$true] %s55
      %61 = dma.hbm_to_vmem [thread:$0]  %s3, 1024, %s56, [#allocation9], 128, 128, 8
    $region17: #{tpu_custom_call.1} parent=1 // pred_fallthru
      _
    // Predicated region
    $region18: #{tpu_custom_call.1} parent=1 // pred_check
      _
    $region19: #{tpu_custom_call.1} parent=1 // pred_check_branch
      %63 = sbr.rel (0) target = $region21
    $region20: #{tpu_custom_call.1} parent=1 // pred_region
      %64 = dma.done [#allocation3], 12288
    $region21: #{tpu_custom_call.1} parent=1 // pred_fallthru
      _
    // Predicated region
    $region22: #{tpu_custom_call.1} parent=1 // pred_check
      _
    $region23: #{tpu_custom_call.1} parent=1 // pred_check_branch
      %66 = sbr.rel (0) target = $region25
    $region24: #{tpu_custom_call.1} parent=1 // pred_region
      %67 = dma.done [#allocation6], 192
    $region25: #{tpu_custom_call.1} parent=1 // pred_fallthru
      _
    // Predicated region
    $region26: #{tpu_custom_call.1} parent=1 // pred_check
      _
    $region27: #{tpu_custom_call.1} parent=1 // pred_check_branch
      %69 = sbr.rel (0) target = $region29
    $region28: #{tpu_custom_call.1} parent=1 // pred_region
      %70 = dma.done [#allocation6], 128
    $region29: #{tpu_custom_call.1} parent=1 // pred_fallthru
      _
    // Predicated region
    $region30: #{tpu_custom_call.1} parent=1 // pred_check
      _
    $region31: #{tpu_custom_call.1} parent=1 // pred_check_branch
      %72 = sbr.rel (0) target = $region33
    $region32: #{tpu_custom_call.1} parent=1 // pred_region
      %73 = dma.done [#allocation9], 1024
    $region33: #{tpu_custom_call.1} parent=1 // pred_fallthru
      _
    %v75 = vld [vmem:[#allocation7] sm:$0xff]
    %v76 = vld [vmem:[#allocation5] sm:$0xf]
    %s77 = scalar_lea.vmem [#allocation5], 4
    %v78 = vld [vmem:[%s77] sm:$0xf]
    %s79 = scalar_lea.vmem [#allocation5], 8
    %v80 = vld [vmem:[%s79] sm:$0xf]
    %v81 = vld [vmem:[#allocation2] sm:$0xff]
    %v82 = vld [vmem:[#allocation2 + $0x8] sm:$0xff]
    %v83 = vld [vmem:[#allocation2 + $0x10] sm:$0xff]
    %v84 = vld [vmem:[#allocation2 + $0x18] sm:$0xff]
    %v85 = vld [vmem:[#allocation2 + $0x80] sm:$0xff]
    %v86 = vld [vmem:[#allocation2 + $0x88] sm:$0xff]
    %v87 = vld [vmem:[#allocation2 + $0x90] sm:$0xff]
    %v88 = vld [vmem:[#allocation2 + $0x98] sm:$0xff]
    %v89 = vld [vmem:[#allocation2 + $0x100] sm:$0xff]
    %v90 = vld [vmem:[#allocation2 + $0x108] sm:$0xff]
    %v91 = vld [vmem:[#allocation2 + $0x110] sm:$0xff]
    %v92 = vld [vmem:[#allocation2 + $0x118] sm:$0xff]
    %v93 = vld [vmem:[#allocation2 + $0x180] sm:$0xff]
    %v94 = vld [vmem:[#allocation2 + $0x188] sm:$0xff]
    %v95 = vld [vmem:[#allocation2 + $0x190] sm:$0xff]
    %v96 = vld [vmem:[#allocation2 + $0x198] sm:$0xff]
    %v97 = vld [vmem:[#allocation2 + $0x200] sm:$0xff]
    %v98 = vld [vmem:[#allocation2 + $0x208] sm:$0xff]
    %v99 = vld [vmem:[#allocation2 + $0x210] sm:$0xff]
    %v100 = vld [vmem:[#allocation2 + $0x218] sm:$0xff]
    %v101 = vld [vmem:[#allocation2 + $0x280] sm:$0xff]
    %v102 = vld [vmem:[#allocation2 + $0x288] sm:$0xff]
    %v103 = vld [vmem:[#allocation2 + $0x290] sm:$0xff]
    %v104 = vld [vmem:[#allocation2 + $0x298] sm:$0xff]
    %v129 = vunpack.c.l.b16 %v81
    %v130 = vunpack.c.h.b16 %v81
    %v131 = vunpack.c.l.b16 %v82
    %v132 = vunpack.c.h.b16 %v82
    %v133 = vunpack.c.l.b16 %v83
    %v134 = vunpack.c.h.b16 %v83
    %v135 = vunpack.c.l.b16 %v84
    %v136 = vunpack.c.h.b16 %v84
    %v137 = vunpack.c.l.b16 %v85
    %v138 = vunpack.c.h.b16 %v85
    %v139 = vunpack.c.l.b16 %v86
    %v140 = vunpack.c.h.b16 %v86
    %v141 = vunpack.c.l.b16 %v87
    %v142 = vunpack.c.h.b16 %v87
    %v143 = vunpack.c.l.b16 %v88
    %v144 = vunpack.c.h.b16 %v88
    %v145 = vunpack.c.l.b16 %v89
    %v146 = vunpack.c.h.b16 %v89
    %v147 = vunpack.c.l.b16 %v90
    %v148 = vunpack.c.h.b16 %v90
    %v149 = vunpack.c.l.b16 %v91
    %v150 = vunpack.c.h.b16 %v91
    %v151 = vunpack.c.l.b16 %v92
    %v152 = vunpack.c.h.b16 %v92
    %v153 = vunpack.c.l.b16 %v93
    %v154 = vunpack.c.h.b16 %v93
    %v155 = vunpack.c.l.b16 %v94
    %v156 = vunpack.c.h.b16 %v94
    %v157 = vunpack.c.l.b16 %v95
    %v158 = vunpack.c.h.b16 %v95
    %v159 = vunpack.c.l.b16 %v96
    %v160 = vunpack.c.h.b16 %v96
    %v161 = vunpack.c.l.b16 %v97
    %v162 = vunpack.c.h.b16 %v97
    %v163 = vunpack.c.l.b16 %v98
    %v164 = vunpack.c.h.b16 %v98
    %v165 = vunpack.c.l.b16 %v99
    %v166 = vunpack.c.h.b16 %v99
    %v167 = vunpack.c.l.b16 %v100
    %v168 = vunpack.c.h.b16 %v100
    %v169 = vunpack.c.l.b16 %v101
    %v170 = vunpack.c.h.b16 %v101
    %v171 = vunpack.c.l.b16 %v102
    %v172 = vunpack.c.h.b16 %v102
    %v173 = vunpack.c.l.b16 %v103
    %v174 = vunpack.c.h.b16 %v103
    %v175 = vunpack.c.l.b16 %v104
    %v176 = vunpack.c.h.b16 %v104
    %v177 = vpack.c.b16 %v137, %v129
    %v178 = vpack.c.b16 %v138, %v130
    %v179 = vpack.c.b16 %v139, %v131
    %v180 = vpack.c.b16 %v140, %v132
    %v181 = vpack.c.b16 %v141, %v133
    %v182 = vpack.c.b16 %v142, %v134
    %v183 = vpack.c.b16 %v143, %v135
    %v184 = vpack.c.b16 %v144, %v136
    %v185 = vpack.c.b16 %v153, %v145
    %v186 = vpack.c.b16 %v154, %v146
    %v187 = vpack.c.b16 %v155, %v147
    %v188 = vpack.c.b16 %v156, %v148
    %v189 = vpack.c.b16 %v157, %v149
    %v190 = vpack.c.b16 %v158, %v150
    %v191 = vpack.c.b16 %v159, %v151
    %v192 = vpack.c.b16 %v160, %v152
    %v193 = vpack.c.b16 %v169, %v161
    %v194 = vpack.c.b16 %v170, %v162
    %v195 = vpack.c.b16 %v171, %v163
    %v196 = vpack.c.b16 %v172, %v164
    %v197 = vpack.c.b16 %v173, %v165
    %v198 = vpack.c.b16 %v174, %v166
    %v199 = vpack.c.b16 %v175, %v167
    %v200 = vpack.c.b16 %v176, %v168
    %vm225 = vcmask 392192
    %v227 = vsel %vm225, %v78, 0
    %229 = vmatprep.subr.bf16.mxu0 %v178
    %230 = vmatpush1.bf16.msra.mxu0 %v177
    %231 = vmatprep.subr.bf16.mxu0 %v186
    %232 = vmatpush1.bf16.msra.mxu0 %v185
    %233 = vmatprep.subr.bf16.mxu0 %v194
    %234 = vmatpush1.bf16.msra.mxu0 %v193
    %235 = vmatprep.subr.bf16.mxu0 0
    %236 = vmatpush1.bf16.msra.mxu0 0
    %237 = vmatprep.subr.bf16.mxu0 0
    %238 = vmatpush1.bf16.msra.mxu0 0
    %239 = vmatprep.subr.bf16.mxu0 0
    %240 = vmatpush1.bf16.msra.mxu0 0
    %241 = vmatprep.subr.bf16.mxu0 0
    %242 = vmatpush1.bf16.msra.mxu0 0
    %243 = vmatprep.subr.bf16.mxu0 0
    %244 = vmatpush1.bf16.msra.mxu0 0
    %245 = vmatprep.subr.bf16.mxu0 0
    %246 = vmatpush1.bf16.msra.mxu0 0
    %247 = vmatprep.subr.bf16.mxu0 0
    %248 = vmatpush1.bf16.msra.mxu0 0
    %249 = vmatprep.subr.bf16.mxu0 0
    %250 = vmatpush1.bf16.msra.mxu0 0
    %251 = vmatprep.subr.bf16.mxu0 0
    %252 = vmatpush1.bf16.msra.mxu0 0
    %253 = vmatprep.subr.bf16.mxu0 0
    %254 = vmatpush1.bf16.msra.mxu0 0
    %255 = vmatprep.subr.bf16.mxu0 0
    %256 = vmatpush1.bf16.msra.mxu0 0
    %257 = vmatprep.subr.bf16.mxu0 0
    %258 = vmatpush1.bf16.msra.mxu0 0
    %259 = vmatprep.subr.bf16.mxu0 0
    %260 = vmatpush1.bf16.msra.mxu0 0
    %261 = vmatprep.mubr.bf16.mxu0 0
    %262 = vmatmul.mubr.bf16.gmra.mrb[0].mxu0 %v227
    %v263 = vpop.f32.mrb[0].mxu0
    %v264 = vadd.f32 0.0, %v263
    %v265 = vpop.f32.mrb[0].mxu0
    %v266 = vadd.f32 0.0, %v265
    %v267 = vpop.f32.mrb[0].mxu0
    %v268 = vpop.f32.mrb[0].mxu0
    %269 = vdwg.mxu0
    %270 = vmatprep.subr.bf16.mxu0 %v180
    %271 = vmatpush1.bf16.msra.mxu0 %v179
    %272 = vmatprep.subr.bf16.mxu0 %v188
    %273 = vmatpush1.bf16.msra.mxu0 %v187
    %274 = vmatprep.subr.bf16.mxu0 %v196
    %275 = vmatpush1.bf16.msra.mxu0 %v195
    %276 = vmatprep.subr.bf16.mxu0 0
    %277 = vmatpush1.bf16.msra.mxu0 0
    %278 = vmatprep.subr.bf16.mxu0 0
    %279 = vmatpush1.bf16.msra.mxu0 0
    %280 = vmatprep.subr.bf16.mxu0 0
    %281 = vmatpush1.bf16.msra.mxu0 0
    %282 = vmatprep.subr.bf16.mxu0 0
    %283 = vmatpush1.bf16.msra.mxu0 0
    %284 = vmatprep.subr.bf16.mxu0 0
    %285 = vmatpush1.bf16.msra.mxu0 0
    %286 = vmatprep.subr.bf16.mxu0 0
    %287 = vmatpush1.bf16.msra.mxu0 0
    %288 = vmatprep.subr.bf16.mxu0 0
    %289 = vmatpush1.bf16.msra.mxu0 0
    %290 = vmatprep.subr.bf16.mxu0 0
    %291 = vmatpush1.bf16.msra.mxu0 0
    %292 = vmatprep.subr.bf16.mxu0 0
    %293 = vmatpush1.bf16.msra.mxu0 0
    %294 = vmatprep.subr.bf16.mxu0 0
    %295 = vmatpush1.bf16.msra.mxu0 0
    %296 = vmatprep.subr.bf16.mxu0 0
    %297 = vmatpush1.bf16.msra.mxu0 0
    %298 = vmatprep.subr.bf16.mxu0 0
    %299 = vmatpush1.bf16.msra.mxu0 0
    %300 = vmatprep.subr.bf16.mxu0 0
    %301 = vmatpush1.bf16.msra.mxu0 0
    %302 = vmatprep.mubr.bf16.mxu0 0
    %303 = vmatmul.mubr.bf16.gmra.mrb[0].mxu0 %v227
    %v304 = vpop.f32.mrb[0].mxu0
    %v305 = vadd.f32 0.0, %v304
    %v306 = vpop.f32.mrb[0].mxu0
    %v307 = vadd.f32 0.0, %v306
    %v308 = vpop.f32.mrb[0].mxu0
    %v309 = vpop.f32.mrb[0].mxu0
    %310 = vdwg.mxu0
    %311 = vmatprep.subr.bf16.mxu0 %v182
    %312 = vmatpush1.bf16.msra.mxu0 %v181
    %313 = vmatprep.subr.bf16.mxu0 %v190
    %314 = vmatpush1.bf16.msra.mxu0 %v189
    %315 = vmatprep.subr.bf16.mxu0 %v198
    %316 = vmatpush1.bf16.msra.mxu0 %v197
    %317 = vmatprep.subr.bf16.mxu0 0
    %318 = vmatpush1.bf16.msra.mxu0 0
    %319 = vmatprep.subr.bf16.mxu0 0
    %320 = vmatpush1.bf16.msra.mxu0 0
    %321 = vmatprep.subr.bf16.mxu0 0
    %322 = vmatpush1.bf16.msra.mxu0 0
    %323 = vmatprep.subr.bf16.mxu0 0
    %324 = vmatpush1.bf16.msra.mxu0 0
    %325 = vmatprep.subr.bf16.mxu0 0
    %326 = vmatpush1.bf16.msra.mxu0 0
    %327 = vmatprep.subr.bf16.mxu0 0
    %328 = vmatpush1.bf16.msra.mxu0 0
    %329 = vmatprep.subr.bf16.mxu0 0
    %330 = vmatpush1.bf16.msra.mxu0 0
    %331 = vmatprep.subr.bf16.mxu0 0
    %332 = vmatpush1.bf16.msra.mxu0 0
    %333 = vmatprep.subr.bf16.mxu0 0
    %334 = vmatpush1.bf16.msra.mxu0 0
    %335 = vmatprep.subr.bf16.mxu0 0
    %336 = vmatpush1.bf16.msra.mxu0 0
    %337 = vmatprep.subr.bf16.mxu0 0
    %338 = vmatpush1.bf16.msra.mxu0 0
    %339 = vmatprep.subr.bf16.mxu0 0
    %340 = vmatpush1.bf16.msra.mxu0 0
    %341 = vmatprep.subr.bf16.mxu0 0
    %342 = vmatpush1.bf16.msra.mxu0 0
    %343 = vmatprep.mubr.bf16.mxu0 0
    %344 = vmatmul.mubr.bf16.gmra.mrb[0].mxu0 %v227
    %v345 = vpop.f32.mrb[0].mxu0
    %v346 = vadd.f32 0.0, %v345
    %v347 = vpop.f32.mrb[0].mxu0
    %v348 = vadd.f32 0.0, %v347
    %v349 = vpop.f32.mrb[0].mxu0
    %v350 = vpop.f32.mrb[0].mxu0
    %351 = vdwg.mxu0
    %352 = vmatprep.subr.bf16.mxu0 %v184
    %353 = vmatpush1.bf16.msra.mxu0 %v183
    %354 = vmatprep.subr.bf16.mxu0 %v192
    %355 = vmatpush1.bf16.msra.mxu0 %v191
    %356 = vmatprep.subr.bf16.mxu0 %v200
    %357 = vmatpush1.bf16.msra.mxu0 %v199
    %358 = vmatprep.subr.bf16.mxu0 0
    %359 = vmatpush1.bf16.msra.mxu0 0
    %360 = vmatprep.subr.bf16.mxu0 0
    %361 = vmatpush1.bf16.msra.mxu0 0
    %362 = vmatprep.subr.bf16.mxu0 0
    %363 = vmatpush1.bf16.msra.mxu0 0
    %364 = vmatprep.subr.bf16.mxu0 0
    %365 = vmatpush1.bf16.msra.mxu0 0
    %366 = vmatprep.subr.bf16.mxu0 0
    %367 = vmatpush1.bf16.msra.mxu0 0
    %368 = vmatprep.subr.bf16.mxu0 0
    %369 = vmatpush1.bf16.msra.mxu0 0
    %370 = vmatprep.subr.bf16.mxu0 0
    %371 = vmatpush1.bf16.msra.mxu0 0
    %372 = vmatprep.subr.bf16.mxu0 0
    %373 = vmatpush1.bf16.msra.mxu0 0
    %374 = vmatprep.subr.bf16.mxu0 0
    %375 = vmatpush1.bf16.msra.mxu0 0
    %376 = vmatprep.subr.bf16.mxu0 0
    %377 = vmatpush1.bf16.msra.mxu0 0
    %378 = vmatprep.subr.bf16.mxu0 0
    %379 = vmatpush1.bf16.msra.mxu0 0
    %380 = vmatprep.subr.bf16.mxu0 0
    %381 = vmatpush1.bf16.msra.mxu0 0
    %382 = vmatprep.subr.bf16.mxu0 0
    %383 = vmatpush1.bf16.msra.mxu0 0
    %384 = vmatprep.mubr.bf16.mxu0 0
    %385 = vmatmul.mubr.bf16.gmra.mrb[0].mxu0 %v227
    %v386 = vpop.f32.mrb[0].mxu0
    %v387 = vadd.f32 0.0, %v386
    %v388 = vpop.f32.mrb[0].mxu0
    %v389 = vadd.f32 0.0, %v388
    %v390 = vpop.f32.mrb[0].mxu0
    %v391 = vpop.f32.mrb[0].mxu0
    %392 = vdwg.mxu0
    %v394 = vsel %vm225, %v76, 0
    %396 = vmatprep.subr.bf16.mxu0 %v178
    %397 = vmatpush1.bf16.msra.mxu0 %v177
    %398 = vmatprep.subr.bf16.mxu0 %v186
    %399 = vmatpush1.bf16.msra.mxu0 %v185
    %400 = vmatprep.subr.bf16.mxu0 %v194
    %401 = vmatpush1.bf16.msra.mxu0 %v193
    %402 = vmatprep.subr.bf16.mxu0 0
    %403 = vmatpush1.bf16.msra.mxu0 0
    %404 = vmatprep.subr.bf16.mxu0 0
    %405 = vmatpush1.bf16.msra.mxu0 0
    %406 = vmatprep.subr.bf16.mxu0 0
    %407 = vmatpush1.bf16.msra.mxu0 0
    %408 = vmatprep.subr.bf16.mxu0 0
    %409 = vmatpush1.bf16.msra.mxu0 0
    %410 = vmatprep.subr.bf16.mxu0 0
    %411 = vmatpush1.bf16.msra.mxu0 0
    %412 = vmatprep.subr.bf16.mxu0 0
    %413 = vmatpush1.bf16.msra.mxu0 0
    %414 = vmatprep.subr.bf16.mxu0 0
    %415 = vmatpush1.bf16.msra.mxu0 0
    %416 = vmatprep.subr.bf16.mxu0 0
    %417 = vmatpush1.bf16.msra.mxu0 0
    %418 = vmatprep.subr.bf16.mxu0 0
    %419 = vmatpush1.bf16.msra.mxu0 0
    %420 = vmatprep.subr.bf16.mxu0 0
    %421 = vmatpush1.bf16.msra.mxu0 0
    %422 = vmatprep.subr.bf16.mxu0 0
    %423 = vmatpush1.bf16.msra.mxu0 0
    %424 = vmatprep.subr.bf16.mxu0 0
    %425 = vmatpush1.bf16.msra.mxu0 0
    %426 = vmatprep.subr.bf16.mxu0 0
    %427 = vmatpush1.bf16.msra.mxu0 0
    %428 = vmatprep.mubr.bf16.mxu0 0
    %429 = vmatmul.mubr.bf16.gmra.mrb[0].mxu0 %v394
    %v430 = vpop.f32.mrb[0].mxu0
    %v431 = vadd.f32 %v264, %v430
    %v432 = vpop.f32.mrb[0].mxu0
    %v433 = vadd.f32 %v266, %v432
    %v434 = vpop.f32.mrb[0].mxu0
    %v435 = vpop.f32.mrb[0].mxu0
    %436 = vdwg.mxu0
    %437 = vmatprep.subr.bf16.mxu0 %v180
    %438 = vmatpush1.bf16.msra.mxu0 %v179
    %439 = vmatprep.subr.bf16.mxu0 %v188
    %440 = vmatpush1.bf16.msra.mxu0 %v187
    %441 = vmatprep.subr.bf16.mxu0 %v196
    %442 = vmatpush1.bf16.msra.mxu0 %v195
    %443 = vmatprep.subr.bf16.mxu0 0
    %444 = vmatpush1.bf16.msra.mxu0 0
    %445 = vmatprep.subr.bf16.mxu0 0
    %446 = vmatpush1.bf16.msra.mxu0 0
    %447 = vmatprep.subr.bf16.mxu0 0
    %448 = vmatpush1.bf16.msra.mxu0 0
    %449 = vmatprep.subr.bf16.mxu0 0
    %450 = vmatpush1.bf16.msra.mxu0 0
    %451 = vmatprep.subr.bf16.mxu0 0
    %452 = vmatpush1.bf16.msra.mxu0 0
    %453 = vmatprep.subr.bf16.mxu0 0
    %454 = vmatpush1.bf16.msra.mxu0 0
    %455 = vmatprep.subr.bf16.mxu0 0
    %456 = vmatpush1.bf16.msra.mxu0 0
    %457 = vmatprep.subr.bf16.mxu0 0
    %458 = vmatpush1.bf16.msra.mxu0 0
    %459 = vmatprep.subr.bf16.mxu0 0
    %460 = vmatpush1.bf16.msra.mxu0 0
    %461 = vmatprep.subr.bf16.mxu0 0
    %462 = vmatpush1.bf16.msra.mxu0 0
    %463 = vmatprep.subr.bf16.mxu0 0
    %464 = vmatpush1.bf16.msra.mxu0 0
    %465 = vmatprep.subr.bf16.mxu0 0
    %466 = vmatpush1.bf16.msra.mxu0 0
    %467 = vmatprep.subr.bf16.mxu0 0
    %468 = vmatpush1.bf16.msra.mxu0 0
    %469 = vmatprep.mubr.bf16.mxu0 0
    %470 = vmatmul.mubr.bf16.gmra.mrb[0].mxu0 %v394
    %v471 = vpop.f32.mrb[0].mxu0
    %v472 = vadd.f32 %v305, %v471
    %v473 = vpop.f32.mrb[0].mxu0
    %v474 = vadd.f32 %v307, %v473
    %v475 = vpop.f32.mrb[0].mxu0
    %v476 = vpop.f32.mrb[0].mxu0
    %477 = vdwg.mxu0
    %478 = vmatprep.subr.bf16.mxu0 %v182
    %479 = vmatpush1.bf16.msra.mxu0 %v181
    %480 = vmatprep.subr.bf16.mxu0 %v190
    %481 = vmatpush1.bf16.msra.mxu0 %v189
    %482 = vmatprep.subr.bf16.mxu0 %v198
    %483 = vmatpush1.bf16.msra.mxu0 %v197
    %484 = vmatprep.subr.bf16.mxu0 0
    %485 = vmatpush1.bf16.msra.mxu0 0
    %486 = vmatprep.subr.bf16.mxu0 0
    %487 = vmatpush1.bf16.msra.mxu0 0
    %488 = vmatprep.subr.bf16.mxu0 0
    %489 = vmatpush1.bf16.msra.mxu0 0
    %490 = vmatprep.subr.bf16.mxu0 0
    %491 = vmatpush1.bf16.msra.mxu0 0
    %492 = vmatprep.subr.bf16.mxu0 0
    %493 = vmatpush1.bf16.msra.mxu0 0
    %494 = vmatprep.subr.bf16.mxu0 0
    %495 = vmatpush1.bf16.msra.mxu0 0
    %496 = vmatprep.subr.bf16.mxu0 0
    %497 = vmatpush1.bf16.msra.mxu0 0
    %498 = vmatprep.subr.bf16.mxu0 0
    %499 = vmatpush1.bf16.msra.mxu0 0
    %500 = vmatprep.subr.bf16.mxu0 0
    %501 = vmatpush1.bf16.msra.mxu0 0
    %502 = vmatprep.subr.bf16.mxu0 0
    %503 = vmatpush1.bf16.msra.mxu0 0
    %504 = vmatprep.subr.bf16.mxu0 0
    %505 = vmatpush1.bf16.msra.mxu0 0
    %506 = vmatprep.subr.bf16.mxu0 0
    %507 = vmatpush1.bf16.msra.mxu0 0
    %508 = vmatprep.subr.bf16.mxu0 0
    %509 = vmatpush1.bf16.msra.mxu0 0
    %510 = vmatprep.mubr.bf16.mxu0 0
    %511 = vmatmul.mubr.bf16.gmra.mrb[0].mxu0 %v394
    %v512 = vpop.f32.mrb[0].mxu0
    %v513 = vadd.f32 %v346, %v512
    %v514 = vpop.f32.mrb[0].mxu0
    %v515 = vadd.f32 %v348, %v514
    %v516 = vpop.f32.mrb[0].mxu0
    %v517 = vpop.f32.mrb[0].mxu0
    %518 = vdwg.mxu0
    %519 = vmatprep.subr.bf16.mxu0 %v184
    %520 = vmatpush1.bf16.msra.mxu0 %v183
    %521 = vmatprep.subr.bf16.mxu0 %v192
    %522 = vmatpush1.bf16.msra.mxu0 %v191
    %523 = vmatprep.subr.bf16.mxu0 %v200
    %524 = vmatpush1.bf16.msra.mxu0 %v199
    %525 = vmatprep.subr.bf16.mxu0 0
    %526 = vmatpush1.bf16.msra.mxu0 0
    %527 = vmatprep.subr.bf16.mxu0 0
    %528 = vmatpush1.bf16.msra.mxu0 0
    %529 = vmatprep.subr.bf16.mxu0 0
    %530 = vmatpush1.bf16.msra.mxu0 0
    %531 = vmatprep.subr.bf16.mxu0 0
    %532 = vmatpush1.bf16.msra.mxu0 0
    %533 = vmatprep.subr.bf16.mxu0 0
    %534 = vmatpush1.bf16.msra.mxu0 0
    %535 = vmatprep.subr.bf16.mxu0 0
    %536 = vmatpush1.bf16.msra.mxu0 0
    %537 = vmatprep.subr.bf16.mxu0 0
    %538 = vmatpush1.bf16.msra.mxu0 0
    %539 = vmatprep.subr.bf16.mxu0 0
    %540 = vmatpush1.bf16.msra.mxu0 0
    %541 = vmatprep.subr.bf16.mxu0 0
    %542 = vmatpush1.bf16.msra.mxu0 0
    %543 = vmatprep.subr.bf16.mxu0 0
    %544 = vmatpush1.bf16.msra.mxu0 0
    %545 = vmatprep.subr.bf16.mxu0 0
    %546 = vmatpush1.bf16.msra.mxu0 0
    %547 = vmatprep.subr.bf16.mxu0 0
    %548 = vmatpush1.bf16.msra.mxu0 0
    %549 = vmatprep.subr.bf16.mxu0 0
    %550 = vmatpush1.bf16.msra.mxu0 0
    %551 = vmatprep.mubr.bf16.mxu0 0
    %552 = vmatmul.mubr.bf16.gmra.mrb[0].mxu0 %v394
    %v553 = vpop.f32.mrb[0].mxu0
    %v554 = vadd.f32 %v387, %v553
    %v555 = vpop.f32.mrb[0].mxu0
    %v556 = vadd.f32 %v389, %v555
    %v557 = vpop.f32.mrb[0].mxu0
    %v558 = vpop.f32.mrb[0].mxu0
    %559 = vdwg.mxu0
    %v561 = vsel %vm225, %v80, 0
    %563 = vmatprep.subr.bf16.mxu0 %v178
    %564 = vmatpush1.bf16.msra.mxu0 %v177
    %565 = vmatprep.subr.bf16.mxu0 %v186
    %566 = vmatpush1.bf16.msra.mxu0 %v185
    %567 = vmatprep.subr.bf16.mxu0 %v194
    %568 = vmatpush1.bf16.msra.mxu0 %v193
    %569 = vmatprep.subr.bf16.mxu0 0
    %570 = vmatpush1.bf16.msra.mxu0 0
    %571 = vmatprep.subr.bf16.mxu0 0
    %572 = vmatpush1.bf16.msra.mxu0 0
    %573 = vmatprep.subr.bf16.mxu0 0
    %574 = vmatpush1.bf16.msra.mxu0 0
    %575 = vmatprep.subr.bf16.mxu0 0
    %576 = vmatpush1.bf16.msra.mxu0 0
    %577 = vmatprep.subr.bf16.mxu0 0
    %578 = vmatpush1.bf16.msra.mxu0 0
    %579 = vmatprep.subr.bf16.mxu0 0
    %580 = vmatpush1.bf16.msra.mxu0 0
    %581 = vmatprep.subr.bf16.mxu0 0
    %582 = vmatpush1.bf16.msra.mxu0 0
    %583 = vmatprep.subr.bf16.mxu0 0
    %584 = vmatpush1.bf16.msra.mxu0 0
    %585 = vmatprep.subr.bf16.mxu0 0
    %586 = vmatpush1.bf16.msra.mxu0 0
    %587 = vmatprep.subr.bf16.mxu0 0
    %588 = vmatpush1.bf16.msra.mxu0 0
    %589 = vmatprep.subr.bf16.mxu0 0
    %590 = vmatpush1.bf16.msra.mxu0 0
    %591 = vmatprep.subr.bf16.mxu0 0
    %592 = vmatpush1.bf16.msra.mxu0 0
    %593 = vmatprep.subr.bf16.mxu0 0
    %594 = vmatpush1.bf16.msra.mxu0 0
    %595 = vmatprep.mubr.bf16.mxu0 0
    %596 = vmatmul.mubr.bf16.gmra.mrb[0].mxu0 %v561
    %v597 = vpop.f32.mrb[0].mxu0
    %v598 = vadd.f32 0.0, %v597
    %v599 = vpop.f32.mrb[0].mxu0
    %v600 = vadd.f32 0.0, %v599
    %v601 = vpop.f32.mrb[0].mxu0
    %v602 = vpop.f32.mrb[0].mxu0
    %603 = vdwg.mxu0
    %604 = vmatprep.subr.bf16.mxu0 %v180
    %605 = vmatpush1.bf16.msra.mxu0 %v179
    %606 = vmatprep.subr.bf16.mxu0 %v188
    %607 = vmatpush1.bf16.msra.mxu0 %v187
    %608 = vmatprep.subr.bf16.mxu0 %v196
    %609 = vmatpush1.bf16.msra.mxu0 %v195
    %610 = vmatprep.subr.bf16.mxu0 0
    %611 = vmatpush1.bf16.msra.mxu0 0
    %612 = vmatprep.subr.bf16.mxu0 0
    %613 = vmatpush1.bf16.msra.mxu0 0
    %614 = vmatprep.subr.bf16.mxu0 0
    %615 = vmatpush1.bf16.msra.mxu0 0
    %616 = vmatprep.subr.bf16.mxu0 0
    %617 = vmatpush1.bf16.msra.mxu0 0
    %618 = vmatprep.subr.bf16.mxu0 0
    %619 = vmatpush1.bf16.msra.mxu0 0
    %620 = vmatprep.subr.bf16.mxu0 0
    %621 = vmatpush1.bf16.msra.mxu0 0
    %622 = vmatprep.subr.bf16.mxu0 0
    %623 = vmatpush1.bf16.msra.mxu0 0
    %624 = vmatprep.subr.bf16.mxu0 0
    %625 = vmatpush1.bf16.msra.mxu0 0
    %626 = vmatprep.subr.bf16.mxu0 0
    %627 = vmatpush1.bf16.msra.mxu0 0
    %628 = vmatprep.subr.bf16.mxu0 0
    %629 = vmatpush1.bf16.msra.mxu0 0
    %630 = vmatprep.subr.bf16.mxu0 0
    %631 = vmatpush1.bf16.msra.mxu0 0
    %632 = vmatprep.subr.bf16.mxu0 0
    %633 = vmatpush1.bf16.msra.mxu0 0
    %634 = vmatprep.subr.bf16.mxu0 0
    %635 = vmatpush1.bf16.msra.mxu0 0
    %636 = vmatprep.mubr.bf16.mxu0 0
    %637 = vmatmul.mubr.bf16.gmra.mrb[0].mxu0 %v561
    %v638 = vpop.f32.mrb[0].mxu0
    %v639 = vadd.f32 0.0, %v638
    %v640 = vpop.f32.mrb[0].mxu0
    %v641 = vadd.f32 0.0, %v640
    %v642 = vpop.f32.mrb[0].mxu0
    %v643 = vpop.f32.mrb[0].mxu0
    %644 = vdwg.mxu0
    %645 = vmatprep.subr.bf16.mxu0 %v182
    %646 = vmatpush1.bf16.msra.mxu0 %v181
    %647 = vmatprep.subr.bf16.mxu0 %v190
    %648 = vmatpush1.bf16.msra.mxu0 %v189
    %649 = vmatprep.subr.bf16.mxu0 %v198
    %650 = vmatpush1.bf16.msra.mxu0 %v197
    %651 = vmatprep.subr.bf16.mxu0 0
    %652 = vmatpush1.bf16.msra.mxu0 0
    %653 = vmatprep.subr.bf16.mxu0 0
    %654 = vmatpush1.bf16.msra.mxu0 0
    %655 = vmatprep.subr.bf16.mxu0 0
    %656 = vmatpush1.bf16.msra.mxu0 0
    %657 = vmatprep.subr.bf16.mxu0 0
    %658 = vmatpush1.bf16.msra.mxu0 0
    %659 = vmatprep.subr.bf16.mxu0 0
    %660 = vmatpush1.bf16.msra.mxu0 0
    %661 = vmatprep.subr.bf16.mxu0 0
    %662 = vmatpush1.bf16.msra.mxu0 0
    %663 = vmatprep.subr.bf16.mxu0 0
    %664 = vmatpush1.bf16.msra.mxu0 0
    %665 = vmatprep.subr.bf16.mxu0 0
    %666 = vmatpush1.bf16.msra.mxu0 0
    %667 = vmatprep.subr.bf16.mxu0 0
    %668 = vmatpush1.bf16.msra.mxu0 0
    %669 = vmatprep.subr.bf16.mxu0 0
    %670 = vmatpush1.bf16.msra.mxu0 0
    %671 = vmatprep.subr.bf16.mxu0 0
    %672 = vmatpush1.bf16.msra.mxu0 0
    %673 = vmatprep.subr.bf16.mxu0 0
    %674 = vmatpush1.bf16.msra.mxu0 0
    %675 = vmatprep.subr.bf16.mxu0 0
    %676 = vmatpush1.bf16.msra.mxu0 0
    %677 = vmatprep.mubr.bf16.mxu0 0
    %678 = vmatmul.mubr.bf16.gmra.mrb[0].mxu0 %v561
    %v679 = vpop.f32.mrb[0].mxu0
    %v680 = vadd.f32 0.0, %v679
    %v681 = vpop.f32.mrb[0].mxu0
    %v682 = vadd.f32 0.0, %v681
    %v683 = vpop.f32.mrb[0].mxu0
    %v684 = vpop.f32.mrb[0].mxu0
    %685 = vdwg.mxu0
    %686 = vmatprep.subr.bf16.mxu0 %v184
    %687 = vmatpush1.bf16.msra.mxu0 %v183
    %688 = vmatprep.subr.bf16.mxu0 %v192
    %689 = vmatpush1.bf16.msra.mxu0 %v191
    %690 = vmatprep.subr.bf16.mxu0 %v200
    %691 = vmatpush1.bf16.msra.mxu0 %v199
    %692 = vmatprep.subr.bf16.mxu0 0
    %693 = vmatpush1.bf16.msra.mxu0 0
    %694 = vmatprep.subr.bf16.mxu0 0
    %695 = vmatpush1.bf16.msra.mxu0 0
    %696 = vmatprep.subr.bf16.mxu0 0
    %697 = vmatpush1.bf16.msra.mxu0 0
    %698 = vmatprep.subr.bf16.mxu0 0
    %699 = vmatpush1.bf16.msra.mxu0 0
    %700 = vmatprep.subr.bf16.mxu0 0
    %701 = vmatpush1.bf16.msra.mxu0 0
    %702 = vmatprep.subr.bf16.mxu0 0
    %703 = vmatpush1.bf16.msra.mxu0 0
    %704 = vmatprep.subr.bf16.mxu0 0
    %705 = vmatpush1.bf16.msra.mxu0 0
    %706 = vmatprep.subr.bf16.mxu0 0
    %707 = vmatpush1.bf16.msra.mxu0 0
    %708 = vmatprep.subr.bf16.mxu0 0
    %709 = vmatpush1.bf16.msra.mxu0 0
    %710 = vmatprep.subr.bf16.mxu0 0
    %711 = vmatpush1.bf16.msra.mxu0 0
    %712 = vmatprep.subr.bf16.mxu0 0
    %713 = vmatpush1.bf16.msra.mxu0 0
    %714 = vmatprep.subr.bf16.mxu0 0
    %715 = vmatpush1.bf16.msra.mxu0 0
    %716 = vmatprep.subr.bf16.mxu0 0
    %717 = vmatpush1.bf16.msra.mxu0 0
    %718 = vmatprep.mubr.bf16.mxu0 0
    %719 = vmatmul.mubr.bf16.gmra.mrb[0].mxu0 %v561
    %v720 = vpop.f32.mrb[0].mxu0
    %v721 = vadd.f32 0.0, %v720
    %v722 = vpop.f32.mrb[0].mxu0
    %v723 = vadd.f32 0.0, %v722
    %v724 = vpop.f32.mrb[0].mxu0
    %v725 = vpop.f32.mrb[0].mxu0
    %726 = vdwg.mxu0
    %v727 = vadd.f32 %v431, %v598
    %v728 = vadd.f32 %v433, %v600
    %v729 = vadd.f32 %v472, %v639
    %v730 = vadd.f32 %v474, %v641
    %v731 = vadd.f32 %v513, %v680
    %v732 = vadd.f32 %v515, %v682
    %v733 = vadd.f32 %v554, %v721
    %v734 = vadd.f32 %v556, %v723
    %v735 = vmax.f32 %v727, %v728
    %v736 = vmax.f32 %v729, %v730
    %v737 = vmax.f32 %v735, %v736
    %v738 = vld [vmem:[#allocation8] sm:$0xff]
    %v739 = vmul.f32 %v738, 0.0
    %v740 = vadd.f32 %v737, %v75
    %v741 = vadd.f32 %v739, %v740
    %v742 = vsub.f32 %v741, 1.0
    %vm743 = vcmp.gt.f32.partialorder %v742, 0.0
    %v744 = vsel %vm743, 1, 0
    %v745 = vcvt.s32.f32 %v744
    %v746 = vsub.f32 %v741, %v745
    %v747 = vpack.c.bf16 %v745, %v745
    %748 = vst [vmem:[#allocation10] sm:$0xf] %v747
    %749 = vst [vmem:[#allocation11] sm:$0xff] %v746
    %v750 = vmax.f32 %v731, %v732
    %v751 = vmax.f32 %v733, %v734
    %v752 = vmax.f32 %v750, %v751
    %s753 = scalar_lea.vmem [#allocation8], 8
    %v754 = vld [vmem:[%s753] sm:$0xff]
    %v755 = vmul.f32 %v754, %v746
    %v756 = vadd.f32 %v752, %v75
    %v757 = vadd.f32 %v755, %v756
    %v758 = vsub.f32 %v757, 1.0
    %vm759 = vcmp.gt.f32.partialorder %v758, 0.0
    %v760 = vsel %vm759, 1, 0
    %v761 = vcvt.s32.f32 %v760
    %v762 = vsub.f32 %v757, %v761
    %v763 = vpack.c.bf16 %v761, %v761
    %s764 = scalar_lea.vmem [#allocation10], 4
    %765 = vst [vmem:[%s764] sm:$0xf] %v763
    %s766 = scalar_lea.vmem [#allocation11], 8
    %767 = vst [vmem:[%s766] sm:$0xff] %v762
    %v768 = vld [vmem:[#allocation2 + $0x20] sm:$0xff]
    %v769 = vld [vmem:[#allocation2 + $0x28] sm:$0xff]
    %v770 = vld [vmem:[#allocation2 + $0x30] sm:$0xff]
    %v771 = vld [vmem:[#allocation2 + $0x38] sm:$0xff]
    %v772 = vld [vmem:[#allocation2 + $0xa0] sm:$0xff]
    %v773 = vld [vmem:[#allocation2 + $0xa8] sm:$0xff]
    %v774 = vld [vmem:[#allocation2 + $0xb0] sm:$0xff]
    %v775 = vld [vmem:[#allocation2 + $0xb8] sm:$0xff]
    %v776 = vld [vmem:[#allocation2 + $0x120] sm:$0xff]
    %v777 = vld [vmem:[#allocation2 + $0x128] sm:$0xff]
    %v778 = vld [vmem:[#allocation2 + $0x130] sm:$0xff]
    %v779 = vld [vmem:[#allocation2 + $0x138] sm:$0xff]
    %v780 = vld [vmem:[#allocation2 + $0x1a0] sm:$0xff]
    %v781 = vld [vmem:[#allocation2 + $0x1a8] sm:$0xff]
    %v782 = vld [vmem:[#allocation2 + $0x1b0] sm:$0xff]
    %v783 = vld [vmem:[#allocation2 + $0x1b8] sm:$0xff]
    %v784 = vld [vmem:[#allocation2 + $0x220] sm:$0xff]
    %v785 = vld [vmem:[#allocation2 + $0x228] sm:$0xff]
    %v786 = vld [vmem:[#allocation2 + $0x230] sm:$0xff]
    %v787 = vld [vmem:[#allocation2 + $0x238] sm:$0xff]
    %v788 = vld [vmem:[#allocation2 + $0x2a0] sm:$0xff]
    %v789 = vld [vmem:[#allocation2 + $0x2a8] sm:$0xff]
    %v790 = vld [vmem:[#allocation2 + $0x2b0] sm:$0xff]
    %v791 = vld [vmem:[#allocation2 + $0x2b8] sm:$0xff]
    %v816 = vunpack.c.l.b16 %v768
    %v817 = vunpack.c.h.b16 %v768
    %v818 = vunpack.c.l.b16 %v769
    %v819 = vunpack.c.h.b16 %v769
    %v820 = vunpack.c.l.b16 %v770
    %v821 = vunpack.c.h.b16 %v770
    %v822 = vunpack.c.l.b16 %v771
    %v823 = vunpack.c.h.b16 %v771
    %v824 = vunpack.c.l.b16 %v772
    %v825 = vunpack.c.h.b16 %v772
    %v826 = vunpack.c.l.b16 %v773
    %v827 = vunpack.c.h.b16 %v773
    %v828 = vunpack.c.l.b16 %v774
    %v829 = vunpack.c.h.b16 %v774
    %v830 = vunpack.c.l.b16 %v775
    %v831 = vunpack.c.h.b16 %v775
    %v832 = vunpack.c.l.b16 %v776
    %v833 = vunpack.c.h.b16 %v776
    %v834 = vunpack.c.l.b16 %v777
    %v835 = vunpack.c.h.b16 %v777
    %v836 = vunpack.c.l.b16 %v778
    %v837 = vunpack.c.h.b16 %v778
    %v838 = vunpack.c.l.b16 %v779
    %v839 = vunpack.c.h.b16 %v779
    %v840 = vunpack.c.l.b16 %v780
    %v841 = vunpack.c.h.b16 %v780
    %v842 = vunpack.c.l.b16 %v781
    %v843 = vunpack.c.h.b16 %v781
    %v844 = vunpack.c.l.b16 %v782
    %v845 = vunpack.c.h.b16 %v782
    %v846 = vunpack.c.l.b16 %v783
    %v847 = vunpack.c.h.b16 %v783
    %v848 = vunpack.c.l.b16 %v784
    %v849 = vunpack.c.h.b16 %v784
    %v850 = vunpack.c.l.b16 %v785
    %v851 = vunpack.c.h.b16 %v785
    %v852 = vunpack.c.l.b16 %v786
    %v853 = vunpack.c.h.b16 %v786
    %v854 = vunpack.c.l.b16 %v787
    %v855 = vunpack.c.h.b16 %v787
    %v856 = vunpack.c.l.b16 %v788
    %v857 = vunpack.c.h.b16 %v788
    %v858 = vunpack.c.l.b16 %v789
    %v859 = vunpack.c.h.b16 %v789
    %v860 = vunpack.c.l.b16 %v790
    %v861 = vunpack.c.h.b16 %v790
    %v862 = vunpack.c.l.b16 %v791
    %v863 = vunpack.c.h.b16 %v791
    %v864 = vpack.c.b16 %v824, %v816
    %v865 = vpack.c.b16 %v825, %v817
    %v866 = vpack.c.b16 %v826, %v818
    %v867 = vpack.c.b16 %v827, %v819
    %v868 = vpack.c.b16 %v828, %v820
    %v869 = vpack.c.b16 %v829, %v821
    %v870 = vpack.c.b16 %v830, %v822
    %v871 = vpack.c.b16 %v831, %v823
    %v872 = vpack.c.b16 %v840, %v832
    %v873 = vpack.c.b16 %v841, %v833
    %v874 = vpack.c.b16 %v842, %v834
    %v875 = vpack.c.b16 %v843, %v835
    %v876 = vpack.c.b16 %v844, %v836
    %v877 = vpack.c.b16 %v845, %v837
    %v878 = vpack.c.b16 %v846, %v838
    %v879 = vpack.c.b16 %v847, %v839
    %v880 = vpack.c.b16 %v856, %v848
    %v881 = vpack.c.b16 %v857, %v849
    %v882 = vpack.c.b16 %v858, %v850
    %v883 = vpack.c.b16 %v859, %v851
    %v884 = vpack.c.b16 %v860, %v852
    %v885 = vpack.c.b16 %v861, %v853
    %v886 = vpack.c.b16 %v862, %v854
    %v887 = vpack.c.b16 %v863, %v855
    %912 = vmatprep.subr.bf16.mxu0 %v865
    %913 = vmatpush1.bf16.msra.mxu0 %v864
    %914 = vmatprep.subr.bf16.mxu0 %v873
    %915 = vmatpush1.bf16.msra.mxu0 %v872
    %916 = vmatprep.subr.bf16.mxu0 %v881
    %917 = vmatpush1.bf16.msra.mxu0 %v880
    %918 = vmatprep.subr.bf16.mxu0 0
    %919 = vmatpush1.bf16.msra.mxu0 0
    %920 = vmatprep.subr.bf16.mxu0 0
    %921 = vmatpush1.bf16.msra.mxu0 0
    %922 = vmatprep.subr.bf16.mxu0 0
    %923 = vmatpush1.bf16.msra.mxu0 0
    %924 = vmatprep.subr.bf16.mxu0 0
    %925 = vmatpush1.bf16.msra.mxu0 0
    %926 = vmatprep.subr.bf16.mxu0 0
    %927 = vmatpush1.bf16.msra.mxu0 0
    %928 = vmatprep.subr.bf16.mxu0 0
    %929 = vmatpush1.bf16.msra.mxu0 0
    %930 = vmatprep.subr.bf16.mxu0 0
    %931 = vmatpush1.bf16.msra.mxu0 0
    %932 = vmatprep.subr.bf16.mxu0 0
    %933 = vmatpush1.bf16.msra.mxu0 0
    %934 = vmatprep.subr.bf16.mxu0 0
    %935 = vmatpush1.bf16.msra.mxu0 0
    %936 = vmatprep.subr.bf16.mxu0 0
    %937 = vmatpush1.bf16.msra.mxu0 0
    %938 = vmatprep.subr.bf16.mxu0 0
    %939 = vmatpush1.bf16.msra.mxu0 0
    %940 = vmatprep.subr.bf16.mxu0 0
    %941 = vmatpush1.bf16.msra.mxu0 0
    %942 = vmatprep.subr.bf16.mxu0 0
    %943 = vmatpush1.bf16.msra.mxu0 0
    %944 = vmatprep.mubr.bf16.mxu0 0
    %945 = vmatmul.mubr.bf16.gmra.mrb[0].mxu0 %v227
    %v946 = vpop.f32.mrb[0].mxu0
    %v947 = vadd.f32 0.0, %v946
    %v948 = vpop.f32.mrb[0].mxu0
    %v949 = vadd.f32 0.0, %v948
    %v950 = vpop.f32.mrb[0].mxu0
    %v951 = vpop.f32.mrb[0].mxu0
    %952 = vdwg.mxu0
    %953 = vmatprep.subr.bf16.mxu0 %v867
    %954 = vmatpush1.bf16.msra.mxu0 %v866
    %955 = vmatprep.subr.bf16.mxu0 %v875
    %956 = vmatpush1.bf16.msra.mxu0 %v874
    %957 = vmatprep.subr.bf16.mxu0 %v883
    %958 = vmatpush1.bf16.msra.mxu0 %v882
    %959 = vmatprep.subr.bf16.mxu0 0
    %960 = vmatpush1.bf16.msra.mxu0 0
    %961 = vmatprep.subr.bf16.mxu0 0
    %962 = vmatpush1.bf16.msra.mxu0 0
    %963 = vmatprep.subr.bf16.mxu0 0
    %964 = vmatpush1.bf16.msra.mxu0 0
    %965 = vmatprep.subr.bf16.mxu0 0
    %966 = vmatpush1.bf16.msra.mxu0 0
    %967 = vmatprep.subr.bf16.mxu0 0
    %968 = vmatpush1.bf16.msra.mxu0 0
    %969 = vmatprep.subr.bf16.mxu0 0
    %970 = vmatpush1.bf16.msra.mxu0 0
    %971 = vmatprep.subr.bf16.mxu0 0
    %972 = vmatpush1.bf16.msra.mxu0 0
    %973 = vmatprep.subr.bf16.mxu0 0
    %974 = vmatpush1.bf16.msra.mxu0 0
    %975 = vmatprep.subr.bf16.mxu0 0
    %976 = vmatpush1.bf16.msra.mxu0 0
    %977 = vmatprep.subr.bf16.mxu0 0
    %978 = vmatpush1.bf16.msra.mxu0 0
    %979 = vmatprep.subr.bf16.mxu0 0
    %980 = vmatpush1.bf16.msra.mxu0 0
    %981 = vmatprep.subr.bf16.mxu0 0
    %982 = vmatpush1.bf16.msra.mxu0 0
    %983 = vmatprep.subr.bf16.mxu0 0
    %984 = vmatpush1.bf16.msra.mxu0 0
    %985 = vmatprep.mubr.bf16.mxu0 0
    %986 = vmatmul.mubr.bf16.gmra.mrb[0].mxu0 %v227
    %v987 = vpop.f32.mrb[0].mxu0
    %v988 = vadd.f32 0.0, %v987
    %v989 = vpop.f32.mrb[0].mxu0
    %v990 = vadd.f32 0.0, %v989
    %v991 = vpop.f32.mrb[0].mxu0
    %v992 = vpop.f32.mrb[0].mxu0
    %993 = vdwg.mxu0
    %994 = vmatprep.subr.bf16.mxu0 %v869
    %995 = vmatpush1.bf16.msra.mxu0 %v868
    %996 = vmatprep.subr.bf16.mxu0 %v877
    %997 = vmatpush1.bf16.msra.mxu0 %v876
    %998 = vmatprep.subr.bf16.mxu0 %v885
    %999 = vmatpush1.bf16.msra.mxu0 %v884
    %1000 = vmatprep.subr.bf16.mxu0 0
    %1001 = vmatpush1.bf16.msra.mxu0 0
    %1002 = vmatprep.subr.bf16.mxu0 0
    %1003 = vmatpush1.bf16.msra.mxu0 0
    %1004 = vmatprep.subr.bf16.mxu0 0
    %1005 = vmatpush1.bf16.msra.mxu0 0
    %1006 = vmatprep.subr.bf16.mxu0 0
    %1007 = vmatpush1.bf16.msra.mxu0 0
    %1008 = vmatprep.subr.bf16.mxu0 0
    %1009 = vmatpush1.bf16.msra.mxu0 0
    %1010 = vmatprep.subr.bf16.mxu0 0
    %1011 = vmatpush1.bf16.msra.mxu0 0
    %1012 = vmatprep.subr.bf16.mxu0 0
    %1013 = vmatpush1.bf16.msra.mxu0 0
    %1014 = vmatprep.subr.bf16.mxu0 0
    %1015 = vmatpush1.bf16.msra.mxu0 0
    %1016 = vmatprep.subr.bf16.mxu0 0
    %1017 = vmatpush1.bf16.msra.mxu0 0
    %1018 = vmatprep.subr.bf16.mxu0 0
    %1019 = vmatpush1.bf16.msra.mxu0 0
    %1020 = vmatprep.subr.bf16.mxu0 0
    %1021 = vmatpush1.bf16.msra.mxu0 0
    %1022 = vmatprep.subr.bf16.mxu0 0
    %1023 = vmatpush1.bf16.msra.mxu0 0
    %1024 = vmatprep.subr.bf16.mxu0 0
    %1025 = vmatpush1.bf16.msra.mxu0 0
    %1026 = vmatprep.mubr.bf16.mxu0 0
    %1027 = vmatmul.mubr.bf16.gmra.mrb[0].mxu0 %v227
    %v1028 = vpop.f32.mrb[0].mxu0
    %v1029 = vadd.f32 0.0, %v1028
    %v1030 = vpop.f32.mrb[0].mxu0
    %v1031 = vadd.f32 0.0, %v1030
    %v1032 = vpop.f32.mrb[0].mxu0
    %v1033 = vpop.f32.mrb[0].mxu0
    %1034 = vdwg.mxu0
    %1035 = vmatprep.subr.bf16.mxu0 %v871
    %1036 = vmatpush1.bf16.msra.mxu0 %v870
    %1037 = vmatprep.subr.bf16.mxu0 %v879
    %1038 = vmatpush1.bf16.msra.mxu0 %v878
    %1039 = vmatprep.subr.bf16.mxu0 %v887
    %1040 = vmatpush1.bf16.msra.mxu0 %v886
    %1041 = vmatprep.subr.bf16.mxu0 0
    %1042 = vmatpush1.bf16.msra.mxu0 0
    %1043 = vmatprep.subr.bf16.mxu0 0
    %1044 = vmatpush1.bf16.msra.mxu0 0
    %1045 = vmatprep.subr.bf16.mxu0 0
    %1046 = vmatpush1.bf16.msra.mxu0 0
    %1047 = vmatprep.subr.bf16.mxu0 0
    %1048 = vmatpush1.bf16.msra.mxu0 0
    %1049 = vmatprep.subr.bf16.mxu0 0
    %1050 = vmatpush1.bf16.msra.mxu0 0
    %1051 = vmatprep.subr.bf16.mxu0 0
    %1052 = vmatpush1.bf16.msra.mxu0 0
    %1053 = vmatprep.subr.bf16.mxu0 0
    %1054 = vmatpush1.bf16.msra.mxu0 0
    %1055 = vmatprep.subr.bf16.mxu0 0
    %1056 = vmatpush1.bf16.msra.mxu0 0
    %1057 = vmatprep.subr.bf16.mxu0 0
    %1058 = vmatpush1.bf16.msra.mxu0 0
    %1059 = vmatprep.subr.bf16.mxu0 0
    %1060 = vmatpush1.bf16.msra.mxu0 0
    %1061 = vmatprep.subr.bf16.mxu0 0
    %1062 = vmatpush1.bf16.msra.mxu0 0
    %1063 = vmatprep.subr.bf16.mxu0 0
    %1064 = vmatpush1.bf16.msra.mxu0 0
    %1065 = vmatprep.subr.bf16.mxu0 0
    %1066 = vmatpush1.bf16.msra.mxu0 0
    %1067 = vmatprep.mubr.bf16.mxu0 0
    %1068 = vmatmul.mubr.bf16.gmra.mrb[0].mxu0 %v227
    %v1069 = vpop.f32.mrb[0].mxu0
    %v1070 = vadd.f32 0.0, %v1069
    %v1071 = vpop.f32.mrb[0].mxu0
    %v1072 = vadd.f32 0.0, %v1071
    %v1073 = vpop.f32.mrb[0].mxu0
    %v1074 = vpop.f32.mrb[0].mxu0
    %1075 = vdwg.mxu0
    %1076 = vmatprep.subr.bf16.mxu0 %v865
    %1077 = vmatpush1.bf16.msra.mxu0 %v864
    %1078 = vmatprep.subr.bf16.mxu0 %v873
    %1079 = vmatpush1.bf16.msra.mxu0 %v872
    %1080 = vmatprep.subr.bf16.mxu0 %v881
    %1081 = vmatpush1.bf16.msra.mxu0 %v880
    %1082 = vmatprep.subr.bf16.mxu0 0
    %1083 = vmatpush1.bf16.msra.mxu0 0
    %1084 = vmatprep.subr.bf16.mxu0 0
    %1085 = vmatpush1.bf16.msra.mxu0 0
    %1086 = vmatprep.subr.bf16.mxu0 0
    %1087 = vmatpush1.bf16.msra.mxu0 0
    %1088 = vmatprep.subr.bf16.mxu0 0
    %1089 = vmatpush1.bf16.msra.mxu0 0
    %1090 = vmatprep.subr.bf16.mxu0 0
    %1091 = vmatpush1.bf16.msra.mxu0 0
    %1092 = vmatprep.subr.bf16.mxu0 0
    %1093 = vmatpush1.bf16.msra.mxu0 0
    %1094 = vmatprep.subr.bf16.mxu0 0
    %1095 = vmatpush1.bf16.msra.mxu0 0
    %1096 = vmatprep.subr.bf16.mxu0 0
    %1097 = vmatpush1.bf16.msra.mxu0 0
    %1098 = vmatprep.subr.bf16.mxu0 0
    %1099 = vmatpush1.bf16.msra.mxu0 0
    %1100 = vmatprep.subr.bf16.mxu0 0
    %1101 = vmatpush1.bf16.msra.mxu0 0
    %1102 = vmatprep.subr.bf16.mxu0 0
    %1103 = vmatpush1.bf16.msra.mxu0 0
    %1104 = vmatprep.subr.bf16.mxu0 0
    %1105 = vmatpush1.bf16.msra.mxu0 0
    %1106 = vmatprep.subr.bf16.mxu0 0
    %1107 = vmatpush1.bf16.msra.mxu0 0
    %1108 = vmatprep.mubr.bf16.mxu0 0
    %1109 = vmatmul.mubr.bf16.gmra.mrb[0].mxu0 %v394
    %v1110 = vpop.f32.mrb[0].mxu0
    %v1111 = vadd.f32 %v947, %v1110
    %v1112 = vpop.f32.mrb[0].mxu0
    %v1113 = vadd.f32 %v949, %v1112
    %v1114 = vpop.f32.mrb[0].mxu0
    %v1115 = vpop.f32.mrb[0].mxu0
    %1116 = vdwg.mxu0
    %1117 = vmatprep.subr.bf16.mxu0 %v867
    %1118 = vmatpush1.bf16.msra.mxu0 %v866
    %1119 = vmatprep.subr.bf16.mxu0 %v875
    %1120 = vmatpush1.bf16.msra.mxu0 %v874
    %1121 = vmatprep.subr.bf16.mxu0 %v883
    %1122 = vmatpush1.bf16.msra.mxu0 %v882
    %1123 = vmatprep.subr.bf16.mxu0 0
    %1124 = vmatpush1.bf16.msra.mxu0 0
    %1125 = vmatprep.subr.bf16.mxu0 0
    %1126 = vmatpush1.bf16.msra.mxu0 0
    %1127 = vmatprep.subr.bf16.mxu0 0
    %1128 = vmatpush1.bf16.msra.mxu0 0
    %1129 = vmatprep.subr.bf16.mxu0 0
    %1130 = vmatpush1.bf16.msra.mxu0 0
    %1131 = vmatprep.subr.bf16.mxu0 0
    %1132 = vmatpush1.bf16.msra.mxu0 0
    %1133 = vmatprep.subr.bf16.mxu0 0
    %1134 = vmatpush1.bf16.msra.mxu0 0
    %1135 = vmatprep.subr.bf16.mxu0 0
    %1136 = vmatpush1.bf16.msra.mxu0 0
    %1137 = vmatprep.subr.bf16.mxu0 0
    %1138 = vmatpush1.bf16.msra.mxu0 0
    %1139 = vmatprep.subr.bf16.mxu0 0
    %1140 = vmatpush1.bf16.msra.mxu0 0
    %1141 = vmatprep.subr.bf16.mxu0 0
    %1142 = vmatpush1.bf16.msra.mxu0 0
    %1143 = vmatprep.subr.bf16.mxu0 0
    %1144 = vmatpush1.bf16.msra.mxu0 0
    %1145 = vmatprep.subr.bf16.mxu0 0
    %1146 = vmatpush1.bf16.msra.mxu0 0
    %1147 = vmatprep.subr.bf16.mxu0 0
    %1148 = vmatpush1.bf16.msra.mxu0 0
    %1149 = vmatprep.mubr.bf16.mxu0 0
    %1150 = vmatmul.mubr.bf16.gmra.mrb[0].mxu0 %v394
    %v1151 = vpop.f32.mrb[0].mxu0
    %v1152 = vadd.f32 %v988, %v1151
    %v1153 = vpop.f32.mrb[0].mxu0
    %v1154 = vadd.f32 %v990, %v1153
    %v1155 = vpop.f32.mrb[0].mxu0
    %v1156 = vpop.f32.mrb[0].mxu0
    %1157 = vdwg.mxu0
    %1158 = vmatprep.subr.bf16.mxu0 %v869
    %1159 = vmatpush1.bf16.msra.mxu0 %v868
    %1160 = vmatprep.subr.bf16.mxu0 %v877
    %1161 = vmatpush1.bf16.msra.mxu0 %v876
    %1162 = vmatprep.subr.bf16.mxu0 %v885
    %1163 = vmatpush1.bf16.msra.mxu0 %v884
    %1164 = vmatprep.subr.bf16.mxu0 0
    %1165 = vmatpush1.bf16.msra.mxu0 0
    %1166 = vmatprep.subr.bf16.mxu0 0
    %1167 = vmatpush1.bf16.msra.mxu0 0
    %1168 = vmatprep.subr.bf16.mxu0 0
    %1169 = vmatpush1.bf16.msra.mxu0 0
    %1170 = vmatprep.subr.bf16.mxu0 0
    %1171 = vmatpush1.bf16.msra.mxu0 0
    %1172 = vmatprep.subr.bf16.mxu0 0
    %1173 = vmatpush1.bf16.msra.mxu0 0
    %1174 = vmatprep.subr.bf16.mxu0 0
    %1175 = vmatpush1.bf16.msra.mxu0 0
    %1176 = vmatprep.subr.bf16.mxu0 0
    %1177 = vmatpush1.bf16.msra.mxu0 0
    %1178 = vmatprep.subr.bf16.mxu0 0
    %1179 = vmatpush1.bf16.msra.mxu0 0
    %1180 = vmatprep.subr.bf16.mxu0 0
    %1181 = vmatpush1.bf16.msra.mxu0 0
    %1182 = vmatprep.subr.bf16.mxu0 0
    %1183 = vmatpush1.bf16.msra.mxu0 0
    %1184 = vmatprep.subr.bf16.mxu0 0
    %1185 = vmatpush1.bf16.msra.mxu0 0
    %1186 = vmatprep.subr.bf16.mxu0 0
    %1187 = vmatpush1.bf16.msra.mxu0 0
    %1188 = vmatprep.subr.bf16.mxu0 0
    %1189 = vmatpush1.bf16.msra.mxu0 0
    %1190 = vmatprep.mubr.bf16.mxu0 0
    %1191 = vmatmul.mubr.bf16.gmra.mrb[0].mxu0 %v394
    %v1192 = vpop.f32.mrb[0].mxu0
    %v1193 = vadd.f32 %v1029, %v1192
    %v1194 = vpop.f32.mrb[0].mxu0
    %v1195 = vadd.f32 %v1031, %v1194
    %v1196 = vpop.f32.mrb[0].mxu0
    %v1197 = vpop.f32.mrb[0].mxu0
    %1198 = vdwg.mxu0
    %1199 = vmatprep.subr.bf16.mxu0 %v871
    %1200 = vmatpush1.bf16.msra.mxu0 %v870
    %1201 = vmatprep.subr.bf16.mxu0 %v879
    %1202 = vmatpush1.bf16.msra.mxu0 %v878
    %1203 = vmatprep.subr.bf16.mxu0 %v887
    %1204 = vmatpush1.bf16.msra.mxu0 %v886
    %1205 = vmatprep.subr.bf16.mxu0 0
    %1206 = vmatpush1.bf16.msra.mxu0 0
    %1207 = vmatprep.subr.bf16.mxu0 0
    %1208 = vmatpush1.bf16.msra.mxu0 0
    %1209 = vmatprep.subr.bf16.mxu0 0
    %1210 = vmatpush1.bf16.msra.mxu0 0
    %1211 = vmatprep.subr.bf16.mxu0 0
    %1212 = vmatpush1.bf16.msra.mxu0 0
    %1213 = vmatprep.subr.bf16.mxu0 0
    %1214 = vmatpush1.bf16.msra.mxu0 0
    %1215 = vmatprep.subr.bf16.mxu0 0
    %1216 = vmatpush1.bf16.msra.mxu0 0
    %1217 = vmatprep.subr.bf16.mxu0 0
    %1218 = vmatpush1.bf16.msra.mxu0 0
    %1219 = vmatprep.subr.bf16.mxu0 0
    %1220 = vmatpush1.bf16.msra.mxu0 0
    %1221 = vmatprep.subr.bf16.mxu0 0
    %1222 = vmatpush1.bf16.msra.mxu0 0
    %1223 = vmatprep.subr.bf16.mxu0 0
    %1224 = vmatpush1.bf16.msra.mxu0 0
    %1225 = vmatprep.subr.bf16.mxu0 0
    %1226 = vmatpush1.bf16.msra.mxu0 0
    %1227 = vmatprep.subr.bf16.mxu0 0
    %1228 = vmatpush1.bf16.msra.mxu0 0
    %1229 = vmatprep.subr.bf16.mxu0 0
    %1230 = vmatpush1.bf16.msra.mxu0 0
    %1231 = vmatprep.mubr.bf16.mxu0 0
    %1232 = vmatmul.mubr.bf16.gmra.mrb[0].mxu0 %v394
    %v1233 = vpop.f32.mrb[0].mxu0
    %v1234 = vadd.f32 %v1070, %v1233
    %v1235 = vpop.f32.mrb[0].mxu0
    %v1236 = vadd.f32 %v1072, %v1235
    %v1237 = vpop.f32.mrb[0].mxu0
    %v1238 = vpop.f32.mrb[0].mxu0
    %1239 = vdwg.mxu0
    %1240 = vmatprep.subr.bf16.mxu0 %v865
    %1241 = vmatpush1.bf16.msra.mxu0 %v864
    %1242 = vmatprep.subr.bf16.mxu0 %v873
    %1243 = vmatpush1.bf16.msra.mxu0 %v872
    %1244 = vmatprep.subr.bf16.mxu0 %v881
    %1245 = vmatpush1.bf16.msra.mxu0 %v880
    %1246 = vmatprep.subr.bf16.mxu0 0
    %1247 = vmatpush1.bf16.msra.mxu0 0
    %1248 = vmatprep.subr.bf16.mxu0 0
    %1249 = vmatpush1.bf16.msra.mxu0 0
    %1250 = vmatprep.subr.bf16.mxu0 0
    %1251 = vmatpush1.bf16.msra.mxu0 0
    %1252 = vmatprep.subr.bf16.mxu0 0
    %1253 = vmatpush1.bf16.msra.mxu0 0
    %1254 = vmatprep.subr.bf16.mxu0 0
    %1255 = vmatpush1.bf16.msra.mxu0 0
    %1256 = vmatprep.subr.bf16.mxu0 0
    %1257 = vmatpush1.bf16.msra.mxu0 0
    %1258 = vmatprep.subr.bf16.mxu0 0
    %1259 = vmatpush1.bf16.msra.mxu0 0
    %1260 = vmatprep.subr.bf16.mxu0 0
    %1261 = vmatpush1.bf16.msra.mxu0 0
    %1262 = vmatprep.subr.bf16.mxu0 0
    %1263 = vmatpush1.bf16.msra.mxu0 0
    %1264 = vmatprep.subr.bf16.mxu0 0
    %1265 = vmatpush1.bf16.msra.mxu0 0
    %1266 = vmatprep.subr.bf16.mxu0 0
    %1267 = vmatpush1.bf16.msra.mxu0 0
    %1268 = vmatprep.subr.bf16.mxu0 0
    %1269 = vmatpush1.bf16.msra.mxu0 0
    %1270 = vmatprep.subr.bf16.mxu0 0
    %1271 = vmatpush1.bf16.msra.mxu0 0
    %1272 = vmatprep.mubr.bf16.mxu0 0
    %1273 = vmatmul.mubr.bf16.gmra.mrb[0].mxu0 %v561
    %v1274 = vpop.f32.mrb[0].mxu0
    %v1275 = vadd.f32 0.0, %v1274
    %v1276 = vpop.f32.mrb[0].mxu0
    %v1277 = vadd.f32 0.0, %v1276
    %v1278 = vpop.f32.mrb[0].mxu0
    %v1279 = vpop.f32.mrb[0].mxu0
    %1280 = vdwg.mxu0
    %1281 = vmatprep.subr.bf16.mxu0 %v867
    %1282 = vmatpush1.bf16.msra.mxu0 %v866
    %1283 = vmatprep.subr.bf16.mxu0 %v875
    %1284 = vmatpush1.bf16.msra.mxu0 %v874
    %1285 = vmatprep.subr.bf16.mxu0 %v883
    %1286 = vmatpush1.bf16.msra.mxu0 %v882
    %1287 = vmatprep.subr.bf16.mxu0 0
    %1288 = vmatpush1.bf16.msra.mxu0 0
    %1289 = vmatprep.subr.bf16.mxu0 0
    %1290 = vmatpush1.bf16.msra.mxu0 0
    %1291 = vmatprep.subr.bf16.mxu0 0
    %1292 = vmatpush1.bf16.msra.mxu0 0
    %1293 = vmatprep.subr.bf16.mxu0 0
    %1294 = vmatpush1.bf16.msra.mxu0 0
    %1295 = vmatprep.subr.bf16.mxu0 0
    %1296 = vmatpush1.bf16.msra.mxu0 0
    %1297 = vmatprep.subr.bf16.mxu0 0
    %1298 = vmatpush1.bf16.msra.mxu0 0
    %1299 = vmatprep.subr.bf16.mxu0 0
    %1300 = vmatpush1.bf16.msra.mxu0 0
    %1301 = vmatprep.subr.bf16.mxu0 0
    %1302 = vmatpush1.bf16.msra.mxu0 0
    %1303 = vmatprep.subr.bf16.mxu0 0
    %1304 = vmatpush1.bf16.msra.mxu0 0
    %1305 = vmatprep.subr.bf16.mxu0 0
    %1306 = vmatpush1.bf16.msra.mxu0 0
    %1307 = vmatprep.subr.bf16.mxu0 0
    %1308 = vmatpush1.bf16.msra.mxu0 0
    %1309 = vmatprep.subr.bf16.mxu0 0
    %1310 = vmatpush1.bf16.msra.mxu0 0
    %1311 = vmatprep.subr.bf16.mxu0 0
    %1312 = vmatpush1.bf16.msra.mxu0 0
    %1313 = vmatprep.mubr.bf16.mxu0 0
    %1314 = vmatmul.mubr.bf16.gmra.mrb[0].mxu0 %v561
    %v1315 = vpop.f32.mrb[0].mxu0
    %v1316 = vadd.f32 0.0, %v1315
    %v1317 = vpop.f32.mrb[0].mxu0
    %v1318 = vadd.f32 0.0, %v1317
    %v1319 = vpop.f32.mrb[0].mxu0
    %v1320 = vpop.f32.mrb[0].mxu0
    %1321 = vdwg.mxu0
    %1322 = vmatprep.subr.bf16.mxu0 %v869
    %1323 = vmatpush1.bf16.msra.mxu0 %v868
    %1324 = vmatprep.subr.bf16.mxu0 %v877
    %1325 = vmatpush1.bf16.msra.mxu0 %v876
    %1326 = vmatprep.subr.bf16.mxu0 %v885
    %1327 = vmatpush1.bf16.msra.mxu0 %v884
    %1328 = vmatprep.subr.bf16.mxu0 0
    %1329 = vmatpush1.bf16.msra.mxu0 0
    %1330 = vmatprep.subr.bf16.mxu0 0
    %1331 = vmatpush1.bf16.msra.mxu0 0
    %1332 = vmatprep.subr.bf16.mxu0 0
    %1333 = vmatpush1.bf16.msra.mxu0 0
    %1334 = vmatprep.subr.bf16.mxu0 0
    %1335 = vmatpush1.bf16.msra.mxu0 0
    %1336 = vmatprep.subr.bf16.mxu0 0
    %1337 = vmatpush1.bf16.msra.mxu0 0
    %1338 = vmatprep.subr.bf16.mxu0 0
    %1339 = vmatpush1.bf16.msra.mxu0 0
    %1340 = vmatprep.subr.bf16.mxu0 0
    %1341 = vmatpush1.bf16.msra.mxu0 0
    %1342 = vmatprep.subr.bf16.mxu0 0
    %1343 = vmatpush1.bf16.msra.mxu0 0
    %1344 = vmatprep.subr.bf16.mxu0 0
    %1345 = vmatpush1.bf16.msra.mxu0 0
    %1346 = vmatprep.subr.bf16.mxu0 0
    %1347 = vmatpush1.bf16.msra.mxu0 0
    %1348 = vmatprep.subr.bf16.mxu0 0
    %1349 = vmatpush1.bf16.msra.mxu0 0
    %1350 = vmatprep.subr.bf16.mxu0 0
    %1351 = vmatpush1.bf16.msra.mxu0 0
    %1352 = vmatprep.subr.bf16.mxu0 0
    %1353 = vmatpush1.bf16.msra.mxu0 0
    %1354 = vmatprep.mubr.bf16.mxu0 0
    %1355 = vmatmul.mubr.bf16.gmra.mrb[0].mxu0 %v561
    %v1356 = vpop.f32.mrb[0].mxu0
    %v1357 = vadd.f32 0.0, %v1356
    %v1358 = vpop.f32.mrb[0].mxu0
    %v1359 = vadd.f32 0.0, %v1358
    %v1360 = vpop.f32.mrb[0].mxu0
    %v1361 = vpop.f32.mrb[0].mxu0
    %1362 = vdwg.mxu0
    %1363 = vmatprep.subr.bf16.mxu0 %v871
    %1364 = vmatpush1.bf16.msra.mxu0 %v870
    %1365 = vmatprep.subr.bf16.mxu0 %v879
    %1366 = vmatpush1.bf16.msra.mxu0 %v878
    %1367 = vmatprep.subr.bf16.mxu0 %v887
    %1368 = vmatpush1.bf16.msra.mxu0 %v886
    %1369 = vmatprep.subr.bf16.mxu0 0
    %1370 = vmatpush1.bf16.msra.mxu0 0
    %1371 = vmatprep.subr.bf16.mxu0 0
    %1372 = vmatpush1.bf16.msra.mxu0 0
    %1373 = vmatprep.subr.bf16.mxu0 0
    %1374 = vmatpush1.bf16.msra.mxu0 0
    %1375 = vmatprep.subr.bf16.mxu0 0
    %1376 = vmatpush1.bf16.msra.mxu0 0
    %1377 = vmatprep.subr.bf16.mxu0 0
    %1378 = vmatpush1.bf16.msra.mxu0 0
    %1379 = vmatprep.subr.bf16.mxu0 0
    %1380 = vmatpush1.bf16.msra.mxu0 0
    %1381 = vmatprep.subr.bf16.mxu0 0
    %1382 = vmatpush1.bf16.msra.mxu0 0
    %1383 = vmatprep.subr.bf16.mxu0 0
    %1384 = vmatpush1.bf16.msra.mxu0 0
    %1385 = vmatprep.subr.bf16.mxu0 0
    %1386 = vmatpush1.bf16.msra.mxu0 0
    %1387 = vmatprep.subr.bf16.mxu0 0
    %1388 = vmatpush1.bf16.msra.mxu0 0
    %1389 = vmatprep.subr.bf16.mxu0 0
    %1390 = vmatpush1.bf16.msra.mxu0 0
    %1391 = vmatprep.subr.bf16.mxu0 0
    %1392 = vmatpush1.bf16.msra.mxu0 0
    %1393 = vmatprep.subr.bf16.mxu0 0
    %1394 = vmatpush1.bf16.msra.mxu0 0
    %1395 = vmatprep.mubr.bf16.mxu0 0
    %1396 = vmatmul.mubr.bf16.gmra.mrb[0].mxu0 %v561
    %v1397 = vpop.f32.mrb[0].mxu0
    %v1398 = vadd.f32 0.0, %v1397
    %v1399 = vpop.f32.mrb[0].mxu0
    %v1400 = vadd.f32 0.0, %v1399
    %v1401 = vpop.f32.mrb[0].mxu0
    %v1402 = vpop.f32.mrb[0].mxu0
    %1403 = vdwg.mxu0
    %v1404 = vadd.f32 %v1111, %v1275
    %v1405 = vadd.f32 %v1113, %v1277
    %v1406 = vadd.f32 %v1152, %v1316
    %v1407 = vadd.f32 %v1154, %v1318
    %v1408 = vadd.f32 %v1193, %v1357
    %v1409 = vadd.f32 %v1195, %v1359
    %v1410 = vadd.f32 %v1234, %v1398
    %v1411 = vadd.f32 %v1236, %v1400
    %v1412 = vmax.f32 %v1404, %v1405
    %v1413 = vmax.f32 %v1406, %v1407
    %v1414 = vmax.f32 %v1412, %v1413
    %s1415 = scalar_lea.vmem [#allocation8], 16
    %v1416 = vld [vmem:[%s1415] sm:$0xff]
    %v1417 = vmul.f32 %v1416, %v762
    %v1418 = vadd.f32 %v1414, %v75
    %v1419 = vadd.f32 %v1417, %v1418
    %v1420 = vsub.f32 %v1419, 1.0
    %vm1421 = vcmp.gt.f32.partialorder %v1420, 0.0
    %v1422 = vsel %vm1421, 1, 0
    %v1423 = vcvt.s32.f32 %v1422
    %v1424 = vsub.f32 %v1419, %v1423
    %v1425 = vpack.c.bf16 %v1423, %v1423
    %s1426 = scalar_lea.vmem [#allocation10], 8
    %1427 = vst [vmem:[%s1426] sm:$0xf] %v1425
    %s1428 = scalar_lea.vmem [#allocation11], 16
    %1429 = vst [vmem:[%s1428] sm:$0xff] %v1424
    %v1430 = vmax.f32 %v1408, %v1409
    %v1431 = vmax.f32 %v1410, %v1411
    %v1432 = vmax.f32 %v1430, %v1431
    %s1433 = scalar_lea.vmem [#allocation8], 24
    %v1434 = vld [vmem:[%s1433] sm:$0xff]
    %v1435 = vmul.f32 %v1434, %v1424
    %v1436 = vadd.f32 %v1432, %v75
    %v1437 = vadd.f32 %v1435, %v1436
    %v1438 = vsub.f32 %v1437, 1.0
    %vm1439 = vcmp.gt.f32.partialorder %v1438, 0.0
    %v1440 = vsel %vm1439, 1, 0
    %v1441 = vcvt.s32.f32 %v1440
    %v1442 = vsub.f32 %v1437, %v1441
    %v1443 = vpack.c.bf16 %v1441, %v1441
    %s1444 = scalar_lea.vmem [#allocation10], 12
    %1445 = vst [vmem:[%s1444] sm:$0xf] %v1443
    %s1446 = scalar_lea.vmem [#allocation11], 24
    %1447 = vst [vmem:[%s1446] sm:$0xff] %v1442
    %v1448 = vld [vmem:[#allocation2 + $0x40] sm:$0xff]
    %v1449 = vld [vmem:[#allocation2 + $0x48] sm:$0xff]
    %v1450 = vld [vmem:[#allocation2 + $0x50] sm:$0xff]
    %v1451 = vld [vmem:[#allocation2 + $0x58] sm:$0xff]
    %v1452 = vld [vmem:[#allocation2 + $0xc0] sm:$0xff]
    %v1453 = vld [vmem:[#allocation2 + $0xc8] sm:$0xff]
    %v1454 = vld [vmem:[#allocation2 + $0xd0] sm:$0xff]
    %v1455 = vld [vmem:[#allocation2 + $0xd8] sm:$0xff]
    %v1456 = vld [vmem:[#allocation2 + $0x140] sm:$0xff]
    %v1457 = vld [vmem:[#allocation2 + $0x148] sm:$0xff]
    %v1458 = vld [vmem:[#allocation2 + $0x150] sm:$0xff]
    %v1459 = vld [vmem:[#allocation2 + $0x158] sm:$0xff]
    %v1460 = vld [vmem:[#allocation2 + $0x1c0] sm:$0xff]
    %v1461 = vld [vmem:[#allocation2 + $0x1c8] sm:$0xff]
    %v1462 = vld [vmem:[#allocation2 + $0x1d0] sm:$0xff]
    %v1463 = vld [vmem:[#allocation2 + $0x1d8] sm:$0xff]
    %v1464 = vld [vmem:[#allocation2 + $0x240] sm:$0xff]
    %v1465 = vld [vmem:[#allocation2 + $0x248] sm:$0xff]
    %v1466 = vld [vmem:[#allocation2 + $0x250] sm:$0xff]
    %v1467 = vld [vmem:[#allocation2 + $0x258] sm:$0xff]
    %v1468 = vld [vmem:[#allocation2 + $0x2c0] sm:$0xff]
    %v1469 = vld [vmem:[#allocation2 + $0x2c8] sm:$0xff]
    %v1470 = vld [vmem:[#allocation2 + $0x2d0] sm:$0xff]
    %v1471 = vld [vmem:[#allocation2 + $0x2d8] sm:$0xff]
    %v1496 = vunpack.c.l.b16 %v1448
    %v1497 = vunpack.c.h.b16 %v1448
    %v1498 = vunpack.c.l.b16 %v1449
    %v1499 = vunpack.c.h.b16 %v1449
    %v1500 = vunpack.c.l.b16 %v1450
    %v1501 = vunpack.c.h.b16 %v1450
    %v1502 = vunpack.c.l.b16 %v1451
    %v1503 = vunpack.c.h.b16 %v1451
    %v1504 = vunpack.c.l.b16 %v1452
    %v1505 = vunpack.c.h.b16 %v1452
    %v1506 = vunpack.c.l.b16 %v1453
    %v1507 = vunpack.c.h.b16 %v1453
    %v1508 = vunpack.c.l.b16 %v1454
    %v1509 = vunpack.c.h.b16 %v1454
    %v1510 = vunpack.c.l.b16 %v1455
    %v1511 = vunpack.c.h.b16 %v1455
    %v1512 = vunpack.c.l.b16 %v1456
    %v1513 = vunpack.c.h.b16 %v1456
    %v1514 = vunpack.c.l.b16 %v1457
    %v1515 = vunpack.c.h.b16 %v1457
    %v1516 = vunpack.c.l.b16 %v1458
    %v1517 = vunpack.c.h.b16 %v1458
    %v1518 = vunpack.c.l.b16 %v1459
    %v1519 = vunpack.c.h.b16 %v1459
    %v1520 = vunpack.c.l.b16 %v1460
    %v1521 = vunpack.c.h.b16 %v1460
    %v1522 = vunpack.c.l.b16 %v1461
    %v1523 = vunpack.c.h.b16 %v1461
    %v1524 = vunpack.c.l.b16 %v1462
    %v1525 = vunpack.c.h.b16 %v1462
    %v1526 = vunpack.c.l.b16 %v1463
    %v1527 = vunpack.c.h.b16 %v1463
    %v1528 = vunpack.c.l.b16 %v1464
    %v1529 = vunpack.c.h.b16 %v1464
    %v1530 = vunpack.c.l.b16 %v1465
    %v1531 = vunpack.c.h.b16 %v1465
    %v1532 = vunpack.c.l.b16 %v1466
    %v1533 = vunpack.c.h.b16 %v1466
    %v1534 = vunpack.c.l.b16 %v1467
    %v1535 = vunpack.c.h.b16 %v1467
    %v1536 = vunpack.c.l.b16 %v1468
    %v1537 = vunpack.c.h.b16 %v1468
    %v1538 = vunpack.c.l.b16 %v1469
    %v1539 = vunpack.c.h.b16 %v1469
    %v1540 = vunpack.c.l.b16 %v1470
    %v1541 = vunpack.c.h.b16 %v1470
    %v1542 = vunpack.c.l.b16 %v1471
    %v1543 = vunpack.c.h.b16 %v1471
    %v1544 = vpack.c.b16 %v1504, %v1496
    %v1545 = vpack.c.b16 %v1505, %v1497
    %v1546 = vpack.c.b16 %v1506, %v1498
    %v1547 = vpack.c.b16 %v1507, %v1499
    %v1548 = vpack.c.b16 %v1508, %v1500
    %v1549 = vpack.c.b16 %v1509, %v1501
    %v1550 = vpack.c.b16 %v1510, %v1502
    %v1551 = vpack.c.b16 %v1511, %v1503
    %v1552 = vpack.c.b16 %v1520, %v1512
    %v1553 = vpack.c.b16 %v1521, %v1513
    %v1554 = vpack.c.b16 %v1522, %v1514
    %v1555 = vpack.c.b16 %v1523, %v1515
    %v1556 = vpack.c.b16 %v1524, %v1516
    %v1557 = vpack.c.b16 %v1525, %v1517
    %v1558 = vpack.c.b16 %v1526, %v1518
    %v1559 = vpack.c.b16 %v1527, %v1519
    %v1560 = vpack.c.b16 %v1536, %v1528
    %v1561 = vpack.c.b16 %v1537, %v1529
    %v1562 = vpack.c.b16 %v1538, %v1530
    %v1563 = vpack.c.b16 %v1539, %v1531
    %v1564 = vpack.c.b16 %v1540, %v1532
    %v1565 = vpack.c.b16 %v1541, %v1533
    %v1566 = vpack.c.b16 %v1542, %v1534
    %v1567 = vpack.c.b16 %v1543, %v1535
    %1592 = vmatprep.subr.bf16.mxu0 %v1545
    %1593 = vmatpush1.bf16.msra.mxu0 %v1544
    %1594 = vmatprep.subr.bf16.mxu0 %v1553
    %1595 = vmatpush1.bf16.msra.mxu0 %v1552
    %1596 = vmatprep.subr.bf16.mxu0 %v1561
    %1597 = vmatpush1.bf16.msra.mxu0 %v1560
    %1598 = vmatprep.subr.bf16.mxu0 0
    %1599 = vmatpush1.bf16.msra.mxu0 0
    %1600 = vmatprep.subr.bf16.mxu0 0
    %1601 = vmatpush1.bf16.msra.mxu0 0
    %1602 = vmatprep.subr.bf16.mxu0 0
    %1603 = vmatpush1.bf16.msra.mxu0 0
    %1604 = vmatprep.subr.bf16.mxu0 0
    %1605 = vmatpush1.bf16.msra.mxu0 0
    %1606 = vmatprep.subr.bf16.mxu0 0
    %1607 = vmatpush1.bf16.msra.mxu0 0
    %1608 = vmatprep.subr.bf16.mxu0 0
    %1609 = vmatpush1.bf16.msra.mxu0 0
    %1610 = vmatprep.subr.bf16.mxu0 0
    %1611 = vmatpush1.bf16.msra.mxu0 0
    %1612 = vmatprep.subr.bf16.mxu0 0
    %1613 = vmatpush1.bf16.msra.mxu0 0
    %1614 = vmatprep.subr.bf16.mxu0 0
    %1615 = vmatpush1.bf16.msra.mxu0 0
    %1616 = vmatprep.subr.bf16.mxu0 0
    %1617 = vmatpush1.bf16.msra.mxu0 0
    %1618 = vmatprep.subr.bf16.mxu0 0
    %1619 = vmatpush1.bf16.msra.mxu0 0
    %1620 = vmatprep.subr.bf16.mxu0 0
    %1621 = vmatpush1.bf16.msra.mxu0 0
    %1622 = vmatprep.subr.bf16.mxu0 0
    %1623 = vmatpush1.bf16.msra.mxu0 0
    %1624 = vmatprep.mubr.bf16.mxu0 0
    %1625 = vmatmul.mubr.bf16.gmra.mrb[0].mxu0 %v227
    %v1626 = vpop.f32.mrb[0].mxu0
    %v1627 = vadd.f32 0.0, %v1626
    %v1628 = vpop.f32.mrb[0].mxu0
    %v1629 = vadd.f32 0.0, %v1628
    %v1630 = vpop.f32.mrb[0].mxu0
    %v1631 = vpop.f32.mrb[0].mxu0
    %1632 = vdwg.mxu0
    %1633 = vmatprep.subr.bf16.mxu0 %v1547
    %1634 = vmatpush1.bf16.msra.mxu0 %v1546
    %1635 = vmatprep.subr.bf16.mxu0 %v1555
    %1636 = vmatpush1.bf16.msra.mxu0 %v1554
    %1637 = vmatprep.subr.bf16.mxu0 %v1563
    %1638 = vmatpush1.bf16.msra.mxu0 %v1562
    %1639 = vmatprep.subr.bf16.mxu0 0
    %1640 = vmatpush1.bf16.msra.mxu0 0
    %1641 = vmatprep.subr.bf16.mxu0 0
    %1642 = vmatpush1.bf16.msra.mxu0 0
    %1643 = vmatprep.subr.bf16.mxu0 0
    %1644 = vmatpush1.bf16.msra.mxu0 0
    %1645 = vmatprep.subr.bf16.mxu0 0
    %1646 = vmatpush1.bf16.msra.mxu0 0
    %1647 = vmatprep.subr.bf16.mxu0 0
    %1648 = vmatpush1.bf16.msra.mxu0 0
    %1649 = vmatprep.subr.bf16.mxu0 0
    %1650 = vmatpush1.bf16.msra.mxu0 0
    %1651 = vmatprep.subr.bf16.mxu0 0
    %1652 = vmatpush1.bf16.msra.mxu0 0
    %1653 = vmatprep.subr.bf16.mxu0 0
    %1654 = vmatpush1.bf16.msra.mxu0 0
    %1655 = vmatprep.subr.bf16.mxu0 0
    %1656 = vmatpush1.bf16.msra.mxu0 0
    %1657 = vmatprep.subr.bf16.mxu0 0
    %1658 = vmatpush1.bf16.msra.mxu0 0
    %1659 = vmatprep.subr.bf16.mxu0 0
    %1660 = vmatpush1.bf16.msra.mxu0 0
    %1661 = vmatprep.subr.bf16.mxu0 0
    %1662 = vmatpush1.bf16.msra.mxu0 0
    %1663 = vmatprep.subr.bf16.mxu0 0
    %1664 = vmatpush1.bf16.msra.mxu0 0
    %1665 = vmatprep.mubr.bf16.mxu0 0
    %1666 = vmatmul.mubr.bf16.gmra.mrb[0].mxu0 %v227
    %v1667 = vpop.f32.mrb[0].mxu0
    %v1668 = vadd.f32 0.0, %v1667
    %v1669 = vpop.f32.mrb[0].mxu0
    %v1670 = vadd.f32 0.0, %v1669
    %v1671 = vpop.f32.mrb[0].mxu0
    %v1672 = vpop.f32.mrb[0].mxu0
    %1673 = vdwg.mxu0
    %1674 = vmatprep.subr.bf16.mxu0 %v1549
    %1675 = vmatpush1.bf16.msra.mxu0 %v1548
    %1676 = vmatprep.subr.bf16.mxu0 %v1557
    %1677 = vmatpush1.bf16.msra.mxu0 %v1556
    %1678 = vmatprep.subr.bf16.mxu0 %v1565
    %1679 = vmatpush1.bf16.msra.mxu0 %v1564
    %1680 = vmatprep.subr.bf16.mxu0 0
    %1681 = vmatpush1.bf16.msra.mxu0 0
    %1682 = vmatprep.subr.bf16.mxu0 0
    %1683 = vmatpush1.bf16.msra.mxu0 0
    %1684 = vmatprep.subr.bf16.mxu0 0
    %1685 = vmatpush1.bf16.msra.mxu0 0
    %1686 = vmatprep.subr.bf16.mxu0 0
    %1687 = vmatpush1.bf16.msra.mxu0 0
    %1688 = vmatprep.subr.bf16.mxu0 0
    %1689 = vmatpush1.bf16.msra.mxu0 0
    %1690 = vmatprep.subr.bf16.mxu0 0
    %1691 = vmatpush1.bf16.msra.mxu0 0
    %1692 = vmatprep.subr.bf16.mxu0 0
    %1693 = vmatpush1.bf16.msra.mxu0 0
    %1694 = vmatprep.subr.bf16.mxu0 0
    %1695 = vmatpush1.bf16.msra.mxu0 0
    %1696 = vmatprep.subr.bf16.mxu0 0
    %1697 = vmatpush1.bf16.msra.mxu0 0
    %1698 = vmatprep.subr.bf16.mxu0 0
    %1699 = vmatpush1.bf16.msra.mxu0 0
    %1700 = vmatprep.subr.bf16.mxu0 0
    %1701 = vmatpush1.bf16.msra.mxu0 0
    %1702 = vmatprep.subr.bf16.mxu0 0
    %1703 = vmatpush1.bf16.msra.mxu0 0
    %1704 = vmatprep.subr.bf16.mxu0 0
    %1705 = vmatpush1.bf16.msra.mxu0 0
    %1706 = vmatprep.mubr.bf16.mxu0 0
    %1707 = vmatmul.mubr.bf16.gmra.mrb[0].mxu0 %v227
    %v1708 = vpop.f32.mrb[0].mxu0
    %v1709 = vadd.f32 0.0, %v1708
    %v1710 = vpop.f32.mrb[0].mxu0
    %v1711 = vadd.f32 0.0, %v1710
    %v1712 = vpop.f32.mrb[0].mxu0
    %v1713 = vpop.f32.mrb[0].mxu0
    %1714 = vdwg.mxu0
    %1715 = vmatprep.subr.bf16.mxu0 %v1551
    %1716 = vmatpush1.bf16.msra.mxu0 %v1550
    %1717 = vmatprep.subr.bf16.mxu0 %v1559
    %1718 = vmatpush1.bf16.msra.mxu0 %v1558
    %1719 = vmatprep.subr.bf16.mxu0 %v1567
    %1720 = vmatpush1.bf16.msra.mxu0 %v1566
    %1721 = vmatprep.subr.bf16.mxu0 0
    %1722 = vmatpush1.bf16.msra.mxu0 0
    %1723 = vmatprep.subr.bf16.mxu0 0
    %1724 = vmatpush1.bf16.msra.mxu0 0
    %1725 = vmatprep.subr.bf16.mxu0 0
    %1726 = vmatpush1.bf16.msra.mxu0 0
    %1727 = vmatprep.subr.bf16.mxu0 0
    %1728 = vmatpush1.bf16.msra.mxu0 0
    %1729 = vmatprep.subr.bf16.mxu0 0
    %1730 = vmatpush1.bf16.msra.mxu0 0
    %1731 = vmatprep.subr.bf16.mxu0 0
    %1732 = vmatpush1.bf16.msra.mxu0 0
    %1733 = vmatprep.subr.bf16.mxu0 0
    %1734 = vmatpush1.bf16.msra.mxu0 0
    %1735 = vmatprep.subr.bf16.mxu0 0
    %1736 = vmatpush1.bf16.msra.mxu0 0
    %1737 = vmatprep.subr.bf16.mxu0 0
    %1738 = vmatpush1.bf16.msra.mxu0 0
    %1739 = vmatprep.subr.bf16.mxu0 0
    %1740 = vmatpush1.bf16.msra.mxu0 0
    %1741 = vmatprep.subr.bf16.mxu0 0
    %1742 = vmatpush1.bf16.msra.mxu0 0
    %1743 = vmatprep.subr.bf16.mxu0 0
    %1744 = vmatpush1.bf16.msra.mxu0 0
    %1745 = vmatprep.subr.bf16.mxu0 0
    %1746 = vmatpush1.bf16.msra.mxu0 0
    %1747 = vmatprep.mubr.bf16.mxu0 0
    %1748 = vmatmul.mubr.bf16.gmra.mrb[0].mxu0 %v227
    %v1749 = vpop.f32.mrb[0].mxu0
    %v1750 = vadd.f32 0.0, %v1749
    %v1751 = vpop.f32.mrb[0].mxu0
    %v1752 = vadd.f32 0.0, %v1751
    %v1753 = vpop.f32.mrb[0].mxu0
    %v1754 = vpop.f32.mrb[0].mxu0
    %1755 = vdwg.mxu0
    %1756 = vmatprep.subr.bf16.mxu0 %v1545
    %1757 = vmatpush1.bf16.msra.mxu0 %v1544
    %1758 = vmatprep.subr.bf16.mxu0 %v1553
    %1759 = vmatpush1.bf16.msra.mxu0 %v1552
    %1760 = vmatprep.subr.bf16.mxu0 %v1561
    %1761 = vmatpush1.bf16.msra.mxu0 %v1560
    %1762 = vmatprep.subr.bf16.mxu0 0
    %1763 = vmatpush1.bf16.msra.mxu0 0
    %1764 = vmatprep.subr.bf16.mxu0 0
    %1765 = vmatpush1.bf16.msra.mxu0 0
    %1766 = vmatprep.subr.bf16.mxu0 0
    %1767 = vmatpush1.bf16.msra.mxu0 0
    %1768 = vmatprep.subr.bf16.mxu0 0
    %1769 = vmatpush1.bf16.msra.mxu0 0
    %1770 = vmatprep.subr.bf16.mxu0 0
    %1771 = vmatpush1.bf16.msra.mxu0 0
    %1772 = vmatprep.subr.bf16.mxu0 0
    %1773 = vmatpush1.bf16.msra.mxu0 0
    %1774 = vmatprep.subr.bf16.mxu0 0
    %1775 = vmatpush1.bf16.msra.mxu0 0
    %1776 = vmatprep.subr.bf16.mxu0 0
    %1777 = vmatpush1.bf16.msra.mxu0 0
    %1778 = vmatprep.subr.bf16.mxu0 0
    %1779 = vmatpush1.bf16.msra.mxu0 0
    %1780 = vmatprep.subr.bf16.mxu0 0
    %1781 = vmatpush1.bf16.msra.mxu0 0
    %1782 = vmatprep.subr.bf16.mxu0 0
    %1783 = vmatpush1.bf16.msra.mxu0 0
    %1784 = vmatprep.subr.bf16.mxu0 0
    %1785 = vmatpush1.bf16.msra.mxu0 0
    %1786 = vmatprep.subr.bf16.mxu0 0
    %1787 = vmatpush1.bf16.msra.mxu0 0
    %1788 = vmatprep.mubr.bf16.mxu0 0
    %1789 = vmatmul.mubr.bf16.gmra.mrb[0].mxu0 %v394
    %v1790 = vpop.f32.mrb[0].mxu0
    %v1791 = vadd.f32 %v1627, %v1790
    %v1792 = vpop.f32.mrb[0].mxu0
    %v1793 = vadd.f32 %v1629, %v1792
    %v1794 = vpop.f32.mrb[0].mxu0
    %v1795 = vpop.f32.mrb[0].mxu0
    %1796 = vdwg.mxu0
    %1797 = vmatprep.subr.bf16.mxu0 %v1547
    %1798 = vmatpush1.bf16.msra.mxu0 %v1546
    %1799 = vmatprep.subr.bf16.mxu0 %v1555
    %1800 = vmatpush1.bf16.msra.mxu0 %v1554
    %1801 = vmatprep.subr.bf16.mxu0 %v1563
    %1802 = vmatpush1.bf16.msra.mxu0 %v1562
    %1803 = vmatprep.subr.bf16.mxu0 0
    %1804 = vmatpush1.bf16.msra.mxu0 0
    %1805 = vmatprep.subr.bf16.mxu0 0
    %1806 = vmatpush1.bf16.msra.mxu0 0
    %1807 = vmatprep.subr.bf16.mxu0 0
    %1808 = vmatpush1.bf16.msra.mxu0 0
    %1809 = vmatprep.subr.bf16.mxu0 0
    %1810 = vmatpush1.bf16.msra.mxu0 0
    %1811 = vmatprep.subr.bf16.mxu0 0
    %1812 = vmatpush1.bf16.msra.mxu0 0
    %1813 = vmatprep.subr.bf16.mxu0 0
    %1814 = vmatpush1.bf16.msra.mxu0 0
    %1815 = vmatprep.subr.bf16.mxu0 0
    %1816 = vmatpush1.bf16.msra.mxu0 0
    %1817 = vmatprep.subr.bf16.mxu0 0
    %1818 = vmatpush1.bf16.msra.mxu0 0
    %1819 = vmatprep.subr.bf16.mxu0 0
    %1820 = vmatpush1.bf16.msra.mxu0 0
    %1821 = vmatprep.subr.bf16.mxu0 0
    %1822 = vmatpush1.bf16.msra.mxu0 0
    %1823 = vmatprep.subr.bf16.mxu0 0
    %1824 = vmatpush1.bf16.msra.mxu0 0
    %1825 = vmatprep.subr.bf16.mxu0 0
    %1826 = vmatpush1.bf16.msra.mxu0 0
    %1827 = vmatprep.subr.bf16.mxu0 0
    %1828 = vmatpush1.bf16.msra.mxu0 0
    %1829 = vmatprep.mubr.bf16.mxu0 0
    %1830 = vmatmul.mubr.bf16.gmra.mrb[0].mxu0 %v394
    %v1831 = vpop.f32.mrb[0].mxu0
    %v1832 = vadd.f32 %v1668, %v1831
    %v1833 = vpop.f32.mrb[0].mxu0
    %v1834 = vadd.f32 %v1670, %v1833
    %v1835 = vpop.f32.mrb[0].mxu0
    %v1836 = vpop.f32.mrb[0].mxu0
    %1837 = vdwg.mxu0
    %1838 = vmatprep.subr.bf16.mxu0 %v1549
    %1839 = vmatpush1.bf16.msra.mxu0 %v1548
    %1840 = vmatprep.subr.bf16.mxu0 %v1557
    %1841 = vmatpush1.bf16.msra.mxu0 %v1556
    %1842 = vmatprep.subr.bf16.mxu0 %v1565
    %1843 = vmatpush1.bf16.msra.mxu0 %v1564
    %1844 = vmatprep.subr.bf16.mxu0 0
    %1845 = vmatpush1.bf16.msra.mxu0 0
    %1846 = vmatprep.subr.bf16.mxu0 0
    %1847 = vmatpush1.bf16.msra.mxu0 0
    %1848 = vmatprep.subr.bf16.mxu0 0
    %1849 = vmatpush1.bf16.msra.mxu0 0
    %1850 = vmatprep.subr.bf16.mxu0 0
    %1851 = vmatpush1.bf16.msra.mxu0 0
    %1852 = vmatprep.subr.bf16.mxu0 0
    %1853 = vmatpush1.bf16.msra.mxu0 0
    %1854 = vmatprep.subr.bf16.mxu0 0
    %1855 = vmatpush1.bf16.msra.mxu0 0
    %1856 = vmatprep.subr.bf16.mxu0 0
    %1857 = vmatpush1.bf16.msra.mxu0 0
    %1858 = vmatprep.subr.bf16.mxu0 0
    %1859 = vmatpush1.bf16.msra.mxu0 0
    %1860 = vmatprep.subr.bf16.mxu0 0
    %1861 = vmatpush1.bf16.msra.mxu0 0
    %1862 = vmatprep.subr.bf16.mxu0 0
    %1863 = vmatpush1.bf16.msra.mxu0 0
    %1864 = vmatprep.subr.bf16.mxu0 0
    %1865 = vmatpush1.bf16.msra.mxu0 0
    %1866 = vmatprep.subr.bf16.mxu0 0
    %1867 = vmatpush1.bf16.msra.mxu0 0
    %1868 = vmatprep.subr.bf16.mxu0 0
    %1869 = vmatpush1.bf16.msra.mxu0 0
    %1870 = vmatprep.mubr.bf16.mxu0 0
    %1871 = vmatmul.mubr.bf16.gmra.mrb[0].mxu0 %v394
    %v1872 = vpop.f32.mrb[0].mxu0
    %v1873 = vadd.f32 %v1709, %v1872
    %v1874 = vpop.f32.mrb[0].mxu0
    %v1875 = vadd.f32 %v1711, %v1874
    %v1876 = vpop.f32.mrb[0].mxu0
    %v1877 = vpop.f32.mrb[0].mxu0
    %1878 = vdwg.mxu0
    %1879 = vmatprep.subr.bf16.mxu0 %v1551
    %1880 = vmatpush1.bf16.msra.mxu0 %v1550
    %1881 = vmatprep.subr.bf16.mxu0 %v1559
    %1882 = vmatpush1.bf16.msra.mxu0 %v1558
    %1883 = vmatprep.subr.bf16.mxu0 %v1567
    %1884 = vmatpush1.bf16.msra.mxu0 %v1566
    %1885 = vmatprep.subr.bf16.mxu0 0
    %1886 = vmatpush1.bf16.msra.mxu0 0
    %1887 = vmatprep.subr.bf16.mxu0 0
    %1888 = vmatpush1.bf16.msra.mxu0 0
    %1889 = vmatprep.subr.bf16.mxu0 0
    %1890 = vmatpush1.bf16.msra.mxu0 0
    %1891 = vmatprep.subr.bf16.mxu0 0
    %1892 = vmatpush1.bf16.msra.mxu0 0
    %1893 = vmatprep.subr.bf16.mxu0 0
    %1894 = vmatpush1.bf16.msra.mxu0 0
    %1895 = vmatprep.subr.bf16.mxu0 0
    %1896 = vmatpush1.bf16.msra.mxu0 0
    %1897 = vmatprep.subr.bf16.mxu0 0
    %1898 = vmatpush1.bf16.msra.mxu0 0
    %1899 = vmatprep.subr.bf16.mxu0 0
    %1900 = vmatpush1.bf16.msra.mxu0 0
    %1901 = vmatprep.subr.bf16.mxu0 0
    %1902 = vmatpush1.bf16.msra.mxu0 0
    %1903 = vmatprep.subr.bf16.mxu0 0
    %1904 = vmatpush1.bf16.msra.mxu0 0
    %1905 = vmatprep.subr.bf16.mxu0 0
    %1906 = vmatpush1.bf16.msra.mxu0 0
    %1907 = vmatprep.subr.bf16.mxu0 0
    %1908 = vmatpush1.bf16.msra.mxu0 0
    %1909 = vmatprep.subr.bf16.mxu0 0
    %1910 = vmatpush1.bf16.msra.mxu0 0
    %1911 = vmatprep.mubr.bf16.mxu0 0
    %1912 = vmatmul.mubr.bf16.gmra.mrb[0].mxu0 %v394
    %v1913 = vpop.f32.mrb[0].mxu0
    %v1914 = vadd.f32 %v1750, %v1913
    %v1915 = vpop.f32.mrb[0].mxu0
    %v1916 = vadd.f32 %v1752, %v1915
    %v1917 = vpop.f32.mrb[0].mxu0
    %v1918 = vpop.f32.mrb[0].mxu0
    %1919 = vdwg.mxu0
    %1920 = vmatprep.subr.bf16.mxu0 %v1545
    %1921 = vmatpush1.bf16.msra.mxu0 %v1544
    %1922 = vmatprep.subr.bf16.mxu0 %v1553
    %1923 = vmatpush1.bf16.msra.mxu0 %v1552
    %1924 = vmatprep.subr.bf16.mxu0 %v1561
    %1925 = vmatpush1.bf16.msra.mxu0 %v1560
    %1926 = vmatprep.subr.bf16.mxu0 0
    %1927 = vmatpush1.bf16.msra.mxu0 0
    %1928 = vmatprep.subr.bf16.mxu0 0
    %1929 = vmatpush1.bf16.msra.mxu0 0
    %1930 = vmatprep.subr.bf16.mxu0 0
    %1931 = vmatpush1.bf16.msra.mxu0 0
    %1932 = vmatprep.subr.bf16.mxu0 0
    %1933 = vmatpush1.bf16.msra.mxu0 0
    %1934 = vmatprep.subr.bf16.mxu0 0
    %1935 = vmatpush1.bf16.msra.mxu0 0
    %1936 = vmatprep.subr.bf16.mxu0 0
    %1937 = vmatpush1.bf16.msra.mxu0 0
    %1938 = vmatprep.subr.bf16.mxu0 0
    %1939 = vmatpush1.bf16.msra.mxu0 0
    %1940 = vmatprep.subr.bf16.mxu0 0
    %1941 = vmatpush1.bf16.msra.mxu0 0
    %1942 = vmatprep.subr.bf16.mxu0 0
    %1943 = vmatpush1.bf16.msra.mxu0 0
    %1944 = vmatprep.subr.bf16.mxu0 0
    %1945 = vmatpush1.bf16.msra.mxu0 0
    %1946 = vmatprep.subr.bf16.mxu0 0
    %1947 = vmatpush1.bf16.msra.mxu0 0
    %1948 = vmatprep.subr.bf16.mxu0 0
    %1949 = vmatpush1.bf16.msra.mxu0 0
    %1950 = vmatprep.subr.bf16.mxu0 0
    %1951 = vmatpush1.bf16.msra.mxu0 0
    %1952 = vmatprep.mubr.bf16.mxu0 0
    %1953 = vmatmul.mubr.bf16.gmra.mrb[0].mxu0 %v561
    %v1954 = vpop.f32.mrb[0].mxu0
    %v1955 = vadd.f32 0.0, %v1954
    %v1956 = vpop.f32.mrb[0].mxu0
    %v1957 = vadd.f32 0.0, %v1956
    %v1958 = vpop.f32.mrb[0].mxu0
    %v1959 = vpop.f32.mrb[0].mxu0
    %1960 = vdwg.mxu0
    %1961 = vmatprep.subr.bf16.mxu0 %v1547
    %1962 = vmatpush1.bf16.msra.mxu0 %v1546
    %1963 = vmatprep.subr.bf16.mxu0 %v1555
    %1964 = vmatpush1.bf16.msra.mxu0 %v1554
    %1965 = vmatprep.subr.bf16.mxu0 %v1563
    %1966 = vmatpush1.bf16.msra.mxu0 %v1562
    %1967 = vmatprep.subr.bf16.mxu0 0
    %1968 = vmatpush1.bf16.msra.mxu0 0
    %1969 = vmatprep.subr.bf16.mxu0 0
    %1970 = vmatpush1.bf16.msra.mxu0 0
    %1971 = vmatprep.subr.bf16.mxu0 0
    %1972 = vmatpush1.bf16.msra.mxu0 0
    %1973 = vmatprep.subr.bf16.mxu0 0
    %1974 = vmatpush1.bf16.msra.mxu0 0
    %1975 = vmatprep.subr.bf16.mxu0 0
    %1976 = vmatpush1.bf16.msra.mxu0 0
    %1977 = vmatprep.subr.bf16.mxu0 0
    %1978 = vmatpush1.bf16.msra.mxu0 0
    %1979 = vmatprep.subr.bf16.mxu0 0
    %1980 = vmatpush1.bf16.msra.mxu0 0
    %1981 = vmatprep.subr.bf16.mxu0 0
    %1982 = vmatpush1.bf16.msra.mxu0 0
    %1983 = vmatprep.subr.bf16.mxu0 0
    %1984 = vmatpush1.bf16.msra.mxu0 0
    %1985 = vmatprep.subr.bf16.mxu0 0
    %1986 = vmatpush1.bf16.msra.mxu0 0
    %1987 = vmatprep.subr.bf16.mxu0 0
    %1988 = vmatpush1.bf16.msra.mxu0 0
    %1989 = vmatprep.subr.bf16.mxu0 0
    %1990 = vmatpush1.bf16.msra.mxu0 0
    %1991 = vmatprep.subr.bf16.mxu0 0
    %1992 = vmatpush1.bf16.msra.mxu0 0
    %1993 = vmatprep.mubr.bf16.mxu0 0
    %1994 = vmatmul.mubr.bf16.gmra.mrb[0].mxu0 %v561
    %v1995 = vpop.f32.mrb[0].mxu0
    %v1996 = vadd.f32 0.0, %v1995
    %v1997 = vpop.f32.mrb[0].mxu0
    %v1998 = vadd.f32 0.0, %v1997
    %v1999 = vpop.f32.mrb[0].mxu0
    %v2000 = vpop.f32.mrb[0].mxu0
    %2001 = vdwg.mxu0
    %2002 = vmatprep.subr.bf16.mxu0 %v1549
    %2003 = vmatpush1.bf16.msra.mxu0 %v1548
    %2004 = vmatprep.subr.bf16.mxu0 %v1557
    %2005 = vmatpush1.bf16.msra.mxu0 %v1556
    %2006 = vmatprep.subr.bf16.mxu0 %v1565
    %2007 = vmatpush1.bf16.msra.mxu0 %v1564
    %2008 = vmatprep.subr.bf16.mxu0 0
    %2009 = vmatpush1.bf16.msra.mxu0 0
    %2010 = vmatprep.subr.bf16.mxu0 0
    %2011 = vmatpush1.bf16.msra.mxu0 0
    %2012 = vmatprep.subr.bf16.mxu0 0
    %2013 = vmatpush1.bf16.msra.mxu0 0
    %2014 = vmatprep.subr.bf16.mxu0 0
    %2015 = vmatpush1.bf16.msra.mxu0 0
    %2016 = vmatprep.subr.bf16.mxu0 0
    %2017 = vmatpush1.bf16.msra.mxu0 0
    %2018 = vmatprep.subr.bf16.mxu0 0
    %2019 = vmatpush1.bf16.msra.mxu0 0
    %2020 = vmatprep.subr.bf16.mxu0 0
    %2021 = vmatpush1.bf16.msra.mxu0 0
    %2022 = vmatprep.subr.bf16.mxu0 0
    %2023 = vmatpush1.bf16.msra.mxu0 0
    %2024 = vmatprep.subr.bf16.mxu0 0
    %2025 = vmatpush1.bf16.msra.mxu0 0
    %2026 = vmatprep.subr.bf16.mxu0 0
    %2027 = vmatpush1.bf16.msra.mxu0 0
    %2028 = vmatprep.subr.bf16.mxu0 0
    %2029 = vmatpush1.bf16.msra.mxu0 0
    %2030 = vmatprep.subr.bf16.mxu0 0
    %2031 = vmatpush1.bf16.msra.mxu0 0
    %2032 = vmatprep.subr.bf16.mxu0 0
    %2033 = vmatpush1.bf16.msra.mxu0 0
    %2034 = vmatprep.mubr.bf16.mxu0 0
    %2035 = vmatmul.mubr.bf16.gmra.mrb[0].mxu0 %v561
    %v2036 = vpop.f32.mrb[0].mxu0
    %v2037 = vadd.f32 0.0, %v2036
    %v2038 = vpop.f32.mrb[0].mxu0
    %v2039 = vadd.f32 0.0, %v2038
    %v2040 = vpop.f32.mrb[0].mxu0
    %v2041 = vpop.f32.mrb[0].mxu0
    %2042 = vdwg.mxu0
    %2043 = vmatprep.subr.bf16.mxu0 %v1551
    %2044 = vmatpush1.bf16.msra.mxu0 %v1550
    %2045 = vmatprep.subr.bf16.mxu0 %v1559
    %2046 = vmatpush1.bf16.msra.mxu0 %v1558
    %2047 = vmatprep.subr.bf16.mxu0 %v1567
    %2048 = vmatpush1.bf16.msra.mxu0 %v1566
    %2049 = vmatprep.subr.bf16.mxu0 0
    %2050 = vmatpush1.bf16.msra.mxu0 0
    %2051 = vmatprep.subr.bf16.mxu0 0
    %2052 = vmatpush1.bf16.msra.mxu0 0
    %2053 = vmatprep.subr.bf16.mxu0 0
    %2054 = vmatpush1.bf16.msra.mxu0 0
    %2055 = vmatprep.subr.bf16.mxu0 0
    %2056 = vmatpush1.bf16.msra.mxu0 0
    %2057 = vmatprep.subr.bf16.mxu0 0
    %2058 = vmatpush1.bf16.msra.mxu0 0
    %2059 = vmatprep.subr.bf16.mxu0 0
    %2060 = vmatpush1.bf16.msra.mxu0 0
    %2061 = vmatprep.subr.bf16.mxu0 0
    %2062 = vmatpush1.bf16.msra.mxu0 0
    %2063 = vmatprep.subr.bf16.mxu0 0
    %2064 = vmatpush1.bf16.msra.mxu0 0
    %2065 = vmatprep.subr.bf16.mxu0 0
    %2066 = vmatpush1.bf16.msra.mxu0 0
    %2067 = vmatprep.subr.bf16.mxu0 0
    %2068 = vmatpush1.bf16.msra.mxu0 0
    %2069 = vmatprep.subr.bf16.mxu0 0
    %2070 = vmatpush1.bf16.msra.mxu0 0
    %2071 = vmatprep.subr.bf16.mxu0 0
    %2072 = vmatpush1.bf16.msra.mxu0 0
    %2073 = vmatprep.subr.bf16.mxu0 0
    %2074 = vmatpush1.bf16.msra.mxu0 0
    %2075 = vmatprep.mubr.bf16.mxu0 0
    %2076 = vmatmul.mubr.bf16.gmra.mrb[0].mxu0 %v561
    %v2077 = vpop.f32.mrb[0].mxu0
    %v2078 = vadd.f32 0.0, %v2077
    %v2079 = vpop.f32.mrb[0].mxu0
    %v2080 = vadd.f32 0.0, %v2079
    %v2081 = vpop.f32.mrb[0].mxu0
    %v2082 = vpop.f32.mrb[0].mxu0
    %2083 = vdwg.mxu0
    %v2084 = vadd.f32 %v1791, %v1955
    %v2085 = vadd.f32 %v1793, %v1957
    %v2086 = vadd.f32 %v1832, %v1996
    %v2087 = vadd.f32 %v1834, %v1998
    %v2088 = vadd.f32 %v1873, %v2037
    %v2089 = vadd.f32 %v1875, %v2039
    %v2090 = vadd.f32 %v1914, %v2078
    %v2091 = vadd.f32 %v1916, %v2080
    %v2092 = vmax.f32 %v2084, %v2085
    %v2093 = vmax.f32 %v2086, %v2087
    %v2094 = vmax.f32 %v2092, %v2093
    %s2095 = scalar_lea.vmem [#allocation8], 32
    %v2096 = vld [vmem:[%s2095] sm:$0xff]
    %v2097 = vmul.f32 %v2096, %v1442
    %v2098 = vadd.f32 %v2094, %v75
    %v2099 = vadd.f32 %v2097, %v2098
    %v2100 = vsub.f32 %v2099, 1.0
    %vm2101 = vcmp.gt.f32.partialorder %v2100, 0.0
    %v2102 = vsel %vm2101, 1, 0
    %v2103 = vcvt.s32.f32 %v2102
    %v2104 = vsub.f32 %v2099, %v2103
    %v2105 = vpack.c.bf16 %v2103, %v2103
    %s2106 = scalar_lea.vmem [#allocation10], 16
    %2107 = vst [vmem:[%s2106] sm:$0xf] %v2105
    %s2108 = scalar_lea.vmem [#allocation11], 32
    %2109 = vst [vmem:[%s2108] sm:$0xff] %v2104
    %v2110 = vmax.f32 %v2088, %v2089
    %v2111 = vmax.f32 %v2090, %v2091
    %v2112 = vmax.f32 %v2110, %v2111
    %s2113 = scalar_lea.vmem [#allocation8], 40
    %v2114 = vld [vmem:[%s2113] sm:$0xff]
    %v2115 = vmul.f32 %v2114, %v2104
    %v2116 = vadd.f32 %v2112, %v75
    %v2117 = vadd.f32 %v2115, %v2116
    %v2118 = vsub.f32 %v2117, 1.0
    %vm2119 = vcmp.gt.f32.partialorder %v2118, 0.0
    %v2120 = vsel %vm2119, 1, 0
    %v2121 = vcvt.s32.f32 %v2120
    %v2122 = vsub.f32 %v2117, %v2121
    %v2123 = vpack.c.bf16 %v2121, %v2121
    %s2124 = scalar_lea.vmem [#allocation10], 20
    %2125 = vst [vmem:[%s2124] sm:$0xf] %v2123
    %s2126 = scalar_lea.vmem [#allocation11], 40
    %2127 = vst [vmem:[%s2126] sm:$0xff] %v2122
    %v2128 = vld [vmem:[#allocation2 + $0x60] sm:$0xff]
    %v2129 = vld [vmem:[#allocation2 + $0x68] sm:$0xff]
    %v2130 = vld [vmem:[#allocation2 + $0x70] sm:$0xff]
    %v2131 = vld [vmem:[#allocation2 + $0x78] sm:$0xff]
    %v2132 = vld [vmem:[#allocation2 + $0xe0] sm:$0xff]
    %v2133 = vld [vmem:[#allocation2 + $0xe8] sm:$0xff]
    %v2134 = vld [vmem:[#allocation2 + $0xf0] sm:$0xff]
    %v2135 = vld [vmem:[#allocation2 + $0xf8] sm:$0xff]
    %v2136 = vld [vmem:[#allocation2 + $0x160] sm:$0xff]
    %v2137 = vld [vmem:[#allocation2 + $0x168] sm:$0xff]
    %v2138 = vld [vmem:[#allocation2 + $0x170] sm:$0xff]
    %v2139 = vld [vmem:[#allocation2 + $0x178] sm:$0xff]
    %v2140 = vld [vmem:[#allocation2 + $0x1e0] sm:$0xff]
    %v2141 = vld [vmem:[#allocation2 + $0x1e8] sm:$0xff]
    %v2142 = vld [vmem:[#allocation2 + $0x1f0] sm:$0xff]
    %v2143 = vld [vmem:[#allocation2 + $0x1f8] sm:$0xff]
    %v2144 = vld [vmem:[#allocation2 + $0x260] sm:$0xff]
    %v2145 = vld [vmem:[#allocation2 + $0x268] sm:$0xff]
    %v2146 = vld [vmem:[#allocation2 + $0x270] sm:$0xff]
    %v2147 = vld [vmem:[#allocation2 + $0x278] sm:$0xff]
    %v2148 = vld [vmem:[#allocation2 + $0x2e0] sm:$0xff]
    %v2149 = vld [vmem:[#allocation2 + $0x2e8] sm:$0xff]
    %v2150 = vld [vmem:[#allocation2 + $0x2f0] sm:$0xff]
    %v2151 = vld [vmem:[#allocation2 + $0x2f8] sm:$0xff]
    %v2176 = vunpack.c.l.b16 %v2128
    %v2177 = vunpack.c.h.b16 %v2128
    %v2178 = vunpack.c.l.b16 %v2129
    %v2179 = vunpack.c.h.b16 %v2129
    %v2180 = vunpack.c.l.b16 %v2130
    %v2181 = vunpack.c.h.b16 %v2130
    %v2182 = vunpack.c.l.b16 %v2131
    %v2183 = vunpack.c.h.b16 %v2131
    %v2184 = vunpack.c.l.b16 %v2132
    %v2185 = vunpack.c.h.b16 %v2132
    %v2186 = vunpack.c.l.b16 %v2133
    %v2187 = vunpack.c.h.b16 %v2133
    %v2188 = vunpack.c.l.b16 %v2134
    %v2189 = vunpack.c.h.b16 %v2134
    %v2190 = vunpack.c.l.b16 %v2135
    %v2191 = vunpack.c.h.b16 %v2135
    %v2192 = vunpack.c.l.b16 %v2136
    %v2193 = vunpack.c.h.b16 %v2136
    %v2194 = vunpack.c.l.b16 %v2137
    %v2195 = vunpack.c.h.b16 %v2137
    %v2196 = vunpack.c.l.b16 %v2138
    %v2197 = vunpack.c.h.b16 %v2138
    %v2198 = vunpack.c.l.b16 %v2139
    %v2199 = vunpack.c.h.b16 %v2139
    %v2200 = vunpack.c.l.b16 %v2140
    %v2201 = vunpack.c.h.b16 %v2140
    %v2202 = vunpack.c.l.b16 %v2141
    %v2203 = vunpack.c.h.b16 %v2141
    %v2204 = vunpack.c.l.b16 %v2142
    %v2205 = vunpack.c.h.b16 %v2142
    %v2206 = vunpack.c.l.b16 %v2143
    %v2207 = vunpack.c.h.b16 %v2143
    %v2208 = vunpack.c.l.b16 %v2144
    %v2209 = vunpack.c.h.b16 %v2144
    %v2210 = vunpack.c.l.b16 %v2145
    %v2211 = vunpack.c.h.b16 %v2145
    %v2212 = vunpack.c.l.b16 %v2146
    %v2213 = vunpack.c.h.b16 %v2146
    %v2214 = vunpack.c.l.b16 %v2147
    %v2215 = vunpack.c.h.b16 %v2147
    %v2216 = vunpack.c.l.b16 %v2148
    %v2217 = vunpack.c.h.b16 %v2148
    %v2218 = vunpack.c.l.b16 %v2149
    %v2219 = vunpack.c.h.b16 %v2149
    %v2220 = vunpack.c.l.b16 %v2150
    %v2221 = vunpack.c.h.b16 %v2150
    %v2222 = vunpack.c.l.b16 %v2151
    %v2223 = vunpack.c.h.b16 %v2151
    %v2224 = vpack.c.b16 %v2184, %v2176
    %v2225 = vpack.c.b16 %v2185, %v2177
    %v2226 = vpack.c.b16 %v2186, %v2178
    %v2227 = vpack.c.b16 %v2187, %v2179
    %v2228 = vpack.c.b16 %v2188, %v2180
    %v2229 = vpack.c.b16 %v2189, %v2181
    %v2230 = vpack.c.b16 %v2190, %v2182
    %v2231 = vpack.c.b16 %v2191, %v2183
    %v2232 = vpack.c.b16 %v2200, %v2192
    %v2233 = vpack.c.b16 %v2201, %v2193
    %v2234 = vpack.c.b16 %v2202, %v2194
    %v2235 = vpack.c.b16 %v2203, %v2195
    %v2236 = vpack.c.b16 %v2204, %v2196
    %v2237 = vpack.c.b16 %v2205, %v2197
    %v2238 = vpack.c.b16 %v2206, %v2198
    %v2239 = vpack.c.b16 %v2207, %v2199
    %v2240 = vpack.c.b16 %v2216, %v2208
    %v2241 = vpack.c.b16 %v2217, %v2209
    %v2242 = vpack.c.b16 %v2218, %v2210
    %v2243 = vpack.c.b16 %v2219, %v2211
    %v2244 = vpack.c.b16 %v2220, %v2212
    %v2245 = vpack.c.b16 %v2221, %v2213
    %v2246 = vpack.c.b16 %v2222, %v2214
    %v2247 = vpack.c.b16 %v2223, %v2215
    %2272 = vmatprep.subr.bf16.mxu0 %v2225
    %2273 = vmatpush1.bf16.msra.mxu0 %v2224
    %2274 = vmatprep.subr.bf16.mxu0 %v2233
    %2275 = vmatpush1.bf16.msra.mxu0 %v2232
    %2276 = vmatprep.subr.bf16.mxu0 %v2241
    %2277 = vmatpush1.bf16.msra.mxu0 %v2240
    %2278 = vmatprep.subr.bf16.mxu0 0
    %2279 = vmatpush1.bf16.msra.mxu0 0
    %2280 = vmatprep.subr.bf16.mxu0 0
    %2281 = vmatpush1.bf16.msra.mxu0 0
    %2282 = vmatprep.subr.bf16.mxu0 0
    %2283 = vmatpush1.bf16.msra.mxu0 0
    %2284 = vmatprep.subr.bf16.mxu0 0
    %2285 = vmatpush1.bf16.msra.mxu0 0
    %2286 = vmatprep.subr.bf16.mxu0 0
    %2287 = vmatpush1.bf16.msra.mxu0 0
    %2288 = vmatprep.subr.bf16.mxu0 0
    %2289 = vmatpush1.bf16.msra.mxu0 0
    %2290 = vmatprep.subr.bf16.mxu0 0
    %2291 = vmatpush1.bf16.msra.mxu0 0
    %2292 = vmatprep.subr.bf16.mxu0 0
    %2293 = vmatpush1.bf16.msra.mxu0 0
    %2294 = vmatprep.subr.bf16.mxu0 0
    %2295 = vmatpush1.bf16.msra.mxu0 0
    %2296 = vmatprep.subr.bf16.mxu0 0
    %2297 = vmatpush1.bf16.msra.mxu0 0
    %2298 = vmatprep.subr.bf16.mxu0 0
    %2299 = vmatpush1.bf16.msra.mxu0 0
    %2300 = vmatprep.subr.bf16.mxu0 0
    %2301 = vmatpush1.bf16.msra.mxu0 0
    %2302 = vmatprep.subr.bf16.mxu0 0
    %2303 = vmatpush1.bf16.msra.mxu0 0
    %2304 = vmatprep.mubr.bf16.mxu0 0
    %2305 = vmatmul.mubr.bf16.gmra.mrb[0].mxu0 %v227
    %v2306 = vpop.f32.mrb[0].mxu0
    %v2307 = vadd.f32 0.0, %v2306
    %v2308 = vpop.f32.mrb[0].mxu0
    %v2309 = vadd.f32 0.0, %v2308
    %v2310 = vpop.f32.mrb[0].mxu0
    %v2311 = vpop.f32.mrb[0].mxu0
    %2312 = vdwg.mxu0
    %2313 = vmatprep.subr.bf16.mxu0 %v2227
    %2314 = vmatpush1.bf16.msra.mxu0 %v2226
    %2315 = vmatprep.subr.bf16.mxu0 %v2235
    %2316 = vmatpush1.bf16.msra.mxu0 %v2234
    %2317 = vmatprep.subr.bf16.mxu0 %v2243
    %2318 = vmatpush1.bf16.msra.mxu0 %v2242
    %2319 = vmatprep.subr.bf16.mxu0 0
    %2320 = vmatpush1.bf16.msra.mxu0 0
    %2321 = vmatprep.subr.bf16.mxu0 0
    %2322 = vmatpush1.bf16.msra.mxu0 0
    %2323 = vmatprep.subr.bf16.mxu0 0
    %2324 = vmatpush1.bf16.msra.mxu0 0
    %2325 = vmatprep.subr.bf16.mxu0 0
    %2326 = vmatpush1.bf16.msra.mxu0 0
    %2327 = vmatprep.subr.bf16.mxu0 0
    %2328 = vmatpush1.bf16.msra.mxu0 0
    %2329 = vmatprep.subr.bf16.mxu0 0
    %2330 = vmatpush1.bf16.msra.mxu0 0
    %2331 = vmatprep.subr.bf16.mxu0 0
    %2332 = vmatpush1.bf16.msra.mxu0 0
    %2333 = vmatprep.subr.bf16.mxu0 0
    %2334 = vmatpush1.bf16.msra.mxu0 0
    %2335 = vmatprep.subr.bf16.mxu0 0
    %2336 = vmatpush1.bf16.msra.mxu0 0
    %2337 = vmatprep.subr.bf16.mxu0 0
    %2338 = vmatpush1.bf16.msra.mxu0 0
    %2339 = vmatprep.subr.bf16.mxu0 0
    %2340 = vmatpush1.bf16.msra.mxu0 0
    %2341 = vmatprep.subr.bf16.mxu0 0
    %2342 = vmatpush1.bf16.msra.mxu0 0
    %2343 = vmatprep.subr.bf16.mxu0 0
    %2344 = vmatpush1.bf16.msra.mxu0 0
    %2345 = vmatprep.mubr.bf16.mxu0 0
    %2346 = vmatmul.mubr.bf16.gmra.mrb[0].mxu0 %v227
    %v2347 = vpop.f32.mrb[0].mxu0
    %v2348 = vadd.f32 0.0, %v2347
    %v2349 = vpop.f32.mrb[0].mxu0
    %v2350 = vadd.f32 0.0, %v2349
    %v2351 = vpop.f32.mrb[0].mxu0
    %v2352 = vpop.f32.mrb[0].mxu0
    %2353 = vdwg.mxu0
    %2354 = vmatprep.subr.bf16.mxu0 %v2229
    %2355 = vmatpush1.bf16.msra.mxu0 %v2228
    %2356 = vmatprep.subr.bf16.mxu0 %v2237
    %2357 = vmatpush1.bf16.msra.mxu0 %v2236
    %2358 = vmatprep.subr.bf16.mxu0 %v2245
    %2359 = vmatpush1.bf16.msra.mxu0 %v2244
    %2360 = vmatprep.subr.bf16.mxu0 0
    %2361 = vmatpush1.bf16.msra.mxu0 0
    %2362 = vmatprep.subr.bf16.mxu0 0
    %2363 = vmatpush1.bf16.msra.mxu0 0
    %2364 = vmatprep.subr.bf16.mxu0 0
    %2365 = vmatpush1.bf16.msra.mxu0 0
    %2366 = vmatprep.subr.bf16.mxu0 0
    %2367 = vmatpush1.bf16.msra.mxu0 0
    %2368 = vmatprep.subr.bf16.mxu0 0
    %2369 = vmatpush1.bf16.msra.mxu0 0
    %2370 = vmatprep.subr.bf16.mxu0 0
    %2371 = vmatpush1.bf16.msra.mxu0 0
    %2372 = vmatprep.subr.bf16.mxu0 0
    %2373 = vmatpush1.bf16.msra.mxu0 0
    %2374 = vmatprep.subr.bf16.mxu0 0
    %2375 = vmatpush1.bf16.msra.mxu0 0
    %2376 = vmatprep.subr.bf16.mxu0 0
    %2377 = vmatpush1.bf16.msra.mxu0 0
    %2378 = vmatprep.subr.bf16.mxu0 0
    %2379 = vmatpush1.bf16.msra.mxu0 0
    %2380 = vmatprep.subr.bf16.mxu0 0
    %2381 = vmatpush1.bf16.msra.mxu0 0
    %2382 = vmatprep.subr.bf16.mxu0 0
    %2383 = vmatpush1.bf16.msra.mxu0 0
    %2384 = vmatprep.subr.bf16.mxu0 0
    %2385 = vmatpush1.bf16.msra.mxu0 0
    %2386 = vmatprep.mubr.bf16.mxu0 0
    %2387 = vmatmul.mubr.bf16.gmra.mrb[0].mxu0 %v227
    %v2388 = vpop.f32.mrb[0].mxu0
    %v2389 = vadd.f32 0.0, %v2388
    %v2390 = vpop.f32.mrb[0].mxu0
    %v2391 = vadd.f32 0.0, %v2390
    %v2392 = vpop.f32.mrb[0].mxu0
    %v2393 = vpop.f32.mrb[0].mxu0
    %2394 = vdwg.mxu0
    %2395 = vmatprep.subr.bf16.mxu0 %v2231
    %2396 = vmatpush1.bf16.msra.mxu0 %v2230
    %2397 = vmatprep.subr.bf16.mxu0 %v2239
    %2398 = vmatpush1.bf16.msra.mxu0 %v2238
    %2399 = vmatprep.subr.bf16.mxu0 %v2247
    %2400 = vmatpush1.bf16.msra.mxu0 %v2246
    %2401 = vmatprep.subr.bf16.mxu0 0
    %2402 = vmatpush1.bf16.msra.mxu0 0
    %2403 = vmatprep.subr.bf16.mxu0 0
    %2404 = vmatpush1.bf16.msra.mxu0 0
    %2405 = vmatprep.subr.bf16.mxu0 0
    %2406 = vmatpush1.bf16.msra.mxu0 0
    %2407 = vmatprep.subr.bf16.mxu0 0
    %2408 = vmatpush1.bf16.msra.mxu0 0
    %2409 = vmatprep.subr.bf16.mxu0 0
    %2410 = vmatpush1.bf16.msra.mxu0 0
    %2411 = vmatprep.subr.bf16.mxu0 0
    %2412 = vmatpush1.bf16.msra.mxu0 0
    %2413 = vmatprep.subr.bf16.mxu0 0
    %2414 = vmatpush1.bf16.msra.mxu0 0
    %2415 = vmatprep.subr.bf16.mxu0 0
    %2416 = vmatpush1.bf16.msra.mxu0 0
    %2417 = vmatprep.subr.bf16.mxu0 0
    %2418 = vmatpush1.bf16.msra.mxu0 0
    %2419 = vmatprep.subr.bf16.mxu0 0
    %2420 = vmatpush1.bf16.msra.mxu0 0
    %2421 = vmatprep.subr.bf16.mxu0 0
    %2422 = vmatpush1.bf16.msra.mxu0 0
    %2423 = vmatprep.subr.bf16.mxu0 0
    %2424 = vmatpush1.bf16.msra.mxu0 0
    %2425 = vmatprep.subr.bf16.mxu0 0
    %2426 = vmatpush1.bf16.msra.mxu0 0
    %2427 = vmatprep.mubr.bf16.mxu0 0
    %2428 = vmatmul.mubr.bf16.gmra.mrb[0].mxu0 %v227
    %v2429 = vpop.f32.mrb[0].mxu0
    %v2430 = vadd.f32 0.0, %v2429
    %v2431 = vpop.f32.mrb[0].mxu0
    %v2432 = vadd.f32 0.0, %v2431
    %v2433 = vpop.f32.mrb[0].mxu0
    %v2434 = vpop.f32.mrb[0].mxu0
    %2435 = vdwg.mxu0
    %2436 = vmatprep.subr.bf16.mxu0 %v2225
    %2437 = vmatpush1.bf16.msra.mxu0 %v2224
    %2438 = vmatprep.subr.bf16.mxu0 %v2233
    %2439 = vmatpush1.bf16.msra.mxu0 %v2232
    %2440 = vmatprep.subr.bf16.mxu0 %v2241
    %2441 = vmatpush1.bf16.msra.mxu0 %v2240
    %2442 = vmatprep.subr.bf16.mxu0 0
    %2443 = vmatpush1.bf16.msra.mxu0 0
    %2444 = vmatprep.subr.bf16.mxu0 0
    %2445 = vmatpush1.bf16.msra.mxu0 0
    %2446 = vmatprep.subr.bf16.mxu0 0
    %2447 = vmatpush1.bf16.msra.mxu0 0
    %2448 = vmatprep.subr.bf16.mxu0 0
    %2449 = vmatpush1.bf16.msra.mxu0 0
    %2450 = vmatprep.subr.bf16.mxu0 0
    %2451 = vmatpush1.bf16.msra.mxu0 0
    %2452 = vmatprep.subr.bf16.mxu0 0
    %2453 = vmatpush1.bf16.msra.mxu0 0
    %2454 = vmatprep.subr.bf16.mxu0 0
    %2455 = vmatpush1.bf16.msra.mxu0 0
    %2456 = vmatprep.subr.bf16.mxu0 0
    %2457 = vmatpush1.bf16.msra.mxu0 0
    %2458 = vmatprep.subr.bf16.mxu0 0
    %2459 = vmatpush1.bf16.msra.mxu0 0
    %2460 = vmatprep.subr.bf16.mxu0 0
    %2461 = vmatpush1.bf16.msra.mxu0 0
    %2462 = vmatprep.subr.bf16.mxu0 0
    %2463 = vmatpush1.bf16.msra.mxu0 0
    %2464 = vmatprep.subr.bf16.mxu0 0
    %2465 = vmatpush1.bf16.msra.mxu0 0
    %2466 = vmatprep.subr.bf16.mxu0 0
    %2467 = vmatpush1.bf16.msra.mxu0 0
    %2468 = vmatprep.mubr.bf16.mxu0 0
    %2469 = vmatmul.mubr.bf16.gmra.mrb[0].mxu0 %v394
    %v2470 = vpop.f32.mrb[0].mxu0
    %v2471 = vadd.f32 %v2307, %v2470
    %v2472 = vpop.f32.mrb[0].mxu0
    %v2473 = vadd.f32 %v2309, %v2472
    %v2474 = vpop.f32.mrb[0].mxu0
    %v2475 = vpop.f32.mrb[0].mxu0
    %2476 = vdwg.mxu0
    %2477 = vmatprep.subr.bf16.mxu0 %v2227
    %2478 = vmatpush1.bf16.msra.mxu0 %v2226
    %2479 = vmatprep.subr.bf16.mxu0 %v2235
    %2480 = vmatpush1.bf16.msra.mxu0 %v2234
    %2481 = vmatprep.subr.bf16.mxu0 %v2243
    %2482 = vmatpush1.bf16.msra.mxu0 %v2242
    %2483 = vmatprep.subr.bf16.mxu0 0
    %2484 = vmatpush1.bf16.msra.mxu0 0
    %2485 = vmatprep.subr.bf16.mxu0 0
    %2486 = vmatpush1.bf16.msra.mxu0 0
    %2487 = vmatprep.subr.bf16.mxu0 0
    %2488 = vmatpush1.bf16.msra.mxu0 0
    %2489 = vmatprep.subr.bf16.mxu0 0
    %2490 = vmatpush1.bf16.msra.mxu0 0
    %2491 = vmatprep.subr.bf16.mxu0 0
    %2492 = vmatpush1.bf16.msra.mxu0 0
    %2493 = vmatprep.subr.bf16.mxu0 0
    %2494 = vmatpush1.bf16.msra.mxu0 0
    %2495 = vmatprep.subr.bf16.mxu0 0
    %2496 = vmatpush1.bf16.msra.mxu0 0
    %2497 = vmatprep.subr.bf16.mxu0 0
    %2498 = vmatpush1.bf16.msra.mxu0 0
    %2499 = vmatprep.subr.bf16.mxu0 0
    %2500 = vmatpush1.bf16.msra.mxu0 0
    %2501 = vmatprep.subr.bf16.mxu0 0
    %2502 = vmatpush1.bf16.msra.mxu0 0
    %2503 = vmatprep.subr.bf16.mxu0 0
    %2504 = vmatpush1.bf16.msra.mxu0 0
    %2505 = vmatprep.subr.bf16.mxu0 0
    %2506 = vmatpush1.bf16.msra.mxu0 0
    %2507 = vmatprep.subr.bf16.mxu0 0
    %2508 = vmatpush1.bf16.msra.mxu0 0
    %2509 = vmatprep.mubr.bf16.mxu0 0
    %2510 = vmatmul.mubr.bf16.gmra.mrb[0].mxu0 %v394
    %v2511 = vpop.f32.mrb[0].mxu0
    %v2512 = vadd.f32 %v2348, %v2511
    %v2513 = vpop.f32.mrb[0].mxu0
    %v2514 = vadd.f32 %v2350, %v2513
    %v2515 = vpop.f32.mrb[0].mxu0
    %v2516 = vpop.f32.mrb[0].mxu0
    %2517 = vdwg.mxu0
    %2518 = vmatprep.subr.bf16.mxu0 %v2229
    %2519 = vmatpush1.bf16.msra.mxu0 %v2228
    %2520 = vmatprep.subr.bf16.mxu0 %v2237
    %2521 = vmatpush1.bf16.msra.mxu0 %v2236
    %2522 = vmatprep.subr.bf16.mxu0 %v2245
    %2523 = vmatpush1.bf16.msra.mxu0 %v2244
    %2524 = vmatprep.subr.bf16.mxu0 0
    %2525 = vmatpush1.bf16.msra.mxu0 0
    %2526 = vmatprep.subr.bf16.mxu0 0
    %2527 = vmatpush1.bf16.msra.mxu0 0
    %2528 = vmatprep.subr.bf16.mxu0 0
    %2529 = vmatpush1.bf16.msra.mxu0 0
    %2530 = vmatprep.subr.bf16.mxu0 0
    %2531 = vmatpush1.bf16.msra.mxu0 0
    %2532 = vmatprep.subr.bf16.mxu0 0
    %2533 = vmatpush1.bf16.msra.mxu0 0
    %2534 = vmatprep.subr.bf16.mxu0 0
    %2535 = vmatpush1.bf16.msra.mxu0 0
    %2536 = vmatprep.subr.bf16.mxu0 0
    %2537 = vmatpush1.bf16.msra.mxu0 0
    %2538 = vmatprep.subr.bf16.mxu0 0
    %2539 = vmatpush1.bf16.msra.mxu0 0
    %2540 = vmatprep.subr.bf16.mxu0 0
    %2541 = vmatpush1.bf16.msra.mxu0 0
    %2542 = vmatprep.subr.bf16.mxu0 0
    %2543 = vmatpush1.bf16.msra.mxu0 0
    %2544 = vmatprep.subr.bf16.mxu0 0
    %2545 = vmatpush1.bf16.msra.mxu0 0
    %2546 = vmatprep.subr.bf16.mxu0 0
    %2547 = vmatpush1.bf16.msra.mxu0 0
    %2548 = vmatprep.subr.bf16.mxu0 0
    %2549 = vmatpush1.bf16.msra.mxu0 0
    %2550 = vmatprep.mubr.bf16.mxu0 0
    %2551 = vmatmul.mubr.bf16.gmra.mrb[0].mxu0 %v394
    %v2552 = vpop.f32.mrb[0].mxu0
    %v2553 = vadd.f32 %v2389, %v2552
    %v2554 = vpop.f32.mrb[0].mxu0
    %v2555 = vadd.f32 %v2391, %v2554
    %v2556 = vpop.f32.mrb[0].mxu0
    %v2557 = vpop.f32.mrb[0].mxu0
    %2558 = vdwg.mxu0
    %2559 = vmatprep.subr.bf16.mxu0 %v2231
    %2560 = vmatpush1.bf16.msra.mxu0 %v2230
    %2561 = vmatprep.subr.bf16.mxu0 %v2239
    %2562 = vmatpush1.bf16.msra.mxu0 %v2238
    %2563 = vmatprep.subr.bf16.mxu0 %v2247
    %2564 = vmatpush1.bf16.msra.mxu0 %v2246
    %2565 = vmatprep.subr.bf16.mxu0 0
    %2566 = vmatpush1.bf16.msra.mxu0 0
    %2567 = vmatprep.subr.bf16.mxu0 0
    %2568 = vmatpush1.bf16.msra.mxu0 0
    %2569 = vmatprep.subr.bf16.mxu0 0
    %2570 = vmatpush1.bf16.msra.mxu0 0
    %2571 = vmatprep.subr.bf16.mxu0 0
    %2572 = vmatpush1.bf16.msra.mxu0 0
    %2573 = vmatprep.subr.bf16.mxu0 0
    %2574 = vmatpush1.bf16.msra.mxu0 0
    %2575 = vmatprep.subr.bf16.mxu0 0
    %2576 = vmatpush1.bf16.msra.mxu0 0
    %2577 = vmatprep.subr.bf16.mxu0 0
    %2578 = vmatpush1.bf16.msra.mxu0 0
    %2579 = vmatprep.subr.bf16.mxu0 0
    %2580 = vmatpush1.bf16.msra.mxu0 0
    %2581 = vmatprep.subr.bf16.mxu0 0
    %2582 = vmatpush1.bf16.msra.mxu0 0
    %2583 = vmatprep.subr.bf16.mxu0 0
    %2584 = vmatpush1.bf16.msra.mxu0 0
    %2585 = vmatprep.subr.bf16.mxu0 0
    %2586 = vmatpush1.bf16.msra.mxu0 0
    %2587 = vmatprep.subr.bf16.mxu0 0
    %2588 = vmatpush1.bf16.msra.mxu0 0
    %2589 = vmatprep.subr.bf16.mxu0 0
    %2590 = vmatpush1.bf16.msra.mxu0 0
    %2591 = vmatprep.mubr.bf16.mxu0 0
    %2592 = vmatmul.mubr.bf16.gmra.mrb[0].mxu0 %v394
    %v2593 = vpop.f32.mrb[0].mxu0
    %v2594 = vadd.f32 %v2430, %v2593
    %v2595 = vpop.f32.mrb[0].mxu0
    %v2596 = vadd.f32 %v2432, %v2595
    %v2597 = vpop.f32.mrb[0].mxu0
    %v2598 = vpop.f32.mrb[0].mxu0
    %2599 = vdwg.mxu0
    %2600 = vmatprep.subr.bf16.mxu0 %v2225
    %2601 = vmatpush1.bf16.msra.mxu0 %v2224
    %2602 = vmatprep.subr.bf16.mxu0 %v2233
    %2603 = vmatpush1.bf16.msra.mxu0 %v2232
    %2604 = vmatprep.subr.bf16.mxu0 %v2241
    %2605 = vmatpush1.bf16.msra.mxu0 %v2240
    %2606 = vmatprep.subr.bf16.mxu0 0
    %2607 = vmatpush1.bf16.msra.mxu0 0
    %2608 = vmatprep.subr.bf16.mxu0 0
    %2609 = vmatpush1.bf16.msra.mxu0 0
    %2610 = vmatprep.subr.bf16.mxu0 0
    %2611 = vmatpush1.bf16.msra.mxu0 0
    %2612 = vmatprep.subr.bf16.mxu0 0
    %2613 = vmatpush1.bf16.msra.mxu0 0
    %2614 = vmatprep.subr.bf16.mxu0 0
    %2615 = vmatpush1.bf16.msra.mxu0 0
    %2616 = vmatprep.subr.bf16.mxu0 0
    %2617 = vmatpush1.bf16.msra.mxu0 0
    %2618 = vmatprep.subr.bf16.mxu0 0
    %2619 = vmatpush1.bf16.msra.mxu0 0
    %2620 = vmatprep.subr.bf16.mxu0 0
    %2621 = vmatpush1.bf16.msra.mxu0 0
    %2622 = vmatprep.subr.bf16.mxu0 0
    %2623 = vmatpush1.bf16.msra.mxu0 0
    %2624 = vmatprep.subr.bf16.mxu0 0
    %2625 = vmatpush1.bf16.msra.mxu0 0
    %2626 = vmatprep.subr.bf16.mxu0 0
    %2627 = vmatpush1.bf16.msra.mxu0 0
    %2628 = vmatprep.subr.bf16.mxu0 0
    %2629 = vmatpush1.bf16.msra.mxu0 0
    %2630 = vmatprep.subr.bf16.mxu0 0
    %2631 = vmatpush1.bf16.msra.mxu0 0
    %2632 = vmatprep.mubr.bf16.mxu0 0
    %2633 = vmatmul.mubr.bf16.gmra.mrb[0].mxu0 %v561
    %v2634 = vpop.f32.mrb[0].mxu0
    %v2635 = vadd.f32 0.0, %v2634
    %v2636 = vpop.f32.mrb[0].mxu0
    %v2637 = vadd.f32 0.0, %v2636
    %v2638 = vpop.f32.mrb[0].mxu0
    %v2639 = vpop.f32.mrb[0].mxu0
    %2640 = vdwg.mxu0
    %2641 = vmatprep.subr.bf16.mxu0 %v2227
    %2642 = vmatpush1.bf16.msra.mxu0 %v2226
    %2643 = vmatprep.subr.bf16.mxu0 %v2235
    %2644 = vmatpush1.bf16.msra.mxu0 %v2234
    %2645 = vmatprep.subr.bf16.mxu0 %v2243
    %2646 = vmatpush1.bf16.msra.mxu0 %v2242
    %2647 = vmatprep.subr.bf16.mxu0 0
    %2648 = vmatpush1.bf16.msra.mxu0 0
    %2649 = vmatprep.subr.bf16.mxu0 0
    %2650 = vmatpush1.bf16.msra.mxu0 0
    %2651 = vmatprep.subr.bf16.mxu0 0
    %2652 = vmatpush1.bf16.msra.mxu0 0
    %2653 = vmatprep.subr.bf16.mxu0 0
    %2654 = vmatpush1.bf16.msra.mxu0 0
    %2655 = vmatprep.subr.bf16.mxu0 0
    %2656 = vmatpush1.bf16.msra.mxu0 0
    %2657 = vmatprep.subr.bf16.mxu0 0
    %2658 = vmatpush1.bf16.msra.mxu0 0
    %2659 = vmatprep.subr.bf16.mxu0 0
    %2660 = vmatpush1.bf16.msra.mxu0 0
    %2661 = vmatprep.subr.bf16.mxu0 0
    %2662 = vmatpush1.bf16.msra.mxu0 0
    %2663 = vmatprep.subr.bf16.mxu0 0
    %2664 = vmatpush1.bf16.msra.mxu0 0
    %2665 = vmatprep.subr.bf16.mxu0 0
    %2666 = vmatpush1.bf16.msra.mxu0 0
    %2667 = vmatprep.subr.bf16.mxu0 0
    %2668 = vmatpush1.bf16.msra.mxu0 0
    %2669 = vmatprep.subr.bf16.mxu0 0
    %2670 = vmatpush1.bf16.msra.mxu0 0
    %2671 = vmatprep.subr.bf16.mxu0 0
    %2672 = vmatpush1.bf16.msra.mxu0 0
    %2673 = vmatprep.mubr.bf16.mxu0 0
    %2674 = vmatmul.mubr.bf16.gmra.mrb[0].mxu0 %v561
    %v2675 = vpop.f32.mrb[0].mxu0
    %v2676 = vadd.f32 0.0, %v2675
    %v2677 = vpop.f32.mrb[0].mxu0
    %v2678 = vadd.f32 0.0, %v2677
    %v2679 = vpop.f32.mrb[0].mxu0
    %v2680 = vpop.f32.mrb[0].mxu0
    %2681 = vdwg.mxu0
    %2682 = vmatprep.subr.bf16.mxu0 %v2229
    %2683 = vmatpush1.bf16.msra.mxu0 %v2228
    %2684 = vmatprep.subr.bf16.mxu0 %v2237
    %2685 = vmatpush1.bf16.msra.mxu0 %v2236
    %2686 = vmatprep.subr.bf16.mxu0 %v2245
    %2687 = vmatpush1.bf16.msra.mxu0 %v2244
    %2688 = vmatprep.subr.bf16.mxu0 0
    %2689 = vmatpush1.bf16.msra.mxu0 0
    %2690 = vmatprep.subr.bf16.mxu0 0
    %2691 = vmatpush1.bf16.msra.mxu0 0
    %2692 = vmatprep.subr.bf16.mxu0 0
    %2693 = vmatpush1.bf16.msra.mxu0 0
    %2694 = vmatprep.subr.bf16.mxu0 0
    %2695 = vmatpush1.bf16.msra.mxu0 0
    %2696 = vmatprep.subr.bf16.mxu0 0
    %2697 = vmatpush1.bf16.msra.mxu0 0
    %2698 = vmatprep.subr.bf16.mxu0 0
    %2699 = vmatpush1.bf16.msra.mxu0 0
    %2700 = vmatprep.subr.bf16.mxu0 0
    %2701 = vmatpush1.bf16.msra.mxu0 0
    %2702 = vmatprep.subr.bf16.mxu0 0
    %2703 = vmatpush1.bf16.msra.mxu0 0
    %2704 = vmatprep.subr.bf16.mxu0 0
    %2705 = vmatpush1.bf16.msra.mxu0 0
    %2706 = vmatprep.subr.bf16.mxu0 0
    %2707 = vmatpush1.bf16.msra.mxu0 0
    %2708 = vmatprep.subr.bf16.mxu0 0
    %2709 = vmatpush1.bf16.msra.mxu0 0
    %2710 = vmatprep.subr.bf16.mxu0 0
    %2711 = vmatpush1.bf16.msra.mxu0 0
    %2712 = vmatprep.subr.bf16.mxu0 0
    %2713 = vmatpush1.bf16.msra.mxu0 0
    %2714 = vmatprep.mubr.bf16.mxu0 0
    %2715 = vmatmul.mubr.bf16.gmra.mrb[0].mxu0 %v561
    %v2716 = vpop.f32.mrb[0].mxu0
    %v2717 = vadd.f32 0.0, %v2716
    %v2718 = vpop.f32.mrb[0].mxu0
    %v2719 = vadd.f32 0.0, %v2718
    %v2720 = vpop.f32.mrb[0].mxu0
    %v2721 = vpop.f32.mrb[0].mxu0
    %2722 = vdwg.mxu0
    %2723 = vmatprep.subr.bf16.mxu0 %v2231
    %2724 = vmatpush1.bf16.msra.mxu0 %v2230
    %2725 = vmatprep.subr.bf16.mxu0 %v2239
    %2726 = vmatpush1.bf16.msra.mxu0 %v2238
    %2727 = vmatprep.subr.bf16.mxu0 %v2247
    %2728 = vmatpush1.bf16.msra.mxu0 %v2246
    %2729 = vmatprep.subr.bf16.mxu0 0
    %2730 = vmatpush1.bf16.msra.mxu0 0
    %2731 = vmatprep.subr.bf16.mxu0 0
    %2732 = vmatpush1.bf16.msra.mxu0 0
    %2733 = vmatprep.subr.bf16.mxu0 0
    %2734 = vmatpush1.bf16.msra.mxu0 0
    %2735 = vmatprep.subr.bf16.mxu0 0
    %2736 = vmatpush1.bf16.msra.mxu0 0
    %2737 = vmatprep.subr.bf16.mxu0 0
    %2738 = vmatpush1.bf16.msra.mxu0 0
    %2739 = vmatprep.subr.bf16.mxu0 0
    %2740 = vmatpush1.bf16.msra.mxu0 0
    %2741 = vmatprep.subr.bf16.mxu0 0
    %2742 = vmatpush1.bf16.msra.mxu0 0
    %2743 = vmatprep.subr.bf16.mxu0 0
    %2744 = vmatpush1.bf16.msra.mxu0 0
    %2745 = vmatprep.subr.bf16.mxu0 0
    %2746 = vmatpush1.bf16.msra.mxu0 0
    %2747 = vmatprep.subr.bf16.mxu0 0
    %2748 = vmatpush1.bf16.msra.mxu0 0
    %2749 = vmatprep.subr.bf16.mxu0 0
    %2750 = vmatpush1.bf16.msra.mxu0 0
    %2751 = vmatprep.subr.bf16.mxu0 0
    %2752 = vmatpush1.bf16.msra.mxu0 0
    %2753 = vmatprep.subr.bf16.mxu0 0
    %2754 = vmatpush1.bf16.msra.mxu0 0
    %2755 = vmatprep.mubr.bf16.mxu0 0
    %2756 = vmatmul.mubr.bf16.gmra.mrb[0].mxu0 %v561
    %v2757 = vpop.f32.mrb[0].mxu0
    %v2758 = vadd.f32 0.0, %v2757
    %v2759 = vpop.f32.mrb[0].mxu0
    %v2760 = vadd.f32 0.0, %v2759
    %v2761 = vpop.f32.mrb[0].mxu0
    %v2762 = vpop.f32.mrb[0].mxu0
    %2763 = vdwg.mxu0
    %v2764 = vadd.f32 %v2471, %v2635
    %v2765 = vadd.f32 %v2473, %v2637
    %v2766 = vadd.f32 %v2512, %v2676
    %v2767 = vadd.f32 %v2514, %v2678
    %v2768 = vadd.f32 %v2553, %v2717
    %v2769 = vadd.f32 %v2555, %v2719
    %v2770 = vadd.f32 %v2594, %v2758
    %v2771 = vadd.f32 %v2596, %v2760
    %v2772 = vmax.f32 %v2764, %v2765
    %v2773 = vmax.f32 %v2766, %v2767
    %v2774 = vmax.f32 %v2772, %v2773
    %s2775 = scalar_lea.vmem [#allocation8], 48
    %v2776 = vld [vmem:[%s2775] sm:$0xff]
    %v2777 = vmul.f32 %v2776, %v2122
    %v2778 = vadd.f32 %v2774, %v75
    %v2779 = vadd.f32 %v2777, %v2778
    %v2780 = vsub.f32 %v2779, 1.0
    %vm2781 = vcmp.gt.f32.partialorder %v2780, 0.0
    %v2782 = vsel %vm2781, 1, 0
    %v2783 = vcvt.s32.f32 %v2782
    %v2784 = vsub.f32 %v2779, %v2783
    %v2785 = vpack.c.bf16 %v2783, %v2783
    %s2786 = scalar_lea.vmem [#allocation10], 24
    %2787 = vst [vmem:[%s2786] sm:$0xf] %v2785
    %s2788 = scalar_lea.vmem [#allocation11], 48
    %2789 = vst [vmem:[%s2788] sm:$0xff] %v2784
    %v2790 = vmax.f32 %v2768, %v2769
    %v2791 = vmax.f32 %v2770, %v2771
    %v2792 = vmax.f32 %v2790, %v2791
    %s2793 = scalar_lea.vmem [#allocation8], 56
    %v2794 = vld [vmem:[%s2793] sm:$0xff]
    %v2795 = vmul.f32 %v2794, %v2784
    %v2796 = vadd.f32 %v2792, %v75
    %v2797 = vadd.f32 %v2795, %v2796
    %v2798 = vsub.f32 %v2797, 1.0
    %vm2799 = vcmp.gt.f32.partialorder %v2798, 0.0
    %v2800 = vsel %vm2799, 1, 0
    %v2801 = vcvt.s32.f32 %v2800
    %v2802 = vsub.f32 %v2797, %v2801
    %v2803 = vpack.c.bf16 %v2801, %v2801
    %s2804 = scalar_lea.vmem [#allocation10], 28
    %2805 = vst [vmem:[%s2804] sm:$0xf] %v2803
    %s2806 = scalar_lea.vmem [#allocation11], 56
    %2807 = vst [vmem:[%s2806] sm:$0xff] %v2802
    // Predicated region
    $region34: #{tpu_custom_call.1} parent=1 // pred_check
      _
    $region35: #{tpu_custom_call.1} parent=1 // pred_check_branch
      %2809 = sbr.rel (0) target = $region37
    $region36: #{tpu_custom_call.1} parent=1 // pred_region
      %s2811 = ssub.s32 512, 512
      %2812 = vsyncadd [#allocation4], %s2811
      %s2813 = sshll.u32 [#allocation10], 4
      %s2814 = int_to_ptr.vmem [resolvable:$true] %s2813
      %2819 = dma.vmem_to_hbm [thread:$0]  %s2814, 512, %s4, [#allocation4], 64, 64, 4
    $region37: #{tpu_custom_call.1} parent=1 // pred_fallthru
      _
    // Predicated region
    $region38: #{tpu_custom_call.1} parent=1 // pred_check
      _
    $region39: #{tpu_custom_call.1} parent=1 // pred_check_branch
      %2821 = sbr.rel (0) target = $region41
    $region40: #{tpu_custom_call.1} parent=1 // pred_region
      %s2823 = ssub.s32 1024, 1024
      %2824 = vsyncadd [#allocation12], %s2823
      %s2825 = sshll.u32 [#allocation11], 4
      %s2826 = int_to_ptr.vmem [resolvable:$true] %s2825
      %2831 = dma.vmem_to_hbm [thread:$0]  %s2826, 1024, %s5, [#allocation12], 128, 128, 8
    $region41: #{tpu_custom_call.1} parent=1 // pred_fallthru
      _
    // Predicated region
    $region42: #{tpu_custom_call.1} parent=1 // pred_check
      _
    $region43: #{tpu_custom_call.1} parent=1 // pred_check_branch
      %2833 = sbr.rel (0) target = $region45
    $region44: #{tpu_custom_call.1} parent=1 // pred_region
      %2834 = dma.done [#allocation4], 512
    $region45: #{tpu_custom_call.1} parent=1 // pred_fallthru
      _
    // Predicated region
    $region46: #{tpu_custom_call.1} parent=1 // pred_check
      _
    $region47: #{tpu_custom_call.1} parent=1 // pred_check_branch
      %2836 = sbr.rel (0) target = $region49
    $region48: #{tpu_custom_call.1} parent=1 // pred_region
      %2837 = dma.done [#allocation12], 1024
    $region49: #{tpu_custom_call.1} parent=1 // pred_fallthru
      _
    %2838 = vsyncpa [#allocation3], 1
    %2839 = vsyncpa [#allocation6], 1
    %2840 = vsyncpa [#allocation9], 1
    %2841 = vsyncpa [#allocation4], 1
    %2842 = vsyncpa [#allocation12], 1

</llo_original>
